<compile_context>
chip_gen: v7x
topology: tpu7x:2x2x1
jax: 0.10.0
libtpu: 0.0.40
codegen_flags: <defaults>
</compile_context>

<pallas_src>
import functools

import jax
import jax.numpy as jnp
from jax import lax
from jax.experimental import pallas as pl
from jax.experimental.pallas import tpu as pltpu

O_PAD = 128          # lane-dense output width (pad output_size up to this)
NEG_BIG = -1e30      # finite "-inf" used to pre-mask padded output lanes


def rnn_seq_kernel(x_ref, s0_ref, w_in_ref, w_st_ref, b_sh_ref, w_o_ref, b_o_ref,
                   logp_ref, s_out_ref, *, state_size, tt):
    """Runs TT timesteps of RNNetwork.forward for one batch tile.

    grid = (B // b_tile, T // TT); program_id(1) = time-chunk index.
    s_out_ref has a constant block index over the time axis, so it stays
    VMEM-resident and is used directly as the recurrent carry.
    """
    tb = pl.program_id(1)

    # Load the initial hidden state for this batch tile at the first chunk.
    @pl.when(tb == 0)
    def _():
        s_out_ref[...] = s0_ref[...]

    b_tile = s0_ref.shape[0]
    sh_width = w_in_ref.shape[1]
    o_pad = w_o_ref.shape[1]

    # Loop-invariant loads / broadcasts, hoisted above the time loop.
    w_in = w_in_ref[...]                                    # (I, S+H)
    w_st = w_st_ref[...]                                    # (S, S+H)
    w_o = w_o_ref[...]                                      # (H, o_pad)
    b_sh = jnp.broadcast_to(b_sh_ref[...], (b_tile, sh_width))
    # Padded lanes of b_o are pre-masked to NEG_BIG in the wrapper, so the
    # softmax ignores them without any per-step iota/where.
    b_o = jnp.broadcast_to(b_o_ref[...], (b_tile, o_pad))

    def step(t, state):
        x_t = x_ref[t]                                      # (b_tile, I)

        # Fused i2s + i2h: concat(i, state) @ [W_s | W_h] + b, split so the
        # carried state never leaves VMEM.
        sh = (jnp.dot(x_t, w_in, preferred_element_type=jnp.float32)
              + jnp.dot(state, w_st, preferred_element_type=jnp.float32)
              + b_sh)

        s_new = sh[:, :state_size]                          # i2s(i_)
        h = jnp.maximum(sh[:, state_size:], 0.0)            # relu(i2h(i_))

        # h2o (padded columns of W_o are zero; padded bias lanes are NEG_BIG).
        o = jnp.dot(h, w_o, preferred_element_type=jnp.float32) + b_o

        # Dropout(p=0.1) — identity in eval/inference mode.
        # TODO(synk): training-mode dropout (pltpu.prng mask + 1/(1-p) scale) not implemented.

        # LogSoftmax: PyTorch's LogSoftmax(dim=0) on the 1-D output vector maps
        # to a per-row softmax (axis=-1) in the batched layout.
        m = jnp.max(o, axis=-1, keepdims=True)
        z = o - m
        lse = jnp.log(jnp.sum(jnp.exp(z), axis=-1, keepdims=True))
        logp_ref[t] = (z - lse).astype(logp_ref.dtype)

        return s_new

    state = lax.fori_loop(0, tt, step, s_out_ref[...], unroll=True)
    s_out_ref[...] = state.astype(s_out_ref.dtype)


def _default_b_tile(B):
    """One big batch tile on single-TC chips; two tiles on v7x (2 TCs)."""
    try:
        kind = jax.devices()[0].device_kind.lower()
        if "v7" in kind and B % 16 == 0:
            return B // 2
    except Exception:
        pass
    return B


def rnn_sequence(x_seq, state0, params, *, b_tile=None, tt=None):
    """Run the RNNetwork cell over a whole sequence in one pallas_call.

    x_seq : (T, B, input_size)   state0: (B, state_size)
    params: w_sh (I+S, S+H) fused [i2s | i2h] (transposed), b_sh (S+H,),
            w_o (H, O) (transposed), b_o (O,)
    Returns (logp_seq (T, B, O), final_state (B, S)).
    """
    T, B, I = x_seq.shape
    S = state0.shape[1]
    w_sh, b_sh = params["w_sh"], params["b_sh"]
    w_o, b_o = params["w_o"], params["b_o"]
    H, O = w_o.shape
    assert w_sh.shape == (I + S, S + H)

    if b_tile is None:
        b_tile = _default_b_tile(B)
    if tt is None:
        tt = min(T, 128)          # time-chunk size (keeps VMEM small if T grows)
    assert B % b_tile == 0 and b_tile % 8 == 0
    assert T % tt == 0

    # Split fused x-side weights into input / state parts.
    w_in = w_sh[:I]                                   # (I, S+H)
    w_st = w_sh[I:]                                   # (S, S+H)
    b_sh_row = b_sh[None, :]                          # (1, S+H)

    # Pad h2o to a lane-dense 128-wide output; pre-mask padded lanes via bias.
    o_pad = max(O_PAD, ((O + 127) // 128) * 128)
    w_o_p = jnp.zeros((H, o_pad), jnp.float32).at[:, :O].set(w_o)
    b_o_p = jnp.full((1, o_pad), NEG_BIG, jnp.float32).at[0, :O].set(b_o)

    grid = (B // b_tile, T // tt)
    const = lambda shape: pl.BlockSpec(shape, lambda b, t: (0, 0))

    flops = 2 * B * T * ((I + S) * (S + H) + H * o_pad)
    cost = pl.CostEstimate(
        flops=int(flops),
        transcendentals=int(B * T * (o_pad + 1)),
        bytes_accessed=int(4 * (x_seq.size + state0.size + w_sh.size + b_sh.size
                                + w_o_p.size + b_o_p.size
                                + T * B * o_pad + B * S)),
    )

    kernel = functools.partial(rnn_seq_kernel, state_size=S, tt=tt)

    logp_pad, s_final = pl.pallas_call(
        kernel,
        grid=grid,
        in_specs=[
            pl.BlockSpec((tt, b_tile, I), lambda b, t: (t, b, 0)),   # x time chunk
            pl.BlockSpec((b_tile, S), lambda b, t: (b, 0)),          # initial state
            const((I, S + H)),                                       # W_in  (resident)
            const((S, S + H)),                                       # W_st  (resident)
            const((1, S + H)),                                       # b_sh
            const((H, o_pad)),                                       # W_o   (resident)
            const((1, o_pad)),                                       # b_o (pre-masked)
        ],
        out_specs=[
            pl.BlockSpec((tt, b_tile, o_pad), lambda b, t: (t, b, 0)),  # logp chunk
            pl.BlockSpec((b_tile, S), lambda b, t: (b, 0)),             # final state
        ],
        out_shape=(
            jax.ShapeDtypeStruct((T, B, o_pad), jnp.float32),
            jax.ShapeDtypeStruct((B, S), jnp.float32),
        ),
        compiler_params=pltpu.CompilerParams(
            dimension_semantics=("parallel", "arbitrary")),
        cost_estimate=cost,
    )(x_seq, state0, w_in, w_st, b_sh_row, w_o_p, b_o_p)

    return logp_pad[..., :O], s_final


def rnn_cell(i, state, params, *, b_tile=8):
    """Single-step forward matching RNNetwork.forward(i, state) exactly."""
    I, S = i.shape[0], state.shape[0]
    x_seq = jnp.zeros((1, b_tile, I), jnp.float32).at[0, 0].set(i)
    s0 = jnp.zeros((b_tile, S), jnp.float32).at[0].set(state)
    logp, s_fin = rnn_sequence(x_seq, s0, params, b_tile=b_tile, tt=1)
    return logp[0, 0], s_fin[0]


def init_params(key, input_size, output_size, hidden_size, state_size):
    """PyTorch-Linear-style init U(-1/sqrt(fan_in), 1/sqrt(fan_in)).
    Weights stored transposed (fan_in, fan_out); i2s/i2h fused column-wise."""
    D = input_size + state_size
    ks = jax.random.split(key, 6)

    def lin(kw, kb, fan_in, fan_out):
        bound = 1.0 / jnp.sqrt(fan_in)
        w = jax.random.uniform(kw, (fan_in, fan_out), jnp.float32, -bound, bound)
        b = jax.random.uniform(kb, (fan_out,), jnp.float32, -bound, bound)
        return w, b

    w_s, b_s = lin(ks[0], ks[1], D, state_size)              # i2s
    w_h, b_h = lin(ks[2], ks[3], D, hidden_size)             # i2h
    w_o, b_o = lin(ks[4], ks[5], hidden_size, output_size)   # h2o
    return {
        "w_sh": jnp.concatenate([w_s, w_h], axis=1),  # (D, S+H) fused
        "b_sh": jnp.concatenate([b_s, b_h]),          # (S+H,)
        "w_o": w_o, "b_o": b_o,
    }


def reference_step(i, state, params, *, state_size):
    """Pure-JAX port of RNNetwork.forward (eval mode)."""
    x = jnp.concatenate([i, state])
    sh = x @ params["w_sh"] + params["b_sh"]
    s = sh[:state_size]
    h = jnp.maximum(sh[state_size:], 0.0)
    o = h @ params["w_o"] + params["b_o"]
    logp = o - jax.scipy.special.logsumexp(o)
    return logp, s


def reference_sequence(x_seq, state0, params, *, state_size):
    def step(state, x_t):
        x = jnp.concatenate([x_t, state], axis=1)
        sh = x @ params["w_sh"] + params["b_sh"]
        s = sh[:, :state_size]
        h = jnp.maximum(sh[:, state_size:], 0.0)
        o = h @ params["w_o"] + params["b_o"]
        logp = o - jax.scipy.special.logsumexp(o, axis=-1, keepdims=True)
        return s, logp
    final_state, logp_seq = jax.lax.scan(step, state0, x_seq)
    return logp_seq, final_state


if __name__ == "__main__":
    input_size, output_size, hidden_size, state_size = 16, 16, 32, 32
    T, B = 16, 16

    key = jax.random.PRNGKey(0)
    k_params, k_x, k_i = jax.random.split(key, 3)
    params = init_params(k_params, input_size, output_size, hidden_size, state_size)

    # Batched sequence: B independent sequences of length T.
    x_seq = jax.random.normal(k_x, (T, B, input_size), jnp.float32)
    state0 = jnp.zeros((B, state_size), jnp.float32)   # init_hidden() per row

    logp_seq, s_final = rnn_sequence(x_seq, state0, params)
    logp_seq = jax.block_until_ready(logp_seq)
    s_final = jax.block_until_ready(s_final)

    ref_logp_seq, ref_s_final = reference_sequence(
        x_seq, state0, params, state_size=state_size)
    assert jnp.allclose(logp_seq, ref_logp_seq, atol=1e-4, rtol=1e-4), \
        "sequence log-softmax mismatch"
    assert jnp.allclose(s_final, ref_s_final, atol=1e-4, rtol=1e-4), \
        "final state mismatch"

    # Single-step check (matches the original module.forward signature).
    i_vec = jax.random.normal(k_i, (input_size,), jnp.float32)
    state_vec = jnp.zeros((state_size,), jnp.float32)
    logp1, s1 = rnn_cell(i_vec, state_vec, params)
    logp1 = jax.block_until_ready(logp1)
    ref_logp1, ref_s1 = reference_step(i_vec, state_vec, params,
                                       state_size=state_size)
    assert jnp.allclose(logp1, ref_logp1, atol=1e-4, rtol=1e-4), "cell logp mismatch"
    assert jnp.allclose(s1, ref_s1, atol=1e-4, rtol=1e-4), "cell state mismatch"

    print("KERNEL_OK")
</pallas_src>

<mosaic_0001>
module attributes {stable_mosaic.version = 11 : i64} {
  func.func @rnn_seq_kernel(%arg0: i32, %arg1: i32, %arg2: memref<16x16x16xf32, #tpu.memory_space<vmem>>, %arg3: memref<16x32xf32, #tpu.memory_space<vmem>>, %arg4: memref<16x64xf32, #tpu.memory_space<vmem>>, %arg5: memref<32x64xf32, #tpu.memory_space<vmem>>, %arg6: memref<1x64xf32, #tpu.memory_space<vmem>>, %arg7: memref<32x128xf32, #tpu.memory_space<vmem>>, %arg8: memref<1x128xf32, #tpu.memory_space<vmem>>, %arg9: memref<16x16x128xf32, #tpu.memory_space<vmem>>, %arg10: memref<16x32xf32, #tpu.memory_space<vmem>>) attributes {dimension_semantics = [#tpu.dimension_semantics<parallel>, #tpu.dimension_semantics<arbitrary>], iteration_bounds = array<i64: 1, 1>, scalar_prefetch = 0 : i64, scratch_operands = 0 : i64, tpu.core_type = #tpu.core_type<tc>, window_params = [{transform_indices = @transform_0, window_bounds = array<i64: 16, 16, 16>}, {transform_indices = @transform_1, window_bounds = array<i64: 16, 32>}, {pipeline_mode = #tpu.pipeline_mode<synchronous>, transform_indices = @transform_2, window_bounds = array<i64: 16, 64>}, {pipeline_mode = #tpu.pipeline_mode<synchronous>, transform_indices = @transform_3, window_bounds = array<i64: 32, 64>}, {pipeline_mode = #tpu.pipeline_mode<synchronous>, transform_indices = @transform_4, window_bounds = array<i64: 1, 64>}, {pipeline_mode = #tpu.pipeline_mode<synchronous>, transform_indices = @transform_5, window_bounds = array<i64: 32, 128>}, {pipeline_mode = #tpu.pipeline_mode<synchronous>, transform_indices = @transform_6, window_bounds = array<i64: 1, 128>}, {transform_indices = @transform_7, window_bounds = array<i64: 16, 16, 128>}, {transform_indices = @transform_8, window_bounds = array<i64: 16, 32>}]} {
    %c0_i32 = arith.constant 0 : i32
    %0 = arith.cmpi eq, %arg1, %c0_i32 : i32
    %1 = arith.extui %0 : i1 to i32
    %c0_i32_0 = arith.constant 0 : i32
    %2 = arith.cmpi ne, %1, %c0_i32_0 : i32
    scf.if %2 {
      %c0_174 = arith.constant 0 : index
      %c0_175 = arith.constant 0 : index
      %446 = vector.load %arg3[%c0_174, %c0_175] : memref<16x32xf32, #tpu.memory_space<vmem>>, vector<16x32xf32>
      %c0_176 = arith.constant 0 : index
      %c0_177 = arith.constant 0 : index
      %447 = vector.load %arg10[%c0_176, %c0_177] : memref<16x32xf32, #tpu.memory_space<vmem>>, vector<16x32xf32>
      tpu.vector_store %arg10[%c0_176, %c0_177], %446 {strides = array<i32>} : memref<16x32xf32, #tpu.memory_space<vmem>>, vector<16x32xf32>,
    } else {
    }
    %c0 = arith.constant 0 : index
    %c0_1 = arith.constant 0 : index
    %3 = vector.load %arg4[%c0, %c0_1] : memref<16x64xf32, #tpu.memory_space<vmem>>, vector<16x64xf32>
    %c0_2 = arith.constant 0 : index
    %c0_3 = arith.constant 0 : index
    %4 = vector.load %arg5[%c0_2, %c0_3] : memref<32x64xf32, #tpu.memory_space<vmem>>, vector<32x64xf32>
    %c0_4 = arith.constant 0 : index
    %c0_5 = arith.constant 0 : index
    %5 = vector.load %arg7[%c0_4, %c0_5] : memref<32x128xf32, #tpu.memory_space<vmem>>, vector<32x128xf32>
    %c0_6 = arith.constant 0 : index
    %c0_7 = arith.constant 0 : index
    %6 = vector.load %arg6[%c0_6, %c0_7] : memref<1x64xf32, #tpu.memory_space<vmem>>, vector<1x64xf32>
    %7 = vector.shape_cast %6 : vector<1x64xf32> to vector<1x64xf32>
    %8 = vector.broadcast %7 : vector<1x64xf32> to vector<16x64xf32>
    %c0_8 = arith.constant 0 : index
    %c0_9 = arith.constant 0 : index
    %9 = vector.load %arg8[%c0_8, %c0_9] : memref<1x128xf32, #tpu.memory_space<vmem>>, vector<1x128xf32>
    %10 = vector.shape_cast %9 : vector<1x128xf32> to vector<1x128xf32>
    %11 = vector.broadcast %10 : vector<1x128xf32> to vector<16x128xf32>
    %c0_10 = arith.constant 0 : index
    %c0_11 = arith.constant 0 : index
    %12 = vector.load %arg10[%c0_10, %c0_11] : memref<16x32xf32, #tpu.memory_space<vmem>>, vector<16x32xf32>
    %c0_i32_12 = arith.constant 0 : i32
    %13 = arith.index_cast %c0_i32_12 : i32 to index
    %c0_13 = arith.constant 0 : index
    %c0_14 = arith.constant 0 : index
    %14 = vector.load %arg2[%13, %c0_13, %c0_14] : memref<16x16x16xf32, #tpu.memory_space<vmem>>, vector<1x16x16xf32>
    %15 = vector.shape_cast %14 : vector<1x16x16xf32> to vector<16x16xf32>
    %cst = arith.constant dense<0.000000e+00> : vector<16x64xf32>
    %16 = tpu.matmul %15, %3, %cst {dimension_numbers = #tpu.dot_dimension_numbers<[1], [0], [0], [1], [0, 0, 1, 1], [], []>} : vector<16x16xf32>, vector<16x64xf32>, vector<16x64xf32> -> vector<16x64xf32>
    %cst_15 = arith.constant dense<0.000000e+00> : vector<16x64xf32>
    %17 = tpu.matmul %12, %4, %cst_15 {dimension_numbers = #tpu.dot_dimension_numbers<[1], [0], [0], [1], [0, 0, 1, 1], [], []>} : vector<16x32xf32>, vector<32x64xf32>, vector<16x64xf32> -> vector<16x64xf32>
    %18 = arith.addf %16, %17 : vector<16x64xf32>
    %19 = arith.addf %18, %8 : vector<16x64xf32>
    %20 = vector.extract_strided_slice %19 {offsets = [0, 0], sizes = [16, 32], strides = [1, 1]} : vector<16x64xf32> to vector<16x32xf32>
    %21 = vector.extract_strided_slice %19 {offsets = [0, 32], sizes = [16, 32], strides = [1, 1]} : vector<16x64xf32> to vector<16x32xf32>
    %cst_16 = arith.constant 0.000000e+00 : f32
    %22 = vector.broadcast %cst_16 : f32 to vector<16x32xf32>
    %23 = arith.maximumf %21, %22 : vector<16x32xf32>
    %cst_17 = arith.constant dense<0.000000e+00> : vector<16x128xf32>
    %24 = tpu.matmul %23, %5, %cst_17 {dimension_numbers = #tpu.dot_dimension_numbers<[1], [0], [0], [1], [0, 0, 1, 1], [], []>} : vector<16x32xf32>, vector<32x128xf32>, vector<16x128xf32> -> vector<16x128xf32>
    %25 = arith.addf %24, %11 : vector<16x128xf32>
    %cst_18 = arith.constant dense<0xFF800000> : vector<16xf32>
    %26 = vector.multi_reduction <maximumf>, %25, %cst_18 [1] : vector<16x128xf32> to vector<16xf32>
    %27 = vector.shape_cast %26 : vector<16xf32> to vector<16x1xf32>
    %28 = vector.broadcast %27 : vector<16x1xf32> to vector<16x128xf32>
    %29 = arith.subf %25, %28 : vector<16x128xf32>
    %30 = math.exp %29 : vector<16x128xf32>
    %cst_19 = arith.constant dense<0.000000e+00> : vector<16xf32>
    %31 = vector.multi_reduction <add>, %30, %cst_19 [1] : vector<16x128xf32> to vector<16xf32>
    %32 = vector.shape_cast %31 : vector<16xf32> to vector<16x1xf32>
    %33 = math.log %32 : vector<16x1xf32>
    %34 = vector.broadcast %33 : vector<16x1xf32> to vector<16x128xf32>
    %35 = arith.subf %29, %34 : vector<16x128xf32>
    %36 = arith.index_cast %c0_i32_12 : i32 to index
    %c0_20 = arith.constant 0 : index
    %c0_21 = arith.constant 0 : index
    %37 = vector.load %arg9[%36, %c0_20, %c0_21] : memref<16x16x128xf32, #tpu.memory_space<vmem>>, vector<1x16x128xf32>
    %38 = vector.shape_cast %37 : vector<1x16x128xf32> to vector<16x128xf32>
    %39 = vector.shape_cast %35 : vector<16x128xf32> to vector<1x16x128xf32>
    tpu.vector_store %arg9[%36, %c0_20, %c0_21], %39 {strides = array<i32>} : memref<16x16x128xf32, #tpu.memory_space<vmem>>, vector<1x16x128xf32>,
    %c1_i32 = arith.constant 1 : i32
    %40 = arith.index_cast %c1_i32 : i32 to index
    %c0_22 = arith.constant 0 : index
    %c0_23 = arith.constant 0 : index
    %41 = vector.load %arg2[%40, %c0_22, %c0_23] : memref<16x16x16xf32, #tpu.memory_space<vmem>>, vector<1x16x16xf32>
    %42 = vector.shape_cast %41 : vector<1x16x16xf32> to vector<16x16xf32>
    %cst_24 = arith.constant dense<0.000000e+00> : vector<16x64xf32>
    %43 = tpu.matmul %42, %3, %cst_24 {dimension_numbers = #tpu.dot_dimension_numbers<[1], [0], [0], [1], [0, 0, 1, 1], [], []>} : vector<16x16xf32>, vector<16x64xf32>, vector<16x64xf32> -> vector<16x64xf32>
    %cst_25 = arith.constant dense<0.000000e+00> : vector<16x64xf32>
    %44 = tpu.matmul %20, %4, %cst_25 {dimension_numbers = #tpu.dot_dimension_numbers<[1], [0], [0], [1], [0, 0, 1, 1], [], []>} : vector<16x32xf32>, vector<32x64xf32>, vector<16x64xf32> -> vector<16x64xf32>
    %45 = arith.addf %43, %44 : vector<16x64xf32>
    %46 = arith.addf %45, %8 : vector<16x64xf32>
    %47 = vector.extract_strided_slice %46 {offsets = [0, 0], sizes = [16, 32], strides = [1, 1]} : vector<16x64xf32> to vector<16x32xf32>
    %48 = vector.extract_strided_slice %46 {offsets = [0, 32], sizes = [16, 32], strides = [1, 1]} : vector<16x64xf32> to vector<16x32xf32>
    %cst_26 = arith.constant 0.000000e+00 : f32
    %49 = vector.broadcast %cst_26 : f32 to vector<16x32xf32>
    %50 = arith.maximumf %48, %49 : vector<16x32xf32>
    %cst_27 = arith.constant dense<0.000000e+00> : vector<16x128xf32>
    %51 = tpu.matmul %50, %5, %cst_27 {dimension_numbers = #tpu.dot_dimension_numbers<[1], [0], [0], [1], [0, 0, 1, 1], [], []>} : vector<16x32xf32>, vector<32x128xf32>, vector<16x128xf32> -> vector<16x128xf32>
    %52 = arith.addf %51, %11 : vector<16x128xf32>
    %cst_28 = arith.constant dense<0xFF800000> : vector<16xf32>
    %53 = vector.multi_reduction <maximumf>, %52, %cst_28 [1] : vector<16x128xf32> to vector<16xf32>
    %54 = vector.shape_cast %53 : vector<16xf32> to vector<16x1xf32>
    %55 = vector.broadcast %54 : vector<16x1xf32> to vector<16x128xf32>
    %56 = arith.subf %52, %55 : vector<16x128xf32>
    %57 = math.exp %56 : vector<16x128xf32>
    %cst_29 = arith.constant dense<0.000000e+00> : vector<16xf32>
    %58 = vector.multi_reduction <add>, %57, %cst_29 [1] : vector<16x128xf32> to vector<16xf32>
    %59 = vector.shape_cast %58 : vector<16xf32> to vector<16x1xf32>
    %60 = math.log %59 : vector<16x1xf32>
    %61 = vector.broadcast %60 : vector<16x1xf32> to vector<16x128xf32>
    %62 = arith.subf %56, %61 : vector<16x128xf32>
    %63 = arith.index_cast %c1_i32 : i32 to index
    %c0_30 = arith.constant 0 : index
    %c0_31 = arith.constant 0 : index
    %64 = vector.load %arg9[%63, %c0_30, %c0_31] : memref<16x16x128xf32, #tpu.memory_space<vmem>>, vector<1x16x128xf32>
    %65 = vector.shape_cast %64 : vector<1x16x128xf32> to vector<16x128xf32>
    %66 = vector.shape_cast %62 : vector<16x128xf32> to vector<1x16x128xf32>
    tpu.vector_store %arg9[%63, %c0_30, %c0_31], %66 {strides = array<i32>} : memref<16x16x128xf32, #tpu.memory_space<vmem>>, vector<1x16x128xf32>,
    %c2_i32 = arith.constant 2 : i32
    %67 = arith.index_cast %c2_i32 : i32 to index
    %c0_32 = arith.constant 0 : index
    %c0_33 = arith.constant 0 : index
    %68 = vector.load %arg2[%67, %c0_32, %c0_33] : memref<16x16x16xf32, #tpu.memory_space<vmem>>, vector<1x16x16xf32>
    %69 = vector.shape_cast %68 : vector<1x16x16xf32> to vector<16x16xf32>
    %cst_34 = arith.constant dense<0.000000e+00> : vector<16x64xf32>
    %70 = tpu.matmul %69, %3, %cst_34 {dimension_numbers = #tpu.dot_dimension_numbers<[1], [0], [0], [1], [0, 0, 1, 1], [], []>} : vector<16x16xf32>, vector<16x64xf32>, vector<16x64xf32> -> vector<16x64xf32>
    %cst_35 = arith.constant dense<0.000000e+00> : vector<16x64xf32>
    %71 = tpu.matmul %47, %4, %cst_35 {dimension_numbers = #tpu.dot_dimension_numbers<[1], [0], [0], [1], [0, 0, 1, 1], [], []>} : vector<16x32xf32>, vector<32x64xf32>, vector<16x64xf32> -> vector<16x64xf32>
    %72 = arith.addf %70, %71 : vector<16x64xf32>
    %73 = arith.addf %72, %8 : vector<16x64xf32>
    %74 = vector.extract_strided_slice %73 {offsets = [0, 0], sizes = [16, 32], strides = [1, 1]} : vector<16x64xf32> to vector<16x32xf32>
    %75 = vector.extract_strided_slice %73 {offsets = [0, 32], sizes = [16, 32], strides = [1, 1]} : vector<16x64xf32> to vector<16x32xf32>
    %cst_36 = arith.constant 0.000000e+00 : f32
    %76 = vector.broadcast %cst_36 : f32 to vector<16x32xf32>
    %77 = arith.maximumf %75, %76 : vector<16x32xf32>
    %cst_37 = arith.constant dense<0.000000e+00> : vector<16x128xf32>
    %78 = tpu.matmul %77, %5, %cst_37 {dimension_numbers = #tpu.dot_dimension_numbers<[1], [0], [0], [1], [0, 0, 1, 1], [], []>} : vector<16x32xf32>, vector<32x128xf32>, vector<16x128xf32> -> vector<16x128xf32>
    %79 = arith.addf %78, %11 : vector<16x128xf32>
    %cst_38 = arith.constant dense<0xFF800000> : vector<16xf32>
    %80 = vector.multi_reduction <maximumf>, %79, %cst_38 [1] : vector<16x128xf32> to vector<16xf32>
    %81 = vector.shape_cast %80 : vector<16xf32> to vector<16x1xf32>
    %82 = vector.broadcast %81 : vector<16x1xf32> to vector<16x128xf32>
    %83 = arith.subf %79, %82 : vector<16x128xf32>
    %84 = math.exp %83 : vector<16x128xf32>
    %cst_39 = arith.constant dense<0.000000e+00> : vector<16xf32>
    %85 = vector.multi_reduction <add>, %84, %cst_39 [1] : vector<16x128xf32> to vector<16xf32>
    %86 = vector.shape_cast %85 : vector<16xf32> to vector<16x1xf32>
    %87 = math.log %86 : vector<16x1xf32>
    %88 = vector.broadcast %87 : vector<16x1xf32> to vector<16x128xf32>
    %89 = arith.subf %83, %88 : vector<16x128xf32>
    %90 = arith.index_cast %c2_i32 : i32 to index
    %c0_40 = arith.constant 0 : index
    %c0_41 = arith.constant 0 : index
    %91 = vector.load %arg9[%90, %c0_40, %c0_41] : memref<16x16x128xf32, #tpu.memory_space<vmem>>, vector<1x16x128xf32>
    %92 = vector.shape_cast %91 : vector<1x16x128xf32> to vector<16x128xf32>
    %93 = vector.shape_cast %89 : vector<16x128xf32> to vector<1x16x128xf32>
    tpu.vector_store %arg9[%90, %c0_40, %c0_41], %93 {strides = array<i32>} : memref<16x16x128xf32, #tpu.memory_space<vmem>>, vector<1x16x128xf32>,
    %c3_i32 = arith.constant 3 : i32
    %94 = arith.index_cast %c3_i32 : i32 to index
    %c0_42 = arith.constant 0 : index
    %c0_43 = arith.constant 0 : index
    %95 = vector.load %arg2[%94, %c0_42, %c0_43] : memref<16x16x16xf32, #tpu.memory_space<vmem>>, vector<1x16x16xf32>
    %96 = vector.shape_cast %95 : vector<1x16x16xf32> to vector<16x16xf32>
    %cst_44 = arith.constant dense<0.000000e+00> : vector<16x64xf32>
    %97 = tpu.matmul %96, %3, %cst_44 {dimension_numbers = #tpu.dot_dimension_numbers<[1], [0], [0], [1], [0, 0, 1, 1], [], []>} : vector<16x16xf32>, vector<16x64xf32>, vector<16x64xf32> -> vector<16x64xf32>
    %cst_45 = arith.constant dense<0.000000e+00> : vector<16x64xf32>
    %98 = tpu.matmul %74, %4, %cst_45 {dimension_numbers = #tpu.dot_dimension_numbers<[1], [0], [0], [1], [0, 0, 1, 1], [], []>} : vector<16x32xf32>, vector<32x64xf32>, vector<16x64xf32> -> vector<16x64xf32>
    %99 = arith.addf %97, %98 : vector<16x64xf32>
    %100 = arith.addf %99, %8 : vector<16x64xf32>
    %101 = vector.extract_strided_slice %100 {offsets = [0, 0], sizes = [16, 32], strides = [1, 1]} : vector<16x64xf32> to vector<16x32xf32>
    %102 = vector.extract_strided_slice %100 {offsets = [0, 32], sizes = [16, 32], strides = [1, 1]} : vector<16x64xf32> to vector<16x32xf32>
    %cst_46 = arith.constant 0.000000e+00 : f32
    %103 = vector.broadcast %cst_46 : f32 to vector<16x32xf32>
    %104 = arith.maximumf %102, %103 : vector<16x32xf32>
    %cst_47 = arith.constant dense<0.000000e+00> : vector<16x128xf32>
    %105 = tpu.matmul %104, %5, %cst_47 {dimension_numbers = #tpu.dot_dimension_numbers<[1], [0], [0], [1], [0, 0, 1, 1], [], []>} : vector<16x32xf32>, vector<32x128xf32>, vector<16x128xf32> -> vector<16x128xf32>
    %106 = arith.addf %105, %11 : vector<16x128xf32>
    %cst_48 = arith.constant dense<0xFF800000> : vector<16xf32>
    %107 = vector.multi_reduction <maximumf>, %106, %cst_48 [1] : vector<16x128xf32> to vector<16xf32>
    %108 = vector.shape_cast %107 : vector<16xf32> to vector<16x1xf32>
    %109 = vector.broadcast %108 : vector<16x1xf32> to vector<16x128xf32>
    %110 = arith.subf %106, %109 : vector<16x128xf32>
    %111 = math.exp %110 : vector<16x128xf32>
    %cst_49 = arith.constant dense<0.000000e+00> : vector<16xf32>
    %112 = vector.multi_reduction <add>, %111, %cst_49 [1] : vector<16x128xf32> to vector<16xf32>
    %113 = vector.shape_cast %112 : vector<16xf32> to vector<16x1xf32>
    %114 = math.log %113 : vector<16x1xf32>
    %115 = vector.broadcast %114 : vector<16x1xf32> to vector<16x128xf32>
    %116 = arith.subf %110, %115 : vector<16x128xf32>
    %117 = arith.index_cast %c3_i32 : i32 to index
    %c0_50 = arith.constant 0 : index
    %c0_51 = arith.constant 0 : index
    %118 = vector.load %arg9[%117, %c0_50, %c0_51] : memref<16x16x128xf32, #tpu.memory_space<vmem>>, vector<1x16x128xf32>
    %119 = vector.shape_cast %118 : vector<1x16x128xf32> to vector<16x128xf32>
    %120 = vector.shape_cast %116 : vector<16x128xf32> to vector<1x16x128xf32>
    tpu.vector_store %arg9[%117, %c0_50, %c0_51], %120 {strides = array<i32>} : memref<16x16x128xf32, #tpu.memory_space<vmem>>, vector<1x16x128xf32>,
    %c4_i32 = arith.constant 4 : i32
    %121 = arith.index_cast %c4_i32 : i32 to index
    %c0_52 = arith.constant 0 : index
    %c0_53 = arith.constant 0 : index
    %122 = vector.load %arg2[%121, %c0_52, %c0_53] : memref<16x16x16xf32, #tpu.memory_space<vmem>>, vector<1x16x16xf32>
    %123 = vector.shape_cast %122 : vector<1x16x16xf32> to vector<16x16xf32>
    %cst_54 = arith.constant dense<0.000000e+00> : vector<16x64xf32>
    %124 = tpu.matmul %123, %3, %cst_54 {dimension_numbers = #tpu.dot_dimension_numbers<[1], [0], [0], [1], [0, 0, 1, 1], [], []>} : vector<16x16xf32>, vector<16x64xf32>, vector<16x64xf32> -> vector<16x64xf32>
    %cst_55 = arith.constant dense<0.000000e+00> : vector<16x64xf32>
    %125 = tpu.matmul %101, %4, %cst_55 {dimension_numbers = #tpu.dot_dimension_numbers<[1], [0], [0], [1], [0, 0, 1, 1], [], []>} : vector<16x32xf32>, vector<32x64xf32>, vector<16x64xf32> -> vector<16x64xf32>
    %126 = arith.addf %124, %125 : vector<16x64xf32>
    %127 = arith.addf %126, %8 : vector<16x64xf32>
    %128 = vector.extract_strided_slice %127 {offsets = [0, 0], sizes = [16, 32], strides = [1, 1]} : vector<16x64xf32> to vector<16x32xf32>
    %129 = vector.extract_strided_slice %127 {offsets = [0, 32], sizes = [16, 32], strides = [1, 1]} : vector<16x64xf32> to vector<16x32xf32>
    %cst_56 = arith.constant 0.000000e+00 : f32
    %130 = vector.broadcast %cst_56 : f32 to vector<16x32xf32>
    %131 = arith.maximumf %129, %130 : vector<16x32xf32>
    %cst_57 = arith.constant dense<0.000000e+00> : vector<16x128xf32>
    %132 = tpu.matmul %131, %5, %cst_57 {dimension_numbers = #tpu.dot_dimension_numbers<[1], [0], [0], [1], [0, 0, 1, 1], [], []>} : vector<16x32xf32>, vector<32x128xf32>, vector<16x128xf32> -> vector<16x128xf32>
    %133 = arith.addf %132, %11 : vector<16x128xf32>
    %cst_58 = arith.constant dense<0xFF800000> : vector<16xf32>
    %134 = vector.multi_reduction <maximumf>, %133, %cst_58 [1] : vector<16x128xf32> to vector<16xf32>
    %135 = vector.shape_cast %134 : vector<16xf32> to vector<16x1xf32>
    %136 = vector.broadcast %135 : vector<16x1xf32> to vector<16x128xf32>
    %137 = arith.subf %133, %136 : vector<16x128xf32>
    %138 = math.exp %137 : vector<16x128xf32>
    %cst_59 = arith.constant dense<0.000000e+00> : vector<16xf32>
    %139 = vector.multi_reduction <add>, %138, %cst_59 [1] : vector<16x128xf32> to vector<16xf32>
    %140 = vector.shape_cast %139 : vector<16xf32> to vector<16x1xf32>
    %141 = math.log %140 : vector<16x1xf32>
    %142 = vector.broadcast %141 : vector<16x1xf32> to vector<16x128xf32>
    %143 = arith.subf %137, %142 : vector<16x128xf32>
    %144 = arith.index_cast %c4_i32 : i32 to index
    %c0_60 = arith.constant 0 : index
    %c0_61 = arith.constant 0 : index
    %145 = vector.load %arg9[%144, %c0_60, %c0_61] : memref<16x16x128xf32, #tpu.memory_space<vmem>>, vector<1x16x128xf32>
    %146 = vector.shape_cast %145 : vector<1x16x128xf32> to vector<16x128xf32>
    %147 = vector.shape_cast %143 : vector<16x128xf32> to vector<1x16x128xf32>
    tpu.vector_store %arg9[%144, %c0_60, %c0_61], %147 {strides = array<i32>} : memref<16x16x128xf32, #tpu.memory_space<vmem>>, vector<1x16x128xf32>,
    %c5_i32 = arith.constant 5 : i32
    %148 = arith.index_cast %c5_i32 : i32 to index
    %c0_62 = arith.constant 0 : index
    %c0_63 = arith.constant 0 : index
    %149 = vector.load %arg2[%148, %c0_62, %c0_63] : memref<16x16x16xf32, #tpu.memory_space<vmem>>, vector<1x16x16xf32>
    %150 = vector.shape_cast %149 : vector<1x16x16xf32> to vector<16x16xf32>
    %cst_64 = arith.constant dense<0.000000e+00> : vector<16x64xf32>
    %151 = tpu.matmul %150, %3, %cst_64 {dimension_numbers = #tpu.dot_dimension_numbers<[1], [0], [0], [1], [0, 0, 1, 1], [], []>} : vector<16x16xf32>, vector<16x64xf32>, vector<16x64xf32> -> vector<16x64xf32>
    %cst_65 = arith.constant dense<0.000000e+00> : vector<16x64xf32>
    %152 = tpu.matmul %128, %4, %cst_65 {dimension_numbers = #tpu.dot_dimension_numbers<[1], [0], [0], [1], [0, 0, 1, 1], [], []>} : vector<16x32xf32>, vector<32x64xf32>, vector<16x64xf32> -> vector<16x64xf32>
    %153 = arith.addf %151, %152 : vector<16x64xf32>
    %154 = arith.addf %153, %8 : vector<16x64xf32>
    %155 = vector.extract_strided_slice %154 {offsets = [0, 0], sizes = [16, 32], strides = [1, 1]} : vector<16x64xf32> to vector<16x32xf32>
    %156 = vector.extract_strided_slice %154 {offsets = [0, 32], sizes = [16, 32], strides = [1, 1]} : vector<16x64xf32> to vector<16x32xf32>
    %cst_66 = arith.constant 0.000000e+00 : f32
    %157 = vector.broadcast %cst_66 : f32 to vector<16x32xf32>
    %158 = arith.maximumf %156, %157 : vector<16x32xf32>
    %cst_67 = arith.constant dense<0.000000e+00> : vector<16x128xf32>
    %159 = tpu.matmul %158, %5, %cst_67 {dimension_numbers = #tpu.dot_dimension_numbers<[1], [0], [0], [1], [0, 0, 1, 1], [], []>} : vector<16x32xf32>, vector<32x128xf32>, vector<16x128xf32> -> vector<16x128xf32>
    %160 = arith.addf %159, %11 : vector<16x128xf32>
    %cst_68 = arith.constant dense<0xFF800000> : vector<16xf32>
    %161 = vector.multi_reduction <maximumf>, %160, %cst_68 [1] : vector<16x128xf32> to vector<16xf32>
    %162 = vector.shape_cast %161 : vector<16xf32> to vector<16x1xf32>
    %163 = vector.broadcast %162 : vector<16x1xf32> to vector<16x128xf32>
    %164 = arith.subf %160, %163 : vector<16x128xf32>
    %165 = math.exp %164 : vector<16x128xf32>
    %cst_69 = arith.constant dense<0.000000e+00> : vector<16xf32>
    %166 = vector.multi_reduction <add>, %165, %cst_69 [1] : vector<16x128xf32> to vector<16xf32>
    %167 = vector.shape_cast %166 : vector<16xf32> to vector<16x1xf32>
    %168 = math.log %167 : vector<16x1xf32>
    %169 = vector.broadcast %168 : vector<16x1xf32> to vector<16x128xf32>
    %170 = arith.subf %164, %169 : vector<16x128xf32>
    %171 = arith.index_cast %c5_i32 : i32 to index
    %c0_70 = arith.constant 0 : index
    %c0_71 = arith.constant 0 : index
    %172 = vector.load %arg9[%171, %c0_70, %c0_71] : memref<16x16x128xf32, #tpu.memory_space<vmem>>, vector<1x16x128xf32>
    %173 = vector.shape_cast %172 : vector<1x16x128xf32> to vector<16x128xf32>
    %174 = vector.shape_cast %170 : vector<16x128xf32> to vector<1x16x128xf32>
    tpu.vector_store %arg9[%171, %c0_70, %c0_71], %174 {strides = array<i32>} : memref<16x16x128xf32, #tpu.memory_space<vmem>>, vector<1x16x128xf32>,
    %c6_i32 = arith.constant 6 : i32
    %175 = arith.index_cast %c6_i32 : i32 to index
    %c0_72 = arith.constant 0 : index
    %c0_73 = arith.constant 0 : index
    %176 = vector.load %arg2[%175, %c0_72, %c0_73] : memref<16x16x16xf32, #tpu.memory_space<vmem>>, vector<1x16x16xf32>
    %177 = vector.shape_cast %176 : vector<1x16x16xf32> to vector<16x16xf32>
    %cst_74 = arith.constant dense<0.000000e+00> : vector<16x64xf32>
    %178 = tpu.matmul %177, %3, %cst_74 {dimension_numbers = #tpu.dot_dimension_numbers<[1], [0], [0], [1], [0, 0, 1, 1], [], []>} : vector<16x16xf32>, vector<16x64xf32>, vector<16x64xf32> -> vector<16x64xf32>
    %cst_75 = arith.constant dense<0.000000e+00> : vector<16x64xf32>
    %179 = tpu.matmul %155, %4, %cst_75 {dimension_numbers = #tpu.dot_dimension_numbers<[1], [0], [0], [1], [0, 0, 1, 1], [], []>} : vector<16x32xf32>, vector<32x64xf32>, vector<16x64xf32> -> vector<16x64xf32>
    %180 = arith.addf %178, %179 : vector<16x64xf32>
    %181 = arith.addf %180, %8 : vector<16x64xf32>
    %182 = vector.extract_strided_slice %181 {offsets = [0, 0], sizes = [16, 32], strides = [1, 1]} : vector<16x64xf32> to vector<16x32xf32>
    %183 = vector.extract_strided_slice %181 {offsets = [0, 32], sizes = [16, 32], strides = [1, 1]} : vector<16x64xf32> to vector<16x32xf32>
    %cst_76 = arith.constant 0.000000e+00 : f32
    %184 = vector.broadcast %cst_76 : f32 to vector<16x32xf32>
    %185 = arith.maximumf %183, %184 : vector<16x32xf32>
    %cst_77 = arith.constant dense<0.000000e+00> : vector<16x128xf32>
    %186 = tpu.matmul %185, %5, %cst_77 {dimension_numbers = #tpu.dot_dimension_numbers<[1], [0], [0], [1], [0, 0, 1, 1], [], []>} : vector<16x32xf32>, vector<32x128xf32>, vector<16x128xf32> -> vector<16x128xf32>
    %187 = arith.addf %186, %11 : vector<16x128xf32>
    %cst_78 = arith.constant dense<0xFF800000> : vector<16xf32>
    %188 = vector.multi_reduction <maximumf>, %187, %cst_78 [1] : vector<16x128xf32> to vector<16xf32>
    %189 = vector.shape_cast %188 : vector<16xf32> to vector<16x1xf32>
    %190 = vector.broadcast %189 : vector<16x1xf32> to vector<16x128xf32>
    %191 = arith.subf %187, %190 : vector<16x128xf32>
    %192 = math.exp %191 : vector<16x128xf32>
    %cst_79 = arith.constant dense<0.000000e+00> : vector<16xf32>
    %193 = vector.multi_reduction <add>, %192, %cst_79 [1] : vector<16x128xf32> to vector<16xf32>
    %194 = vector.shape_cast %193 : vector<16xf32> to vector<16x1xf32>
    %195 = math.log %194 : vector<16x1xf32>
    %196 = vector.broadcast %195 : vector<16x1xf32> to vector<16x128xf32>
    %197 = arith.subf %191, %196 : vector<16x128xf32>
    %198 = arith.index_cast %c6_i32 : i32 to index
    %c0_80 = arith.constant 0 : index
    %c0_81 = arith.constant 0 : index
    %199 = vector.load %arg9[%198, %c0_80, %c0_81] : memref<16x16x128xf32, #tpu.memory_space<vmem>>, vector<1x16x128xf32>
    %200 = vector.shape_cast %199 : vector<1x16x128xf32> to vector<16x128xf32>
    %201 = vector.shape_cast %197 : vector<16x128xf32> to vector<1x16x128xf32>
    tpu.vector_store %arg9[%198, %c0_80, %c0_81], %201 {strides = array<i32>} : memref<16x16x128xf32, #tpu.memory_space<vmem>>, vector<1x16x128xf32>,
    %c7_i32 = arith.constant 7 : i32
    %202 = arith.index_cast %c7_i32 : i32 to index
    %c0_82 = arith.constant 0 : index
    %c0_83 = arith.constant 0 : index
    %203 = vector.load %arg2[%202, %c0_82, %c0_83] : memref<16x16x16xf32, #tpu.memory_space<vmem>>, vector<1x16x16xf32>
    %204 = vector.shape_cast %203 : vector<1x16x16xf32> to vector<16x16xf32>
    %cst_84 = arith.constant dense<0.000000e+00> : vector<16x64xf32>
    %205 = tpu.matmul %204, %3, %cst_84 {dimension_numbers = #tpu.dot_dimension_numbers<[1], [0], [0], [1], [0, 0, 1, 1], [], []>} : vector<16x16xf32>, vector<16x64xf32>, vector<16x64xf32> -> vector<16x64xf32>
    %cst_85 = arith.constant dense<0.000000e+00> : vector<16x64xf32>
    %206 = tpu.matmul %182, %4, %cst_85 {dimension_numbers = #tpu.dot_dimension_numbers<[1], [0], [0], [1], [0, 0, 1, 1], [], []>} : vector<16x32xf32>, vector<32x64xf32>, vector<16x64xf32> -> vector<16x64xf32>
    %207 = arith.addf %205, %206 : vector<16x64xf32>
    %208 = arith.addf %207, %8 : vector<16x64xf32>
    %209 = vector.extract_strided_slice %208 {offsets = [0, 0], sizes = [16, 32], strides = [1, 1]} : vector<16x64xf32> to vector<16x32xf32>
    %210 = vector.extract_strided_slice %208 {offsets = [0, 32], sizes = [16, 32], strides = [1, 1]} : vector<16x64xf32> to vector<16x32xf32>
    %cst_86 = arith.constant 0.000000e+00 : f32
    %211 = vector.broadcast %cst_86 : f32 to vector<16x32xf32>
    %212 = arith.maximumf %210, %211 : vector<16x32xf32>
    %cst_87 = arith.constant dense<0.000000e+00> : vector<16x128xf32>
    %213 = tpu.matmul %212, %5, %cst_87 {dimension_numbers = #tpu.dot_dimension_numbers<[1], [0], [0], [1], [0, 0, 1, 1], [], []>} : vector<16x32xf32>, vector<32x128xf32>, vector<16x128xf32> -> vector<16x128xf32>
    %214 = arith.addf %213, %11 : vector<16x128xf32>
    %cst_88 = arith.constant dense<0xFF800000> : vector<16xf32>
    %215 = vector.multi_reduction <maximumf>, %214, %cst_88 [1] : vector<16x128xf32> to vector<16xf32>
    %216 = vector.shape_cast %215 : vector<16xf32> to vector<16x1xf32>
    %217 = vector.broadcast %216 : vector<16x1xf32> to vector<16x128xf32>
    %218 = arith.subf %214, %217 : vector<16x128xf32>
    %219 = math.exp %218 : vector<16x128xf32>
    %cst_89 = arith.constant dense<0.000000e+00> : vector<16xf32>
    %220 = vector.multi_reduction <add>, %219, %cst_89 [1] : vector<16x128xf32> to vector<16xf32>
    %221 = vector.shape_cast %220 : vector<16xf32> to vector<16x1xf32>
    %222 = math.log %221 : vector<16x1xf32>
    %223 = vector.broadcast %222 : vector<16x1xf32> to vector<16x128xf32>
    %224 = arith.subf %218, %223 : vector<16x128xf32>
    %225 = arith.index_cast %c7_i32 : i32 to index
    %c0_90 = arith.constant 0 : index
    %c0_91 = arith.constant 0 : index
    %226 = vector.load %arg9[%225, %c0_90, %c0_91] : memref<16x16x128xf32, #tpu.memory_space<vmem>>, vector<1x16x128xf32>
    %227 = vector.shape_cast %226 : vector<1x16x128xf32> to vector<16x128xf32>
    %228 = vector.shape_cast %224 : vector<16x128xf32> to vector<1x16x128xf32>
    tpu.vector_store %arg9[%225, %c0_90, %c0_91], %228 {strides = array<i32>} : memref<16x16x128xf32, #tpu.memory_space<vmem>>, vector<1x16x128xf32>,
    %c8_i32 = arith.constant 8 : i32
    %229 = arith.index_cast %c8_i32 : i32 to index
    %c0_92 = arith.constant 0 : index
    %c0_93 = arith.constant 0 : index
    %230 = vector.load %arg2[%229, %c0_92, %c0_93] : memref<16x16x16xf32, #tpu.memory_space<vmem>>, vector<1x16x16xf32>
    %231 = vector.shape_cast %230 : vector<1x16x16xf32> to vector<16x16xf32>
    %cst_94 = arith.constant dense<0.000000e+00> : vector<16x64xf32>
    %232 = tpu.matmul %231, %3, %cst_94 {dimension_numbers = #tpu.dot_dimension_numbers<[1], [0], [0], [1], [0, 0, 1, 1], [], []>} : vector<16x16xf32>, vector<16x64xf32>, vector<16x64xf32> -> vector<16x64xf32>
    %cst_95 = arith.constant dense<0.000000e+00> : vector<16x64xf32>
    %233 = tpu.matmul %209, %4, %cst_95 {dimension_numbers = #tpu.dot_dimension_numbers<[1], [0], [0], [1], [0, 0, 1, 1], [], []>} : vector<16x32xf32>, vector<32x64xf32>, vector<16x64xf32> -> vector<16x64xf32>
    %234 = arith.addf %232, %233 : vector<16x64xf32>
    %235 = arith.addf %234, %8 : vector<16x64xf32>
    %236 = vector.extract_strided_slice %235 {offsets = [0, 0], sizes = [16, 32], strides = [1, 1]} : vector<16x64xf32> to vector<16x32xf32>
    %237 = vector.extract_strided_slice %235 {offsets = [0, 32], sizes = [16, 32], strides = [1, 1]} : vector<16x64xf32> to vector<16x32xf32>
    %cst_96 = arith.constant 0.000000e+00 : f32
    %238 = vector.broadcast %cst_96 : f32 to vector<16x32xf32>
    %239 = arith.maximumf %237, %238 : vector<16x32xf32>
    %cst_97 = arith.constant dense<0.000000e+00> : vector<16x128xf32>
    %240 = tpu.matmul %239, %5, %cst_97 {dimension_numbers = #tpu.dot_dimension_numbers<[1], [0], [0], [1], [0, 0, 1, 1], [], []>} : vector<16x32xf32>, vector<32x128xf32>, vector<16x128xf32> -> vector<16x128xf32>
    %241 = arith.addf %240, %11 : vector<16x128xf32>
    %cst_98 = arith.constant dense<0xFF800000> : vector<16xf32>
    %242 = vector.multi_reduction <maximumf>, %241, %cst_98 [1] : vector<16x128xf32> to vector<16xf32>
    %243 = vector.shape_cast %242 : vector<16xf32> to vector<16x1xf32>
    %244 = vector.broadcast %243 : vector<16x1xf32> to vector<16x128xf32>
    %245 = arith.subf %241, %244 : vector<16x128xf32>
    %246 = math.exp %245 : vector<16x128xf32>
    %cst_99 = arith.constant dense<0.000000e+00> : vector<16xf32>
    %247 = vector.multi_reduction <add>, %246, %cst_99 [1] : vector<16x128xf32> to vector<16xf32>
    %248 = vector.shape_cast %247 : vector<16xf32> to vector<16x1xf32>
    %249 = math.log %248 : vector<16x1xf32>
    %250 = vector.broadcast %249 : vector<16x1xf32> to vector<16x128xf32>
    %251 = arith.subf %245, %250 : vector<16x128xf32>
    %252 = arith.index_cast %c8_i32 : i32 to index
    %c0_100 = arith.constant 0 : index
    %c0_101 = arith.constant 0 : index
    %253 = vector.load %arg9[%252, %c0_100, %c0_101] : memref<16x16x128xf32, #tpu.memory_space<vmem>>, vector<1x16x128xf32>
    %254 = vector.shape_cast %253 : vector<1x16x128xf32> to vector<16x128xf32>
    %255 = vector.shape_cast %251 : vector<16x128xf32> to vector<1x16x128xf32>
    tpu.vector_store %arg9[%252, %c0_100, %c0_101], %255 {strides = array<i32>} : memref<16x16x128xf32, #tpu.memory_space<vmem>>, vector<1x16x128xf32>,
    %c9_i32 = arith.constant 9 : i32
    %256 = arith.index_cast %c9_i32 : i32 to index
    %c0_102 = arith.constant 0 : index
    %c0_103 = arith.constant 0 : index
    %257 = vector.load %arg2[%256, %c0_102, %c0_103] : memref<16x16x16xf32, #tpu.memory_space<vmem>>, vector<1x16x16xf32>
    %258 = vector.shape_cast %257 : vector<1x16x16xf32> to vector<16x16xf32>
    %cst_104 = arith.constant dense<0.000000e+00> : vector<16x64xf32>
    %259 = tpu.matmul %258, %3, %cst_104 {dimension_numbers = #tpu.dot_dimension_numbers<[1], [0], [0], [1], [0, 0, 1, 1], [], []>} : vector<16x16xf32>, vector<16x64xf32>, vector<16x64xf32> -> vector<16x64xf32>
    %cst_105 = arith.constant dense<0.000000e+00> : vector<16x64xf32>
    %260 = tpu.matmul %236, %4, %cst_105 {dimension_numbers = #tpu.dot_dimension_numbers<[1], [0], [0], [1], [0, 0, 1, 1], [], []>} : vector<16x32xf32>, vector<32x64xf32>, vector<16x64xf32> -> vector<16x64xf32>
    %261 = arith.addf %259, %260 : vector<16x64xf32>
    %262 = arith.addf %261, %8 : vector<16x64xf32>
    %263 = vector.extract_strided_slice %262 {offsets = [0, 0], sizes = [16, 32], strides = [1, 1]} : vector<16x64xf32> to vector<16x32xf32>
    %264 = vector.extract_strided_slice %262 {offsets = [0, 32], sizes = [16, 32], strides = [1, 1]} : vector<16x64xf32> to vector<16x32xf32>
    %cst_106 = arith.constant 0.000000e+00 : f32
    %265 = vector.broadcast %cst_106 : f32 to vector<16x32xf32>
    %266 = arith.maximumf %264, %265 : vector<16x32xf32>
    %cst_107 = arith.constant dense<0.000000e+00> : vector<16x128xf32>
    %267 = tpu.matmul %266, %5, %cst_107 {dimension_numbers = #tpu.dot_dimension_numbers<[1], [0], [0], [1], [0, 0, 1, 1], [], []>} : vector<16x32xf32>, vector<32x128xf32>, vector<16x128xf32> -> vector<16x128xf32>
    %268 = arith.addf %267, %11 : vector<16x128xf32>
    %cst_108 = arith.constant dense<0xFF800000> : vector<16xf32>
    %269 = vector.multi_reduction <maximumf>, %268, %cst_108 [1] : vector<16x128xf32> to vector<16xf32>
    %270 = vector.shape_cast %269 : vector<16xf32> to vector<16x1xf32>
    %271 = vector.broadcast %270 : vector<16x1xf32> to vector<16x128xf32>
    %272 = arith.subf %268, %271 : vector<16x128xf32>
    %273 = math.exp %272 : vector<16x128xf32>
    %cst_109 = arith.constant dense<0.000000e+00> : vector<16xf32>
    %274 = vector.multi_reduction <add>, %273, %cst_109 [1] : vector<16x128xf32> to vector<16xf32>
    %275 = vector.shape_cast %274 : vector<16xf32> to vector<16x1xf32>
    %276 = math.log %275 : vector<16x1xf32>
    %277 = vector.broadcast %276 : vector<16x1xf32> to vector<16x128xf32>
    %278 = arith.subf %272, %277 : vector<16x128xf32>
    %279 = arith.index_cast %c9_i32 : i32 to index
    %c0_110 = arith.constant 0 : index
    %c0_111 = arith.constant 0 : index
    %280 = vector.load %arg9[%279, %c0_110, %c0_111] : memref<16x16x128xf32, #tpu.memory_space<vmem>>, vector<1x16x128xf32>
    %281 = vector.shape_cast %280 : vector<1x16x128xf32> to vector<16x128xf32>
    %282 = vector.shape_cast %278 : vector<16x128xf32> to vector<1x16x128xf32>
    tpu.vector_store %arg9[%279, %c0_110, %c0_111], %282 {strides = array<i32>} : memref<16x16x128xf32, #tpu.memory_space<vmem>>, vector<1x16x128xf32>,
    %c10_i32 = arith.constant 10 : i32
    %283 = arith.index_cast %c10_i32 : i32 to index
    %c0_112 = arith.constant 0 : index
    %c0_113 = arith.constant 0 : index
    %284 = vector.load %arg2[%283, %c0_112, %c0_113] : memref<16x16x16xf32, #tpu.memory_space<vmem>>, vector<1x16x16xf32>
    %285 = vector.shape_cast %284 : vector<1x16x16xf32> to vector<16x16xf32>
    %cst_114 = arith.constant dense<0.000000e+00> : vector<16x64xf32>
    %286 = tpu.matmul %285, %3, %cst_114 {dimension_numbers = #tpu.dot_dimension_numbers<[1], [0], [0], [1], [0, 0, 1, 1], [], []>} : vector<16x16xf32>, vector<16x64xf32>, vector<16x64xf32> -> vector<16x64xf32>
    %cst_115 = arith.constant dense<0.000000e+00> : vector<16x64xf32>
    %287 = tpu.matmul %263, %4, %cst_115 {dimension_numbers = #tpu.dot_dimension_numbers<[1], [0], [0], [1], [0, 0, 1, 1], [], []>} : vector<16x32xf32>, vector<32x64xf32>, vector<16x64xf32> -> vector<16x64xf32>
    %288 = arith.addf %286, %287 : vector<16x64xf32>
    %289 = arith.addf %288, %8 : vector<16x64xf32>
    %290 = vector.extract_strided_slice %289 {offsets = [0, 0], sizes = [16, 32], strides = [1, 1]} : vector<16x64xf32> to vector<16x32xf32>
    %291 = vector.extract_strided_slice %289 {offsets = [0, 32], sizes = [16, 32], strides = [1, 1]} : vector<16x64xf32> to vector<16x32xf32>
    %cst_116 = arith.constant 0.000000e+00 : f32
    %292 = vector.broadcast %cst_116 : f32 to vector<16x32xf32>
    %293 = arith.maximumf %291, %292 : vector<16x32xf32>
    %cst_117 = arith.constant dense<0.000000e+00> : vector<16x128xf32>
    %294 = tpu.matmul %293, %5, %cst_117 {dimension_numbers = #tpu.dot_dimension_numbers<[1], [0], [0], [1], [0, 0, 1, 1], [], []>} : vector<16x32xf32>, vector<32x128xf32>, vector<16x128xf32> -> vector<16x128xf32>
    %295 = arith.addf %294, %11 : vector<16x128xf32>
    %cst_118 = arith.constant dense<0xFF800000> : vector<16xf32>
    %296 = vector.multi_reduction <maximumf>, %295, %cst_118 [1] : vector<16x128xf32> to vector<16xf32>
    %297 = vector.shape_cast %296 : vector<16xf32> to vector<16x1xf32>
    %298 = vector.broadcast %297 : vector<16x1xf32> to vector<16x128xf32>
    %299 = arith.subf %295, %298 : vector<16x128xf32>
    %300 = math.exp %299 : vector<16x128xf32>
    %cst_119 = arith.constant dense<0.000000e+00> : vector<16xf32>
    %301 = vector.multi_reduction <add>, %300, %cst_119 [1] : vector<16x128xf32> to vector<16xf32>
    %302 = vector.shape_cast %301 : vector<16xf32> to vector<16x1xf32>
    %303 = math.log %302 : vector<16x1xf32>
    %304 = vector.broadcast %303 : vector<16x1xf32> to vector<16x128xf32>
    %305 = arith.subf %299, %304 : vector<16x128xf32>
    %306 = arith.index_cast %c10_i32 : i32 to index
    %c0_120 = arith.constant 0 : index
    %c0_121 = arith.constant 0 : index
    %307 = vector.load %arg9[%306, %c0_120, %c0_121] : memref<16x16x128xf32, #tpu.memory_space<vmem>>, vector<1x16x128xf32>
    %308 = vector.shape_cast %307 : vector<1x16x128xf32> to vector<16x128xf32>
    %309 = vector.shape_cast %305 : vector<16x128xf32> to vector<1x16x128xf32>
    tpu.vector_store %arg9[%306, %c0_120, %c0_121], %309 {strides = array<i32>} : memref<16x16x128xf32, #tpu.memory_space<vmem>>, vector<1x16x128xf32>,
    %c11_i32 = arith.constant 11 : i32
    %310 = arith.index_cast %c11_i32 : i32 to index
    %c0_122 = arith.constant 0 : index
    %c0_123 = arith.constant 0 : index
    %311 = vector.load %arg2[%310, %c0_122, %c0_123] : memref<16x16x16xf32, #tpu.memory_space<vmem>>, vector<1x16x16xf32>
    %312 = vector.shape_cast %311 : vector<1x16x16xf32> to vector<16x16xf32>
    %cst_124 = arith.constant dense<0.000000e+00> : vector<16x64xf32>
    %313 = tpu.matmul %312, %3, %cst_124 {dimension_numbers = #tpu.dot_dimension_numbers<[1], [0], [0], [1], [0, 0, 1, 1], [], []>} : vector<16x16xf32>, vector<16x64xf32>, vector<16x64xf32> -> vector<16x64xf32>
    %cst_125 = arith.constant dense<0.000000e+00> : vector<16x64xf32>
    %314 = tpu.matmul %290, %4, %cst_125 {dimension_numbers = #tpu.dot_dimension_numbers<[1], [0], [0], [1], [0, 0, 1, 1], [], []>} : vector<16x32xf32>, vector<32x64xf32>, vector<16x64xf32> -> vector<16x64xf32>
    %315 = arith.addf %313, %314 : vector<16x64xf32>
    %316 = arith.addf %315, %8 : vector<16x64xf32>
    %317 = vector.extract_strided_slice %316 {offsets = [0, 0], sizes = [16, 32], strides = [1, 1]} : vector<16x64xf32> to vector<16x32xf32>
    %318 = vector.extract_strided_slice %316 {offsets = [0, 32], sizes = [16, 32], strides = [1, 1]} : vector<16x64xf32> to vector<16x32xf32>
    %cst_126 = arith.constant 0.000000e+00 : f32
    %319 = vector.broadcast %cst_126 : f32 to vector<16x32xf32>
    %320 = arith.maximumf %318, %319 : vector<16x32xf32>
    %cst_127 = arith.constant dense<0.000000e+00> : vector<16x128xf32>
    %321 = tpu.matmul %320, %5, %cst_127 {dimension_numbers = #tpu.dot_dimension_numbers<[1], [0], [0], [1], [0, 0, 1, 1], [], []>} : vector<16x32xf32>, vector<32x128xf32>, vector<16x128xf32> -> vector<16x128xf32>
    %322 = arith.addf %321, %11 : vector<16x128xf32>
    %cst_128 = arith.constant dense<0xFF800000> : vector<16xf32>
    %323 = vector.multi_reduction <maximumf>, %322, %cst_128 [1] : vector<16x128xf32> to vector<16xf32>
    %324 = vector.shape_cast %323 : vector<16xf32> to vector<16x1xf32>
    %325 = vector.broadcast %324 : vector<16x1xf32> to vector<16x128xf32>
    %326 = arith.subf %322, %325 : vector<16x128xf32>
    %327 = math.exp %326 : vector<16x128xf32>
    %cst_129 = arith.constant dense<0.000000e+00> : vector<16xf32>
    %328 = vector.multi_reduction <add>, %327, %cst_129 [1] : vector<16x128xf32> to vector<16xf32>
    %329 = vector.shape_cast %328 : vector<16xf32> to vector<16x1xf32>
    %330 = math.log %329 : vector<16x1xf32>
    %331 = vector.broadcast %330 : vector<16x1xf32> to vector<16x128xf32>
    %332 = arith.subf %326, %331 : vector<16x128xf32>
    %333 = arith.index_cast %c11_i32 : i32 to index
    %c0_130 = arith.constant 0 : index
    %c0_131 = arith.constant 0 : index
    %334 = vector.load %arg9[%333, %c0_130, %c0_131] : memref<16x16x128xf32, #tpu.memory_space<vmem>>, vector<1x16x128xf32>
    %335 = vector.shape_cast %334 : vector<1x16x128xf32> to vector<16x128xf32>
    %336 = vector.shape_cast %332 : vector<16x128xf32> to vector<1x16x128xf32>
    tpu.vector_store %arg9[%333, %c0_130, %c0_131], %336 {strides = array<i32>} : memref<16x16x128xf32, #tpu.memory_space<vmem>>, vector<1x16x128xf32>,
    %c12_i32 = arith.constant 12 : i32
    %337 = arith.index_cast %c12_i32 : i32 to index
    %c0_132 = arith.constant 0 : index
    %c0_133 = arith.constant 0 : index
    %338 = vector.load %arg2[%337, %c0_132, %c0_133] : memref<16x16x16xf32, #tpu.memory_space<vmem>>, vector<1x16x16xf32>
    %339 = vector.shape_cast %338 : vector<1x16x16xf32> to vector<16x16xf32>
    %cst_134 = arith.constant dense<0.000000e+00> : vector<16x64xf32>
    %340 = tpu.matmul %339, %3, %cst_134 {dimension_numbers = #tpu.dot_dimension_numbers<[1], [0], [0], [1], [0, 0, 1, 1], [], []>} : vector<16x16xf32>, vector<16x64xf32>, vector<16x64xf32> -> vector<16x64xf32>
    %cst_135 = arith.constant dense<0.000000e+00> : vector<16x64xf32>
    %341 = tpu.matmul %317, %4, %cst_135 {dimension_numbers = #tpu.dot_dimension_numbers<[1], [0], [0], [1], [0, 0, 1, 1], [], []>} : vector<16x32xf32>, vector<32x64xf32>, vector<16x64xf32> -> vector<16x64xf32>
    %342 = arith.addf %340, %341 : vector<16x64xf32>
    %343 = arith.addf %342, %8 : vector<16x64xf32>
    %344 = vector.extract_strided_slice %343 {offsets = [0, 0], sizes = [16, 32], strides = [1, 1]} : vector<16x64xf32> to vector<16x32xf32>
    %345 = vector.extract_strided_slice %343 {offsets = [0, 32], sizes = [16, 32], strides = [1, 1]} : vector<16x64xf32> to vector<16x32xf32>
    %cst_136 = arith.constant 0.000000e+00 : f32
    %346 = vector.broadcast %cst_136 : f32 to vector<16x32xf32>
    %347 = arith.maximumf %345, %346 : vector<16x32xf32>
    %cst_137 = arith.constant dense<0.000000e+00> : vector<16x128xf32>
    %348 = tpu.matmul %347, %5, %cst_137 {dimension_numbers = #tpu.dot_dimension_numbers<[1], [0], [0], [1], [0, 0, 1, 1], [], []>} : vector<16x32xf32>, vector<32x128xf32>, vector<16x128xf32> -> vector<16x128xf32>
    %349 = arith.addf %348, %11 : vector<16x128xf32>
    %cst_138 = arith.constant dense<0xFF800000> : vector<16xf32>
    %350 = vector.multi_reduction <maximumf>, %349, %cst_138 [1] : vector<16x128xf32> to vector<16xf32>
    %351 = vector.shape_cast %350 : vector<16xf32> to vector<16x1xf32>
    %352 = vector.broadcast %351 : vector<16x1xf32> to vector<16x128xf32>
    %353 = arith.subf %349, %352 : vector<16x128xf32>
    %354 = math.exp %353 : vector<16x128xf32>
    %cst_139 = arith.constant dense<0.000000e+00> : vector<16xf32>
    %355 = vector.multi_reduction <add>, %354, %cst_139 [1] : vector<16x128xf32> to vector<16xf32>
    %356 = vector.shape_cast %355 : vector<16xf32> to vector<16x1xf32>
    %357 = math.log %356 : vector<16x1xf32>
    %358 = vector.broadcast %357 : vector<16x1xf32> to vector<16x128xf32>
    %359 = arith.subf %353, %358 : vector<16x128xf32>
    %360 = arith.index_cast %c12_i32 : i32 to index
    %c0_140 = arith.constant 0 : index
    %c0_141 = arith.constant 0 : index
    %361 = vector.load %arg9[%360, %c0_140, %c0_141] : memref<16x16x128xf32, #tpu.memory_space<vmem>>, vector<1x16x128xf32>
    %362 = vector.shape_cast %361 : vector<1x16x128xf32> to vector<16x128xf32>
    %363 = vector.shape_cast %359 : vector<16x128xf32> to vector<1x16x128xf32>
    tpu.vector_store %arg9[%360, %c0_140, %c0_141], %363 {strides = array<i32>} : memref<16x16x128xf32, #tpu.memory_space<vmem>>, vector<1x16x128xf32>,
    %c13_i32 = arith.constant 13 : i32
    %364 = arith.index_cast %c13_i32 : i32 to index
    %c0_142 = arith.constant 0 : index
    %c0_143 = arith.constant 0 : index
    %365 = vector.load %arg2[%364, %c0_142, %c0_143] : memref<16x16x16xf32, #tpu.memory_space<vmem>>, vector<1x16x16xf32>
    %366 = vector.shape_cast %365 : vector<1x16x16xf32> to vector<16x16xf32>
    %cst_144 = arith.constant dense<0.000000e+00> : vector<16x64xf32>
    %367 = tpu.matmul %366, %3, %cst_144 {dimension_numbers = #tpu.dot_dimension_numbers<[1], [0], [0], [1], [0, 0, 1, 1], [], []>} : vector<16x16xf32>, vector<16x64xf32>, vector<16x64xf32> -> vector<16x64xf32>
    %cst_145 = arith.constant dense<0.000000e+00> : vector<16x64xf32>
    %368 = tpu.matmul %344, %4, %cst_145 {dimension_numbers = #tpu.dot_dimension_numbers<[1], [0], [0], [1], [0, 0, 1, 1], [], []>} : vector<16x32xf32>, vector<32x64xf32>, vector<16x64xf32> -> vector<16x64xf32>
    %369 = arith.addf %367, %368 : vector<16x64xf32>
    %370 = arith.addf %369, %8 : vector<16x64xf32>
    %371 = vector.extract_strided_slice %370 {offsets = [0, 0], sizes = [16, 32], strides = [1, 1]} : vector<16x64xf32> to vector<16x32xf32>
    %372 = vector.extract_strided_slice %370 {offsets = [0, 32], sizes = [16, 32], strides = [1, 1]} : vector<16x64xf32> to vector<16x32xf32>
    %cst_146 = arith.constant 0.000000e+00 : f32
    %373 = vector.broadcast %cst_146 : f32 to vector<16x32xf32>
    %374 = arith.maximumf %372, %373 : vector<16x32xf32>
    %cst_147 = arith.constant dense<0.000000e+00> : vector<16x128xf32>
    %375 = tpu.matmul %374, %5, %cst_147 {dimension_numbers = #tpu.dot_dimension_numbers<[1], [0], [0], [1], [0, 0, 1, 1], [], []>} : vector<16x32xf32>, vector<32x128xf32>, vector<16x128xf32> -> vector<16x128xf32>
    %376 = arith.addf %375, %11 : vector<16x128xf32>
    %cst_148 = arith.constant dense<0xFF800000> : vector<16xf32>
    %377 = vector.multi_reduction <maximumf>, %376, %cst_148 [1] : vector<16x128xf32> to vector<16xf32>
    %378 = vector.shape_cast %377 : vector<16xf32> to vector<16x1xf32>
    %379 = vector.broadcast %378 : vector<16x1xf32> to vector<16x128xf32>
    %380 = arith.subf %376, %379 : vector<16x128xf32>
    %381 = math.exp %380 : vector<16x128xf32>
    %cst_149 = arith.constant dense<0.000000e+00> : vector<16xf32>
    %382 = vector.multi_reduction <add>, %381, %cst_149 [1] : vector<16x128xf32> to vector<16xf32>
    %383 = vector.shape_cast %382 : vector<16xf32> to vector<16x1xf32>
    %384 = math.log %383 : vector<16x1xf32>
    %385 = vector.broadcast %384 : vector<16x1xf32> to vector<16x128xf32>
    %386 = arith.subf %380, %385 : vector<16x128xf32>
    %387 = arith.index_cast %c13_i32 : i32 to index
    %c0_150 = arith.constant 0 : index
    %c0_151 = arith.constant 0 : index
    %388 = vector.load %arg9[%387, %c0_150, %c0_151] : memref<16x16x128xf32, #tpu.memory_space<vmem>>, vector<1x16x128xf32>
    %389 = vector.shape_cast %388 : vector<1x16x128xf32> to vector<16x128xf32>
    %390 = vector.shape_cast %386 : vector<16x128xf32> to vector<1x16x128xf32>
    tpu.vector_store %arg9[%387, %c0_150, %c0_151], %390 {strides = array<i32>} : memref<16x16x128xf32, #tpu.memory_space<vmem>>, vector<1x16x128xf32>,
    %c14_i32 = arith.constant 14 : i32
    %391 = arith.index_cast %c14_i32 : i32 to index
    %c0_152 = arith.constant 0 : index
    %c0_153 = arith.constant 0 : index
    %392 = vector.load %arg2[%391, %c0_152, %c0_153] : memref<16x16x16xf32, #tpu.memory_space<vmem>>, vector<1x16x16xf32>
    %393 = vector.shape_cast %392 : vector<1x16x16xf32> to vector<16x16xf32>
    %cst_154 = arith.constant dense<0.000000e+00> : vector<16x64xf32>
    %394 = tpu.matmul %393, %3, %cst_154 {dimension_numbers = #tpu.dot_dimension_numbers<[1], [0], [0], [1], [0, 0, 1, 1], [], []>} : vector<16x16xf32>, vector<16x64xf32>, vector<16x64xf32> -> vector<16x64xf32>
    %cst_155 = arith.constant dense<0.000000e+00> : vector<16x64xf32>
    %395 = tpu.matmul %371, %4, %cst_155 {dimension_numbers = #tpu.dot_dimension_numbers<[1], [0], [0], [1], [0, 0, 1, 1], [], []>} : vector<16x32xf32>, vector<32x64xf32>, vector<16x64xf32> -> vector<16x64xf32>
    %396 = arith.addf %394, %395 : vector<16x64xf32>
    %397 = arith.addf %396, %8 : vector<16x64xf32>
    %398 = vector.extract_strided_slice %397 {offsets = [0, 0], sizes = [16, 32], strides = [1, 1]} : vector<16x64xf32> to vector<16x32xf32>
    %399 = vector.extract_strided_slice %397 {offsets = [0, 32], sizes = [16, 32], strides = [1, 1]} : vector<16x64xf32> to vector<16x32xf32>
    %cst_156 = arith.constant 0.000000e+00 : f32
    %400 = vector.broadcast %cst_156 : f32 to vector<16x32xf32>
    %401 = arith.maximumf %399, %400 : vector<16x32xf32>
    %cst_157 = arith.constant dense<0.000000e+00> : vector<16x128xf32>
    %402 = tpu.matmul %401, %5, %cst_157 {dimension_numbers = #tpu.dot_dimension_numbers<[1], [0], [0], [1], [0, 0, 1, 1], [], []>} : vector<16x32xf32>, vector<32x128xf32>, vector<16x128xf32> -> vector<16x128xf32>
    %403 = arith.addf %402, %11 : vector<16x128xf32>
    %cst_158 = arith.constant dense<0xFF800000> : vector<16xf32>
    %404 = vector.multi_reduction <maximumf>, %403, %cst_158 [1] : vector<16x128xf32> to vector<16xf32>
    %405 = vector.shape_cast %404 : vector<16xf32> to vector<16x1xf32>
    %406 = vector.broadcast %405 : vector<16x1xf32> to vector<16x128xf32>
    %407 = arith.subf %403, %406 : vector<16x128xf32>
    %408 = math.exp %407 : vector<16x128xf32>
    %cst_159 = arith.constant dense<0.000000e+00> : vector<16xf32>
    %409 = vector.multi_reduction <add>, %408, %cst_159 [1] : vector<16x128xf32> to vector<16xf32>
    %410 = vector.shape_cast %409 : vector<16xf32> to vector<16x1xf32>
    %411 = math.log %410 : vector<16x1xf32>
    %412 = vector.broadcast %411 : vector<16x1xf32> to vector<16x128xf32>
    %413 = arith.subf %407, %412 : vector<16x128xf32>
    %414 = arith.index_cast %c14_i32 : i32 to index
    %c0_160 = arith.constant 0 : index
    %c0_161 = arith.constant 0 : index
    %415 = vector.load %arg9[%414, %c0_160, %c0_161] : memref<16x16x128xf32, #tpu.memory_space<vmem>>, vector<1x16x128xf32>
    %416 = vector.shape_cast %415 : vector<1x16x128xf32> to vector<16x128xf32>
    %417 = vector.shape_cast %413 : vector<16x128xf32> to vector<1x16x128xf32>
    tpu.vector_store %arg9[%414, %c0_160, %c0_161], %417 {strides = array<i32>} : memref<16x16x128xf32, #tpu.memory_space<vmem>>, vector<1x16x128xf32>,
    %c15_i32 = arith.constant 15 : i32
    %418 = arith.index_cast %c15_i32 : i32 to index
    %c0_162 = arith.constant 0 : index
    %c0_163 = arith.constant 0 : index
    %419 = vector.load %arg2[%418, %c0_162, %c0_163] : memref<16x16x16xf32, #tpu.memory_space<vmem>>, vector<1x16x16xf32>
    %420 = vector.shape_cast %419 : vector<1x16x16xf32> to vector<16x16xf32>
    %cst_164 = arith.constant dense<0.000000e+00> : vector<16x64xf32>
    %421 = tpu.matmul %420, %3, %cst_164 {dimension_numbers = #tpu.dot_dimension_numbers<[1], [0], [0], [1], [0, 0, 1, 1], [], []>} : vector<16x16xf32>, vector<16x64xf32>, vector<16x64xf32> -> vector<16x64xf32>
    %cst_165 = arith.constant dense<0.000000e+00> : vector<16x64xf32>
    %422 = tpu.matmul %398, %4, %cst_165 {dimension_numbers = #tpu.dot_dimension_numbers<[1], [0], [0], [1], [0, 0, 1, 1], [], []>} : vector<16x32xf32>, vector<32x64xf32>, vector<16x64xf32> -> vector<16x64xf32>
    %423 = arith.addf %421, %422 : vector<16x64xf32>
    %424 = arith.addf %423, %8 : vector<16x64xf32>
    %425 = vector.extract_strided_slice %424 {offsets = [0, 0], sizes = [16, 32], strides = [1, 1]} : vector<16x64xf32> to vector<16x32xf32>
    %426 = vector.extract_strided_slice %424 {offsets = [0, 32], sizes = [16, 32], strides = [1, 1]} : vector<16x64xf32> to vector<16x32xf32>
    %cst_166 = arith.constant 0.000000e+00 : f32
    %427 = vector.broadcast %cst_166 : f32 to vector<16x32xf32>
    %428 = arith.maximumf %426, %427 : vector<16x32xf32>
    %cst_167 = arith.constant dense<0.000000e+00> : vector<16x128xf32>
    %429 = tpu.matmul %428, %5, %cst_167 {dimension_numbers = #tpu.dot_dimension_numbers<[1], [0], [0], [1], [0, 0, 1, 1], [], []>} : vector<16x32xf32>, vector<32x128xf32>, vector<16x128xf32> -> vector<16x128xf32>
    %430 = arith.addf %429, %11 : vector<16x128xf32>
    %cst_168 = arith.constant dense<0xFF800000> : vector<16xf32>
    %431 = vector.multi_reduction <maximumf>, %430, %cst_168 [1] : vector<16x128xf32> to vector<16xf32>
    %432 = vector.shape_cast %431 : vector<16xf32> to vector<16x1xf32>
    %433 = vector.broadcast %432 : vector<16x1xf32> to vector<16x128xf32>
    %434 = arith.subf %430, %433 : vector<16x128xf32>
    %435 = math.exp %434 : vector<16x128xf32>
    %cst_169 = arith.constant dense<0.000000e+00> : vector<16xf32>
    %436 = vector.multi_reduction <add>, %435, %cst_169 [1] : vector<16x128xf32> to vector<16xf32>
    %437 = vector.shape_cast %436 : vector<16xf32> to vector<16x1xf32>
    %438 = math.log %437 : vector<16x1xf32>
    %439 = vector.broadcast %438 : vector<16x1xf32> to vector<16x128xf32>
    %440 = arith.subf %434, %439 : vector<16x128xf32>
    %441 = arith.index_cast %c15_i32 : i32 to index
    %c0_170 = arith.constant 0 : index
    %c0_171 = arith.constant 0 : index
    %442 = vector.load %arg9[%441, %c0_170, %c0_171] : memref<16x16x128xf32, #tpu.memory_space<vmem>>, vector<1x16x128xf32>
    %443 = vector.shape_cast %442 : vector<1x16x128xf32> to vector<16x128xf32>
    %444 = vector.shape_cast %440 : vector<16x128xf32> to vector<1x16x128xf32>
    tpu.vector_store %arg9[%441, %c0_170, %c0_171], %444 {strides = array<i32>} : memref<16x16x128xf32, #tpu.memory_space<vmem>>, vector<1x16x128xf32>,
    %c16_i32 = arith.constant 16 : i32
    %c0_172 = arith.constant 0 : index
    %c0_173 = arith.constant 0 : index
    %445 = vector.load %arg10[%c0_172, %c0_173] : memref<16x32xf32, #tpu.memory_space<vmem>>, vector<16x32xf32>
    tpu.vector_store %arg10[%c0_172, %c0_173], %425 {strides = array<i32>} : memref<16x32xf32, #tpu.memory_space<vmem>>, vector<16x32xf32>,
    return
  }
  func.func @transform_0(%arg0: i32, %arg1: i32) -> (i32, i32, i32) {
    %c0_i32 = arith.constant 0 : i32
    %c0_i32_0 = arith.constant 0 : i32
    return %arg1, %arg0, %c0_i32 : i32, i32, i32
  }
  func.func @transform_1(%arg0: i32, %arg1: i32) -> (i32, i32) {
    %c0_i32 = arith.constant 0 : i32
    %c0_i32_0 = arith.constant 0 : i32
    return %arg0, %c0_i32 : i32, i32
  }
  func.func @transform_2(%arg0: i32, %arg1: i32) -> (i32, i32) {
    %c0_i32 = arith.constant 0 : i32
    %c0_i32_0 = arith.constant 0 : i32
    %c0_i32_1 = arith.constant 0 : i32
    return %c0_i32, %c0_i32_0 : i32, i32
  }
  func.func @transform_3(%arg0: i32, %arg1: i32) -> (i32, i32) {
    %c0_i32 = arith.constant 0 : i32
    %c0_i32_0 = arith.constant 0 : i32
    %c0_i32_1 = arith.constant 0 : i32
    return %c0_i32, %c0_i32_0 : i32, i32
  }
  func.func @transform_4(%arg0: i32, %arg1: i32) -> (i32, i32) {
    %c0_i32 = arith.constant 0 : i32
    %c0_i32_0 = arith.constant 0 : i32
    %c0_i32_1 = arith.constant 0 : i32
    return %c0_i32, %c0_i32_0 : i32, i32
  }
  func.func @transform_5(%arg0: i32, %arg1: i32) -> (i32, i32) {
    %c0_i32 = arith.constant 0 : i32
    %c0_i32_0 = arith.constant 0 : i32
    %c0_i32_1 = arith.constant 0 : i32
    return %c0_i32, %c0_i32_0 : i32, i32
  }
  func.func @transform_6(%arg0: i32, %arg1: i32) -> (i32, i32) {
    %c0_i32 = arith.constant 0 : i32
    %c0_i32_0 = arith.constant 0 : i32
    %c0_i32_1 = arith.constant 0 : i32
    return %c0_i32, %c0_i32_0 : i32, i32
  }
  func.func @transform_7(%arg0: i32, %arg1: i32) -> (i32, i32, i32) {
    %c0_i32 = arith.constant 0 : i32
    %c0_i32_0 = arith.constant 0 : i32
    return %arg1, %arg0, %c0_i32 : i32, i32, i32
  }
  func.func @transform_8(%arg0: i32, %arg1: i32) -> (i32, i32) {
    %c0_i32 = arith.constant 0 : i32
    %c0_i32_0 = arith.constant 0 : i32
    return %arg0, %c0_i32 : i32, i32
  }
}

</mosaic_0001>

<llo_original>
// kernel: tpu_custom_call.1
$region0: #{tpu_custom_call.1}
  #allocation0 [shape = 'u32[]', space=smem, size = 0x4, offset = 0x4, fixed_abs, tag = 'smem constant byte address 0x4 - core index']
  #allocation1 [shape = 'u32[144,128]{1,0:T(1,128)}', space=vmem, size = 0x12000, scoped, tag = 'internal scratch']
  %s0 = inlined_call_operand.hbm [shape: f32[16,16,16], index: 0, kind: input, shape index: {}]
  %s1 = inlined_call_operand.hbm [shape: f32[16,32], index: 1, kind: input, shape index: {}]
  %s2 = inlined_call_operand.hbm [shape: f32[16,64], index: 2, kind: input, shape index: {}]
  %s3 = inlined_call_operand.hbm [shape: f32[32,64], index: 3, kind: input, shape index: {}]
  %s4 = inlined_call_operand.vmem [shape: f32[1,64], index: 4, kind: input, shape index: {}]
  %s5 = inlined_call_operand.hbm [shape: f32[32,128], index: 5, kind: input, shape index: {}]
  %s6 = inlined_call_operand.vmem [shape: f32[1,128], index: 6, kind: input, shape index: {}]
  %s7 = inlined_call_operand.hbm [shape: f32[16,16,128], index: 7, kind: output, shape index: {0}]
  %s8 = inlined_call_operand.hbm [shape: f32[16,32], index: 8, kind: output, shape index: {1}]
  %9 = xla_tuple %s7, %s8
  %s10 = sld [smem:[#allocation0]]
  $region70: #{tpu_custom_call.1} parent=0
    _
  %s12 = ssub.s32 1, %s10
  %s13 = scalar_select 0, %s12, %s10
  $region1: #{tpu_custom_call.1} parent=0
    #allocation2 [shape = 'u8[131072]{0}', space=vmem, size = 0x20000, scoped, tag = 'input window, operand 0, single buffered']
    #allocation3 [shape = 's32[1]{0}', space=sflag, size = 0x4, scoped, tag = 'scoped memory for tpu_custom_call.1']
    #allocation4 [shape = 's32[1]{0}', space=sflag, size = 0x4, scoped, tag = 'scoped memory for tpu_custom_call.1']
    #allocation5 [shape = 'u8[8192]{0}', space=vmem, size = 0x2000, scoped, tag = 'input window, operand 1, single buffered']
    #allocation6 [shape = 's32[1]{0}', space=sflag, size = 0x4, scoped, tag = 'scoped memory for tpu_custom_call.1']
    #allocation7 [shape = 'u8[8192]{0}', space=vmem, size = 0x2000, scoped, tag = 'input window, operand 2, single buffered']
    #allocation8 [shape = 'u8[16384]{0}', space=vmem, size = 0x4000, scoped, tag = 'input window, operand 3, single buffered']
    #allocation9 [shape = 's32[1]{0}', space=sflag, size = 0x4, scoped, tag = 'scoped memory for tpu_custom_call.1']
    #allocation10 [shape = 'u8[16384]{0}', space=vmem, size = 0x4000, scoped, tag = 'input window, operand 5, single buffered']
    #allocation11 [shape = 'u8[131072]{0}', space=vmem, size = 0x20000, scoped, tag = 'output window, operand 0, single buffered']
    #allocation12 [shape = 'u8[8192]{0}', space=vmem, size = 0x2000, scoped, tag = 'output window, operand 1, single buffered']
    #allocation13 [shape = 's32[1]{0}', space=sflag, size = 0x4, scoped, tag = 'scoped memory for tpu_custom_call.1']
    %14 = vsyncpa [#allocation3], 0
    %15 = vsyncpa [#allocation6], 0
    %16 = vsyncpa [#allocation9], 0
    %17 = vsyncpa [#allocation4], 0
    %18 = vsyncpa [#allocation13], 0
    // Predicated region
    $region2: #{tpu_custom_call.1} parent=1 // pred_check
      _
    $region3: #{tpu_custom_call.1} parent=1 // pred_check_branch
      %20 = sbr.rel (0) target = $region5
    $region4: #{tpu_custom_call.1} parent=1 // pred_region
      %s22 = ssub.s32 4096, 4096
      %23 = vsyncadd [#allocation3], %s22
      %s24 = sshll.u32 [#allocation2], 4
      %s25 = int_to_ptr.vmem [resolvable:$true] %s24
      %30 = dma.hbm_to_vmem [thread:$0]  %s0, 4096, %s25, [#allocation3], 128, 128, 8
    $region5: #{tpu_custom_call.1} parent=1 // pred_fallthru
      _
    // Predicated region
    $region6: #{tpu_custom_call.1} parent=1 // pred_check
      _
    $region7: #{tpu_custom_call.1} parent=1 // pred_check_branch
      %32 = sbr.rel (0) target = $region9
    $region8: #{tpu_custom_call.1} parent=1 // pred_region
      %s34 = ssub.s32 256, 256
      %35 = vsyncadd [#allocation6], %s34
      %s36 = sshll.u32 [#allocation5], 4
      %s37 = int_to_ptr.vmem [resolvable:$true] %s36
      %42 = dma.hbm_to_vmem [thread:$0]  %s1, 256, %s37, [#allocation6], 128, 128, 8
    $region9: #{tpu_custom_call.1} parent=1 // pred_fallthru
      _
    // Predicated region
    $region10: #{tpu_custom_call.1} parent=1 // pred_check
      _
    $region11: #{tpu_custom_call.1} parent=1 // pred_check_branch
      %44 = sbr.rel (0) target = $region13
    $region12: #{tpu_custom_call.1} parent=1 // pred_region
      %s46 = ssub.s32 256, 256
      %47 = vsyncadd [#allocation6], %s46
      %s48 = sshll.u32 [#allocation7], 4
      %s49 = int_to_ptr.vmem [resolvable:$true] %s48
      %54 = dma.hbm_to_vmem [thread:$0]  %s2, 256, %s49, [#allocation6], 128, 128, 8
    $region13: #{tpu_custom_call.1} parent=1 // pred_fallthru
      _
    // Predicated region
    $region14: #{tpu_custom_call.1} parent=1 // pred_check
      _
    $region15: #{tpu_custom_call.1} parent=1 // pred_check_branch
      %56 = sbr.rel (0) target = $region17
    $region16: #{tpu_custom_call.1} parent=1 // pred_region
      %s58 = ssub.s32 512, 512
      %59 = vsyncadd [#allocation9], %s58
      %s60 = sshll.u32 [#allocation8], 4
      %s61 = int_to_ptr.vmem [resolvable:$true] %s60
      %66 = dma.hbm_to_vmem [thread:$0]  %s3, 512, %s61, [#allocation9], 128, 128, 8
    $region17: #{tpu_custom_call.1} parent=1 // pred_fallthru
      _
    // Predicated region
    $region18: #{tpu_custom_call.1} parent=1 // pred_check
      _
    $region19: #{tpu_custom_call.1} parent=1 // pred_check_branch
      %68 = sbr.rel (0) target = $region21
    $region20: #{tpu_custom_call.1} parent=1 // pred_region
      _
    $region21: #{tpu_custom_call.1} parent=1 // pred_fallthru
      _
    // Predicated region
    $region22: #{tpu_custom_call.1} parent=1 // pred_check
      _
    $region23: #{tpu_custom_call.1} parent=1 // pred_check_branch
      %70 = sbr.rel (0) target = $region25
    $region24: #{tpu_custom_call.1} parent=1 // pred_region
      %s72 = ssub.s32 512, 512
      %73 = vsyncadd [#allocation9], %s72
      %s74 = sshll.u32 [#allocation10], 4
      %s75 = int_to_ptr.vmem [resolvable:$true] %s74
      %80 = dma.hbm_to_vmem [thread:$0]  %s5, 512, %s75, [#allocation9], 128, 128, 8
    $region25: #{tpu_custom_call.1} parent=1 // pred_fallthru
      _
    // Predicated region
    $region26: #{tpu_custom_call.1} parent=1 // pred_check
      _
    $region27: #{tpu_custom_call.1} parent=1 // pred_check_branch
      %82 = sbr.rel (0) target = $region29
    $region28: #{tpu_custom_call.1} parent=1 // pred_region
      _
    $region29: #{tpu_custom_call.1} parent=1 // pred_fallthru
      _
    // Predicated region
    $region30: #{tpu_custom_call.1} parent=1 // pred_check
      _
    $region31: #{tpu_custom_call.1} parent=1 // pred_check_branch
      %84 = sbr.rel (0) target = $region33
    $region32: #{tpu_custom_call.1} parent=1 // pred_region
      %85 = dma.done [#allocation3], 4096
    $region33: #{tpu_custom_call.1} parent=1 // pred_fallthru
      _
    // Predicated region
    $region34: #{tpu_custom_call.1} parent=1 // pred_check
      _
    $region35: #{tpu_custom_call.1} parent=1 // pred_check_branch
      %87 = sbr.rel (0) target = $region37
    $region36: #{tpu_custom_call.1} parent=1 // pred_region
      %88 = dma.done [#allocation6], 256
    $region37: #{tpu_custom_call.1} parent=1 // pred_fallthru
      _
    // Predicated region
    $region38: #{tpu_custom_call.1} parent=1 // pred_check
      _
    $region39: #{tpu_custom_call.1} parent=1 // pred_check_branch
      %90 = sbr.rel (0) target = $region41
    $region40: #{tpu_custom_call.1} parent=1 // pred_region
      %91 = dma.done [#allocation6], 256
    $region41: #{tpu_custom_call.1} parent=1 // pred_fallthru
      _
    // Predicated region
    $region42: #{tpu_custom_call.1} parent=1 // pred_check
      _
    $region43: #{tpu_custom_call.1} parent=1 // pred_check_branch
      %93 = sbr.rel (0) target = $region45
    $region44: #{tpu_custom_call.1} parent=1 // pred_region
      %94 = dma.done [#allocation9], 512
    $region45: #{tpu_custom_call.1} parent=1 // pred_fallthru
      _
    // Predicated region
    $region46: #{tpu_custom_call.1} parent=1 // pred_check
      _
    $region47: #{tpu_custom_call.1} parent=1 // pred_check_branch
      %96 = sbr.rel (0) target = $region49
    $region48: #{tpu_custom_call.1} parent=1 // pred_region
      %97 = dma.done [#allocation9], 512
    $region49: #{tpu_custom_call.1} parent=1 // pred_fallthru
      _
    %p98 = scmp.eq.s32.totalorder 0, 0
    // Predicated region
    $region50: #{tpu_custom_call.1} parent=1 // pred_check
      %p99 = pneg %p98
    $region51: #{tpu_custom_call.1} parent=1 // pred_check_branch
      %101 = sbr.rel (%p99) target = $region53
    $region52: #{tpu_custom_call.1} parent=1 // pred_region
      %v102 = vld [vmem:[#allocation5] sm:$0xff]
      %v103 = vld [vmem:[#allocation5 + $0x8] sm:$0xff]
      %vm104 = vcmask 261120
      %105 = vst.msk [vmem:[#allocation12] sm:$0xff] %vm104, %v102
      %106 = vst.msk [vmem:[#allocation12 + $0x8] sm:$0xff] %vm104, %v103
    $region53: #{tpu_custom_call.1} parent=1 // pred_fallthru
      _
    %v107 = vld [vmem:[#allocation7] sm:$0xff]
    %v108 = vld [vmem:[#allocation7 + $0x8] sm:$0xff]
    %v109 = vld [vmem:[#allocation8] sm:$0xff]
    %v110 = vld [vmem:[#allocation8 + $0x8] sm:$0xff]
    %v111 = vld [vmem:[#allocation8 + $0x10] sm:$0xff]
    %v112 = vld [vmem:[#allocation8 + $0x18] sm:$0xff]
    %v113 = vld [vmem:[#allocation10] sm:$0xff]
    %v114 = vld [vmem:[#allocation10 + $0x8] sm:$0xff]
    %v115 = vld [vmem:[#allocation10 + $0x10] sm:$0xff]
    %v116 = vld [vmem:[#allocation10 + $0x18] sm:$0xff]
    %v117 = vld [vmem:[%s4] sm:$0x1]
    %v119 = vlaneseq
    %v120 = vshrl.u32 %v119, 7
    %v121 = vsub.s32 0, %v120
    %v122 = vrot.slane %v117, %v121
    %v124 = vld [vmem:[%s6] sm:$0x1]
    %v126 = vlaneseq
    %v127 = vshrl.u32 %v126, 7
    %v128 = vsub.s32 0, %v127
    %v129 = vrot.slane %v124, %v128
    %v131 = vld [vmem:[#allocation12] sm:$0xff]
    %v132 = vld [vmem:[#allocation12 + $0x8] sm:$0xff]
    %v133 = vld [vmem:[#allocation2] sm:$0xff]
    %v134 = vld [vmem:[#allocation2 + $0x8] sm:$0xff]
    %vm135 = vcmask 261120
    %v137 = vsel %vm135, %v131, 0
    %v140 = vsel %vm135, %v132, 0
    %142 = vmatprep.subr.mxu0 0.0
    %143 = vmatpush1.msra.mxu0 %v109
    %144 = vmatprep.subr.mxu0 0.0
    %145 = vmatpush1.msra.mxu0 %v110
    %146 = vmatprep.subr.mxu0 0.0
    %147 = vmatpush1.msra.mxu0 %v111
    %148 = vmatprep.subr.mxu0 0.0
    %149 = vmatpush1.msra.mxu0 %v112
    %150 = vmatprep.subr.mxu0 0.0
    %151 = vmatpush1.msra.mxu0 0.0
    %152 = vmatprep.subr.mxu0 0.0
    %153 = vmatpush1.msra.mxu0 0.0
    %154 = vmatprep.subr.mxu0 0.0
    %155 = vmatpush1.msra.mxu0 0.0
    %156 = vmatprep.subr.mxu0 0.0
    %157 = vmatpush1.msra.mxu0 0.0
    %158 = vmatprep.subr.mxu0 0.0
    %159 = vmatpush1.msra.mxu0 0.0
    %160 = vmatprep.subr.mxu0 0.0
    %161 = vmatpush1.msra.mxu0 0.0
    %162 = vmatprep.subr.mxu0 0.0
    %163 = vmatpush1.msra.mxu0 0.0
    %164 = vmatprep.subr.mxu0 0.0
    %165 = vmatpush1.msra.mxu0 0.0
    %166 = vmatprep.subr.mxu0 0.0
    %167 = vmatpush1.msra.mxu0 0.0
    %168 = vmatprep.subr.mxu0 0.0
    %169 = vmatpush1.msra.mxu0 0.0
    %170 = vmatprep.subr.mxu0 0.0
    %171 = vmatpush1.msra.mxu0 0.0
    %172 = vmatprep.subr.mxu0 0.0
    %173 = vmatpush1.msra.mxu0 0.0
    %174 = vmatprep.subr.mxu0 0.0
    %175 = vmatpush1.msra.mxu0 0.0
    %176 = vmatprep.subr.mxu0 0.0
    %177 = vmatpush1.msra.mxu0 0.0
    %178 = vmatprep.subr.mxu0 0.0
    %179 = vmatpush1.msra.mxu0 0.0
    %180 = vmatprep.subr.mxu0 0.0
    %181 = vmatpush1.msra.mxu0 0.0
    %182 = vmatprep.subr.mxu0 0.0
    %183 = vmatpush1.msra.mxu0 0.0
    %184 = vmatprep.subr.mxu0 0.0
    %185 = vmatpush1.msra.mxu0 0.0
    %186 = vmatprep.subr.mxu0 0.0
    %187 = vmatpush1.msra.mxu0 0.0
    %188 = vmatprep.subr.mxu0 0.0
    %189 = vmatpush1.msra.mxu0 0.0
    %190 = vmatprep.subr.mxu0 0.0
    %191 = vmatpush1.msra.mxu0 0.0
    %192 = vmatprep.subr.mxu0 0.0
    %193 = vmatpush1.msra.mxu0 0.0
    %194 = vmatprep.subr.mxu0 0.0
    %195 = vmatpush1.msra.mxu0 0.0
    %196 = vmatprep.subr.mxu0 0.0
    %197 = vmatpush1.msra.mxu0 0.0
    %198 = vmatprep.subr.mxu0 0.0
    %199 = vmatpush1.msra.mxu0 0.0
    %200 = vmatprep.subr.mxu0 0.0
    %201 = vmatpush1.msra.mxu0 0.0
    %202 = vmatprep.subr.mxu0 0.0
    %203 = vmatpush1.msra.mxu0 0.0
    %204 = vmatprep.subr.mxu0 0.0
    %205 = vmatpush1.msra.mxu0 0.0
    %206 = vmatprep.mubr.f32.mxu0 0.0
    %207 = vmatmul.mubr.f32.gmra.mrb[0].mxu0 %v137
    %v208 = vpop.f32.mrb[0].mxu0
    %v209 = vadd.f32 0.0, %v208
    %v210 = vpop.f32.mrb[0].mxu0
    %211 = vmatprep.mubr.f32.mxu0 0.0
    %212 = vmatmul.mubr.f32.gmra.mrb[0].mxu0 %v140
    %v213 = vpop.f32.mrb[0].mxu0
    %v214 = vadd.f32 0.0, %v213
    %v215 = vpop.f32.mrb[0].mxu0
    %216 = vdwg.mxu0
    %vm217 = vcmask 130048
    %v219 = vsel %vm217, %v133, 0
    %v222 = vsel %vm217, %v134, 0
    %224 = vmatprep.subr.mxu0 0.0
    %225 = vmatpush1.msra.mxu0 %v107
    %226 = vmatprep.subr.mxu0 0.0
    %227 = vmatpush1.msra.mxu0 %v108
    %228 = vmatprep.subr.mxu0 0.0
    %229 = vmatpush1.msra.mxu0 0.0
    %230 = vmatprep.subr.mxu0 0.0
    %231 = vmatpush1.msra.mxu0 0.0
    %232 = vmatprep.subr.mxu0 0.0
    %233 = vmatpush1.msra.mxu0 0.0
    %234 = vmatprep.subr.mxu0 0.0
    %235 = vmatpush1.msra.mxu0 0.0
    %236 = vmatprep.subr.mxu0 0.0
    %237 = vmatpush1.msra.mxu0 0.0
    %238 = vmatprep.subr.mxu0 0.0
    %239 = vmatpush1.msra.mxu0 0.0
    %240 = vmatprep.subr.mxu0 0.0
    %241 = vmatpush1.msra.mxu0 0.0
    %242 = vmatprep.subr.mxu0 0.0
    %243 = vmatpush1.msra.mxu0 0.0
    %244 = vmatprep.subr.mxu0 0.0
    %245 = vmatpush1.msra.mxu0 0.0
    %246 = vmatprep.subr.mxu0 0.0
    %247 = vmatpush1.msra.mxu0 0.0
    %248 = vmatprep.subr.mxu0 0.0
    %249 = vmatpush1.msra.mxu0 0.0
    %250 = vmatprep.subr.mxu0 0.0
    %251 = vmatpush1.msra.mxu0 0.0
    %252 = vmatprep.subr.mxu0 0.0
    %253 = vmatpush1.msra.mxu0 0.0
    %254 = vmatprep.subr.mxu0 0.0
    %255 = vmatpush1.msra.mxu0 0.0
    %256 = vmatprep.subr.mxu0 0.0
    %257 = vmatpush1.msra.mxu0 0.0
    %258 = vmatprep.subr.mxu0 0.0
    %259 = vmatpush1.msra.mxu0 0.0
    %260 = vmatprep.subr.mxu0 0.0
    %261 = vmatpush1.msra.mxu0 0.0
    %262 = vmatprep.subr.mxu0 0.0
    %263 = vmatpush1.msra.mxu0 0.0
    %264 = vmatprep.subr.mxu0 0.0
    %265 = vmatpush1.msra.mxu0 0.0
    %266 = vmatprep.subr.mxu0 0.0
    %267 = vmatpush1.msra.mxu0 0.0
    %268 = vmatprep.subr.mxu0 0.0
    %269 = vmatpush1.msra.mxu0 0.0
    %270 = vmatprep.subr.mxu0 0.0
    %271 = vmatpush1.msra.mxu0 0.0
    %272 = vmatprep.subr.mxu0 0.0
    %273 = vmatpush1.msra.mxu0 0.0
    %274 = vmatprep.subr.mxu0 0.0
    %275 = vmatpush1.msra.mxu0 0.0
    %276 = vmatprep.subr.mxu0 0.0
    %277 = vmatpush1.msra.mxu0 0.0
    %278 = vmatprep.subr.mxu0 0.0
    %279 = vmatpush1.msra.mxu0 0.0
    %280 = vmatprep.subr.mxu0 0.0
    %281 = vmatpush1.msra.mxu0 0.0
    %282 = vmatprep.subr.mxu0 0.0
    %283 = vmatpush1.msra.mxu0 0.0
    %284 = vmatprep.subr.mxu0 0.0
    %285 = vmatpush1.msra.mxu0 0.0
    %286 = vmatprep.subr.mxu0 0.0
    %287 = vmatpush1.msra.mxu0 0.0
    %288 = vmatprep.mubr.f32.mxu0 0.0
    %289 = vmatmul.mubr.f32.gmra.mrb[0].mxu0 %v219
    %v290 = vpop.f32.mrb[0].mxu0
    %v291 = vadd.f32 %v209, %v290
    %v292 = vpop.f32.mrb[0].mxu0
    %293 = vmatprep.mubr.f32.mxu0 0.0
    %294 = vmatmul.mubr.f32.gmra.mrb[0].mxu0 %v222
    %v295 = vpop.f32.mrb[0].mxu0
    %v296 = vadd.f32 %v214, %v295
    %v297 = vpop.f32.mrb[0].mxu0
    %298 = vdwg.mxu0
    %v299 = vadd.f32 %v291, %v122
    %v300 = vadd.f32 %v296, %v122
    %v301 = vmax.f32 %v299, 0.0
    %v302 = vmax.f32 %v300, 0.0
    %305 = vrot.lane.b32.xlu0 %v301, 96
    %v306 = vpop.permute.xlu0 %305
    %307 = vrot.lane.b32.xlu0 %v302, 96
    %v308 = vpop.permute.xlu0 %307
    %v309 = vsel %vm135, %v306, 0
    %v311 = vsel %vm135, %v308, 0
    %313 = vmatprep.subr.mxu0 0.0
    %314 = vmatpush1.msra.mxu0 %v113
    %315 = vmatprep.subr.mxu0 0.0
    %316 = vmatpush1.msra.mxu0 %v114
    %317 = vmatprep.subr.mxu0 0.0
    %318 = vmatpush1.msra.mxu0 %v115
    %319 = vmatprep.subr.mxu0 0.0
    %320 = vmatpush1.msra.mxu0 %v116
    %321 = vmatprep.subr.mxu0 0.0
    %322 = vmatpush1.msra.mxu0 0.0
    %323 = vmatprep.subr.mxu0 0.0
    %324 = vmatpush1.msra.mxu0 0.0
    %325 = vmatprep.subr.mxu0 0.0
    %326 = vmatpush1.msra.mxu0 0.0
    %327 = vmatprep.subr.mxu0 0.0
    %328 = vmatpush1.msra.mxu0 0.0
    %329 = vmatprep.subr.mxu0 0.0
    %330 = vmatpush1.msra.mxu0 0.0
    %331 = vmatprep.subr.mxu0 0.0
    %332 = vmatpush1.msra.mxu0 0.0
    %333 = vmatprep.subr.mxu0 0.0
    %334 = vmatpush1.msra.mxu0 0.0
    %335 = vmatprep.subr.mxu0 0.0
    %336 = vmatpush1.msra.mxu0 0.0
    %337 = vmatprep.subr.mxu0 0.0
    %338 = vmatpush1.msra.mxu0 0.0
    %339 = vmatprep.subr.mxu0 0.0
    %340 = vmatpush1.msra.mxu0 0.0
    %341 = vmatprep.subr.mxu0 0.0
    %342 = vmatpush1.msra.mxu0 0.0
    %343 = vmatprep.subr.mxu0 0.0
    %344 = vmatpush1.msra.mxu0 0.0
    %345 = vmatprep.subr.mxu0 0.0
    %346 = vmatpush1.msra.mxu0 0.0
    %347 = vmatprep.subr.mxu0 0.0
    %348 = vmatpush1.msra.mxu0 0.0
    %349 = vmatprep.subr.mxu0 0.0
    %350 = vmatpush1.msra.mxu0 0.0
    %351 = vmatprep.subr.mxu0 0.0
    %352 = vmatpush1.msra.mxu0 0.0
    %353 = vmatprep.subr.mxu0 0.0
    %354 = vmatpush1.msra.mxu0 0.0
    %355 = vmatprep.subr.mxu0 0.0
    %356 = vmatpush1.msra.mxu0 0.0
    %357 = vmatprep.subr.mxu0 0.0
    %358 = vmatpush1.msra.mxu0 0.0
    %359 = vmatprep.subr.mxu0 0.0
    %360 = vmatpush1.msra.mxu0 0.0
    %361 = vmatprep.subr.mxu0 0.0
    %362 = vmatpush1.msra.mxu0 0.0
    %363 = vmatprep.subr.mxu0 0.0
    %364 = vmatpush1.msra.mxu0 0.0
    %365 = vmatprep.subr.mxu0 0.0
    %366 = vmatpush1.msra.mxu0 0.0
    %367 = vmatprep.subr.mxu0 0.0
    %368 = vmatpush1.msra.mxu0 0.0
    %369 = vmatprep.subr.mxu0 0.0
    %370 = vmatpush1.msra.mxu0 0.0
    %371 = vmatprep.subr.mxu0 0.0
    %372 = vmatpush1.msra.mxu0 0.0
    %373 = vmatprep.subr.mxu0 0.0
    %374 = vmatpush1.msra.mxu0 0.0
    %375 = vmatprep.subr.mxu0 0.0
    %376 = vmatpush1.msra.mxu0 0.0
    %377 = vmatprep.mubr.f32.mxu0 0.0
    %378 = vmatmul.mubr.f32.gmra.mrb[0].mxu0 %v309
    %v379 = vpop.f32.mrb[0].mxu0
    %v380 = vadd.f32 %v129, %v379
    %v381 = vpop.f32.mrb[0].mxu0
    %382 = vmatprep.mubr.f32.mxu0 0.0
    %383 = vmatmul.mubr.f32.gmra.mrb[0].mxu0 %v311
    %v384 = vpop.f32.mrb[0].mxu0
    %v385 = vadd.f32 %v129, %v384
    %v386 = vpop.f32.mrb[0].mxu0
    %387 = vdwg.mxu0
    %388 = vmax.xlane.f32.xlu0 %v380
    %v389 = vpop.xlane.xlu0 %388
    %390 = vmax.xlane.f32.xlu0 %v385
    %v391 = vpop.xlane.xlu0 %390
    %v392 = vsub.f32 %v380, %v389
    %v393 = vsub.f32 %v385, %v391
    %v394 = vmul.f32 %v392, 1.442695
    %v395 = vpow.pop %v394
    %v396 = vmul.f32 %v393, 1.442695
    %v397 = vpow.pop %v396
    %398 = vadd.xlane.f32.xlu0 %v395
    %v399 = vpop.xlane.xlu0 %398
    %400 = vadd.xlane.f32.xlu0 %v397
    %v401 = vpop.xlane.xlu0 %400
    %v402 = vlog2.pop %v399
    %v403 = vmul.f32 %v402, 0.6931472
    %v404 = vlog2.pop %v401
    %v405 = vmul.f32 %v404, 0.6931472
    %v406 = vsub.f32 %v392, %v403
    %v407 = vsub.f32 %v393, %v405
    %408 = vst [vmem:[#allocation11] sm:$0xff] %v406
    %409 = vst [vmem:[#allocation11 + $0x8] sm:$0xff] %v407
    %s410 = scalar_lea.vmem [#allocation2], 16
    %v411 = vld [vmem:[%s410] sm:$0xff]
    %v412 = vld [vmem:[%s410 + $0x8] sm:$0xff]
    %v414 = vsel %vm135, %v299, 0
    %v417 = vsel %vm135, %v300, 0
    %419 = vmatprep.subr.mxu0 0.0
    %420 = vmatpush1.msra.mxu0 %v109
    %421 = vmatprep.subr.mxu0 0.0
    %422 = vmatpush1.msra.mxu0 %v110
    %423 = vmatprep.subr.mxu0 0.0
    %424 = vmatpush1.msra.mxu0 %v111
    %425 = vmatprep.subr.mxu0 0.0
    %426 = vmatpush1.msra.mxu0 %v112
    %427 = vmatprep.subr.mxu0 0.0
    %428 = vmatpush1.msra.mxu0 0.0
    %429 = vmatprep.subr.mxu0 0.0
    %430 = vmatpush1.msra.mxu0 0.0
    %431 = vmatprep.subr.mxu0 0.0
    %432 = vmatpush1.msra.mxu0 0.0
    %433 = vmatprep.subr.mxu0 0.0
    %434 = vmatpush1.msra.mxu0 0.0
    %435 = vmatprep.subr.mxu0 0.0
    %436 = vmatpush1.msra.mxu0 0.0
    %437 = vmatprep.subr.mxu0 0.0
    %438 = vmatpush1.msra.mxu0 0.0
    %439 = vmatprep.subr.mxu0 0.0
    %440 = vmatpush1.msra.mxu0 0.0
    %441 = vmatprep.subr.mxu0 0.0
    %442 = vmatpush1.msra.mxu0 0.0
    %443 = vmatprep.subr.mxu0 0.0
    %444 = vmatpush1.msra.mxu0 0.0
    %445 = vmatprep.subr.mxu0 0.0
    %446 = vmatpush1.msra.mxu0 0.0
    %447 = vmatprep.subr.mxu0 0.0
    %448 = vmatpush1.msra.mxu0 0.0
    %449 = vmatprep.subr.mxu0 0.0
    %450 = vmatpush1.msra.mxu0 0.0
    %451 = vmatprep.subr.mxu0 0.0
    %452 = vmatpush1.msra.mxu0 0.0
    %453 = vmatprep.subr.mxu0 0.0
    %454 = vmatpush1.msra.mxu0 0.0
    %455 = vmatprep.subr.mxu0 0.0
    %456 = vmatpush1.msra.mxu0 0.0
    %457 = vmatprep.subr.mxu0 0.0
    %458 = vmatpush1.msra.mxu0 0.0
    %459 = vmatprep.subr.mxu0 0.0
    %460 = vmatpush1.msra.mxu0 0.0
    %461 = vmatprep.subr.mxu0 0.0
    %462 = vmatpush1.msra.mxu0 0.0
    %463 = vmatprep.subr.mxu0 0.0
    %464 = vmatpush1.msra.mxu0 0.0
    %465 = vmatprep.subr.mxu0 0.0
    %466 = vmatpush1.msra.mxu0 0.0
    %467 = vmatprep.subr.mxu0 0.0
    %468 = vmatpush1.msra.mxu0 0.0
    %469 = vmatprep.subr.mxu0 0.0
    %470 = vmatpush1.msra.mxu0 0.0
    %471 = vmatprep.subr.mxu0 0.0
    %472 = vmatpush1.msra.mxu0 0.0
    %473 = vmatprep.subr.mxu0 0.0
    %474 = vmatpush1.msra.mxu0 0.0
    %475 = vmatprep.subr.mxu0 0.0
    %476 = vmatpush1.msra.mxu0 0.0
    %477 = vmatprep.subr.mxu0 0.0
    %478 = vmatpush1.msra.mxu0 0.0
    %479 = vmatprep.subr.mxu0 0.0
    %480 = vmatpush1.msra.mxu0 0.0
    %481 = vmatprep.subr.mxu0 0.0
    %482 = vmatpush1.msra.mxu0 0.0
    %483 = vmatprep.mubr.f32.mxu0 0.0
    %484 = vmatmul.mubr.f32.gmra.mrb[0].mxu0 %v414
    %v485 = vpop.f32.mrb[0].mxu0
    %v486 = vadd.f32 0.0, %v485
    %v487 = vpop.f32.mrb[0].mxu0
    %488 = vmatprep.mubr.f32.mxu0 0.0
    %489 = vmatmul.mubr.f32.gmra.mrb[0].mxu0 %v417
    %v490 = vpop.f32.mrb[0].mxu0
    %v491 = vadd.f32 0.0, %v490
    %v492 = vpop.f32.mrb[0].mxu0
    %493 = vdwg.mxu0
    %v495 = vsel %vm217, %v411, 0
    %v498 = vsel %vm217, %v412, 0
    %500 = vmatprep.subr.mxu0 0.0
    %501 = vmatpush1.msra.mxu0 %v107
    %502 = vmatprep.subr.mxu0 0.0
    %503 = vmatpush1.msra.mxu0 %v108
    %504 = vmatprep.subr.mxu0 0.0
    %505 = vmatpush1.msra.mxu0 0.0
    %506 = vmatprep.subr.mxu0 0.0
    %507 = vmatpush1.msra.mxu0 0.0
    %508 = vmatprep.subr.mxu0 0.0
    %509 = vmatpush1.msra.mxu0 0.0
    %510 = vmatprep.subr.mxu0 0.0
    %511 = vmatpush1.msra.mxu0 0.0
    %512 = vmatprep.subr.mxu0 0.0
    %513 = vmatpush1.msra.mxu0 0.0
    %514 = vmatprep.subr.mxu0 0.0
    %515 = vmatpush1.msra.mxu0 0.0
    %516 = vmatprep.subr.mxu0 0.0
    %517 = vmatpush1.msra.mxu0 0.0
    %518 = vmatprep.subr.mxu0 0.0
    %519 = vmatpush1.msra.mxu0 0.0
    %520 = vmatprep.subr.mxu0 0.0
    %521 = vmatpush1.msra.mxu0 0.0
    %522 = vmatprep.subr.mxu0 0.0
    %523 = vmatpush1.msra.mxu0 0.0
    %524 = vmatprep.subr.mxu0 0.0
    %525 = vmatpush1.msra.mxu0 0.0
    %526 = vmatprep.subr.mxu0 0.0
    %527 = vmatpush1.msra.mxu0 0.0
    %528 = vmatprep.subr.mxu0 0.0
    %529 = vmatpush1.msra.mxu0 0.0
    %530 = vmatprep.subr.mxu0 0.0
    %531 = vmatpush1.msra.mxu0 0.0
    %532 = vmatprep.subr.mxu0 0.0
    %533 = vmatpush1.msra.mxu0 0.0
    %534 = vmatprep.subr.mxu0 0.0
    %535 = vmatpush1.msra.mxu0 0.0
    %536 = vmatprep.subr.mxu0 0.0
    %537 = vmatpush1.msra.mxu0 0.0
    %538 = vmatprep.subr.mxu0 0.0
    %539 = vmatpush1.msra.mxu0 0.0
    %540 = vmatprep.subr.mxu0 0.0
    %541 = vmatpush1.msra.mxu0 0.0
    %542 = vmatprep.subr.mxu0 0.0
    %543 = vmatpush1.msra.mxu0 0.0
    %544 = vmatprep.subr.mxu0 0.0
    %545 = vmatpush1.msra.mxu0 0.0
    %546 = vmatprep.subr.mxu0 0.0
    %547 = vmatpush1.msra.mxu0 0.0
    %548 = vmatprep.subr.mxu0 0.0
    %549 = vmatpush1.msra.mxu0 0.0
    %550 = vmatprep.subr.mxu0 0.0
    %551 = vmatpush1.msra.mxu0 0.0
    %552 = vmatprep.subr.mxu0 0.0
    %553 = vmatpush1.msra.mxu0 0.0
    %554 = vmatprep.subr.mxu0 0.0
    %555 = vmatpush1.msra.mxu0 0.0
    %556 = vmatprep.subr.mxu0 0.0
    %557 = vmatpush1.msra.mxu0 0.0
    %558 = vmatprep.subr.mxu0 0.0
    %559 = vmatpush1.msra.mxu0 0.0
    %560 = vmatprep.subr.mxu0 0.0
    %561 = vmatpush1.msra.mxu0 0.0
    %562 = vmatprep.subr.mxu0 0.0
    %563 = vmatpush1.msra.mxu0 0.0
    %564 = vmatprep.mubr.f32.mxu0 0.0
    %565 = vmatmul.mubr.f32.gmra.mrb[0].mxu0 %v495
    %v566 = vpop.f32.mrb[0].mxu0
    %v567 = vadd.f32 %v486, %v566
    %v568 = vpop.f32.mrb[0].mxu0
    %569 = vmatprep.mubr.f32.mxu0 0.0
    %570 = vmatmul.mubr.f32.gmra.mrb[0].mxu0 %v498
    %v571 = vpop.f32.mrb[0].mxu0
    %v572 = vadd.f32 %v491, %v571
    %v573 = vpop.f32.mrb[0].mxu0
    %574 = vdwg.mxu0
    %v575 = vadd.f32 %v567, %v122
    %v576 = vadd.f32 %v572, %v122
    %v577 = vmax.f32 %v575, 0.0
    %v578 = vmax.f32 %v576, 0.0
    %581 = vrot.lane.b32.xlu0 %v577, 96
    %v582 = vpop.permute.xlu0 %581
    %583 = vrot.lane.b32.xlu0 %v578, 96
    %v584 = vpop.permute.xlu0 %583
    %v585 = vsel %vm135, %v582, 0
    %v587 = vsel %vm135, %v584, 0
    %589 = vmatprep.subr.mxu0 0.0
    %590 = vmatpush1.msra.mxu0 %v113
    %591 = vmatprep.subr.mxu0 0.0
    %592 = vmatpush1.msra.mxu0 %v114
    %593 = vmatprep.subr.mxu0 0.0
    %594 = vmatpush1.msra.mxu0 %v115
    %595 = vmatprep.subr.mxu0 0.0
    %596 = vmatpush1.msra.mxu0 %v116
    %597 = vmatprep.subr.mxu0 0.0
    %598 = vmatpush1.msra.mxu0 0.0
    %599 = vmatprep.subr.mxu0 0.0
    %600 = vmatpush1.msra.mxu0 0.0
    %601 = vmatprep.subr.mxu0 0.0
    %602 = vmatpush1.msra.mxu0 0.0
    %603 = vmatprep.subr.mxu0 0.0
    %604 = vmatpush1.msra.mxu0 0.0
    %605 = vmatprep.subr.mxu0 0.0
    %606 = vmatpush1.msra.mxu0 0.0
    %607 = vmatprep.subr.mxu0 0.0
    %608 = vmatpush1.msra.mxu0 0.0
    %609 = vmatprep.subr.mxu0 0.0
    %610 = vmatpush1.msra.mxu0 0.0
    %611 = vmatprep.subr.mxu0 0.0
    %612 = vmatpush1.msra.mxu0 0.0
    %613 = vmatprep.subr.mxu0 0.0
    %614 = vmatpush1.msra.mxu0 0.0
    %615 = vmatprep.subr.mxu0 0.0
    %616 = vmatpush1.msra.mxu0 0.0
    %617 = vmatprep.subr.mxu0 0.0
    %618 = vmatpush1.msra.mxu0 0.0
    %619 = vmatprep.subr.mxu0 0.0
    %620 = vmatpush1.msra.mxu0 0.0
    %621 = vmatprep.subr.mxu0 0.0
    %622 = vmatpush1.msra.mxu0 0.0
    %623 = vmatprep.subr.mxu0 0.0
    %624 = vmatpush1.msra.mxu0 0.0
    %625 = vmatprep.subr.mxu0 0.0
    %626 = vmatpush1.msra.mxu0 0.0
    %627 = vmatprep.subr.mxu0 0.0
    %628 = vmatpush1.msra.mxu0 0.0
    %629 = vmatprep.subr.mxu0 0.0
    %630 = vmatpush1.msra.mxu0 0.0
    %631 = vmatprep.subr.mxu0 0.0
    %632 = vmatpush1.msra.mxu0 0.0
    %633 = vmatprep.subr.mxu0 0.0
    %634 = vmatpush1.msra.mxu0 0.0
    %635 = vmatprep.subr.mxu0 0.0
    %636 = vmatpush1.msra.mxu0 0.0
    %637 = vmatprep.subr.mxu0 0.0
    %638 = vmatpush1.msra.mxu0 0.0
    %639 = vmatprep.subr.mxu0 0.0
    %640 = vmatpush1.msra.mxu0 0.0
    %641 = vmatprep.subr.mxu0 0.0
    %642 = vmatpush1.msra.mxu0 0.0
    %643 = vmatprep.subr.mxu0 0.0
    %644 = vmatpush1.msra.mxu0 0.0
    %645 = vmatprep.subr.mxu0 0.0
    %646 = vmatpush1.msra.mxu0 0.0
    %647 = vmatprep.subr.mxu0 0.0
    %648 = vmatpush1.msra.mxu0 0.0
    %649 = vmatprep.subr.mxu0 0.0
    %650 = vmatpush1.msra.mxu0 0.0
    %651 = vmatprep.subr.mxu0 0.0
    %652 = vmatpush1.msra.mxu0 0.0
    %653 = vmatprep.mubr.f32.mxu0 0.0
    %654 = vmatmul.mubr.f32.gmra.mrb[0].mxu0 %v585
    %v655 = vpop.f32.mrb[0].mxu0
    %v656 = vadd.f32 %v129, %v655
    %v657 = vpop.f32.mrb[0].mxu0
    %658 = vmatprep.mubr.f32.mxu0 0.0
    %659 = vmatmul.mubr.f32.gmra.mrb[0].mxu0 %v587
    %v660 = vpop.f32.mrb[0].mxu0
    %v661 = vadd.f32 %v129, %v660
    %v662 = vpop.f32.mrb[0].mxu0
    %663 = vdwg.mxu0
    %664 = vmax.xlane.f32.xlu0 %v656
    %v665 = vpop.xlane.xlu0 %664
    %666 = vmax.xlane.f32.xlu0 %v661
    %v667 = vpop.xlane.xlu0 %666
    %v668 = vsub.f32 %v656, %v665
    %v669 = vsub.f32 %v661, %v667
    %v670 = vmul.f32 %v668, 1.442695
    %v671 = vpow.pop %v670
    %v672 = vmul.f32 %v669, 1.442695
    %v673 = vpow.pop %v672
    %674 = vadd.xlane.f32.xlu0 %v671
    %v675 = vpop.xlane.xlu0 %674
    %676 = vadd.xlane.f32.xlu0 %v673
    %v677 = vpop.xlane.xlu0 %676
    %v678 = vlog2.pop %v675
    %v679 = vmul.f32 %v678, 0.6931472
    %v680 = vlog2.pop %v677
    %v681 = vmul.f32 %v680, 0.6931472
    %v682 = vsub.f32 %v668, %v679
    %v683 = vsub.f32 %v669, %v681
    %s684 = scalar_lea.vmem [#allocation11], 16
    %685 = vst [vmem:[%s684] sm:$0xff] %v682
    %686 = vst [vmem:[%s684 + $0x8] sm:$0xff] %v683
    %s687 = scalar_lea.vmem [#allocation2], 32
    %v688 = vld [vmem:[%s687] sm:$0xff]
    %v689 = vld [vmem:[%s687 + $0x8] sm:$0xff]
    %v691 = vsel %vm135, %v575, 0
    %v694 = vsel %vm135, %v576, 0
    %696 = vmatprep.subr.mxu0 0.0
    %697 = vmatpush1.msra.mxu0 %v109
    %698 = vmatprep.subr.mxu0 0.0
    %699 = vmatpush1.msra.mxu0 %v110
    %700 = vmatprep.subr.mxu0 0.0
    %701 = vmatpush1.msra.mxu0 %v111
    %702 = vmatprep.subr.mxu0 0.0
    %703 = vmatpush1.msra.mxu0 %v112
    %704 = vmatprep.subr.mxu0 0.0
    %705 = vmatpush1.msra.mxu0 0.0
    %706 = vmatprep.subr.mxu0 0.0
    %707 = vmatpush1.msra.mxu0 0.0
    %708 = vmatprep.subr.mxu0 0.0
    %709 = vmatpush1.msra.mxu0 0.0
    %710 = vmatprep.subr.mxu0 0.0
    %711 = vmatpush1.msra.mxu0 0.0
    %712 = vmatprep.subr.mxu0 0.0
    %713 = vmatpush1.msra.mxu0 0.0
    %714 = vmatprep.subr.mxu0 0.0
    %715 = vmatpush1.msra.mxu0 0.0
    %716 = vmatprep.subr.mxu0 0.0
    %717 = vmatpush1.msra.mxu0 0.0
    %718 = vmatprep.subr.mxu0 0.0
    %719 = vmatpush1.msra.mxu0 0.0
    %720 = vmatprep.subr.mxu0 0.0
    %721 = vmatpush1.msra.mxu0 0.0
    %722 = vmatprep.subr.mxu0 0.0
    %723 = vmatpush1.msra.mxu0 0.0
    %724 = vmatprep.subr.mxu0 0.0
    %725 = vmatpush1.msra.mxu0 0.0
    %726 = vmatprep.subr.mxu0 0.0
    %727 = vmatpush1.msra.mxu0 0.0
    %728 = vmatprep.subr.mxu0 0.0
    %729 = vmatpush1.msra.mxu0 0.0
    %730 = vmatprep.subr.mxu0 0.0
    %731 = vmatpush1.msra.mxu0 0.0
    %732 = vmatprep.subr.mxu0 0.0
    %733 = vmatpush1.msra.mxu0 0.0
    %734 = vmatprep.subr.mxu0 0.0
    %735 = vmatpush1.msra.mxu0 0.0
    %736 = vmatprep.subr.mxu0 0.0
    %737 = vmatpush1.msra.mxu0 0.0
    %738 = vmatprep.subr.mxu0 0.0
    %739 = vmatpush1.msra.mxu0 0.0
    %740 = vmatprep.subr.mxu0 0.0
    %741 = vmatpush1.msra.mxu0 0.0
    %742 = vmatprep.subr.mxu0 0.0
    %743 = vmatpush1.msra.mxu0 0.0
    %744 = vmatprep.subr.mxu0 0.0
    %745 = vmatpush1.msra.mxu0 0.0
    %746 = vmatprep.subr.mxu0 0.0
    %747 = vmatpush1.msra.mxu0 0.0
    %748 = vmatprep.subr.mxu0 0.0
    %749 = vmatpush1.msra.mxu0 0.0
    %750 = vmatprep.subr.mxu0 0.0
    %751 = vmatpush1.msra.mxu0 0.0
    %752 = vmatprep.subr.mxu0 0.0
    %753 = vmatpush1.msra.mxu0 0.0
    %754 = vmatprep.subr.mxu0 0.0
    %755 = vmatpush1.msra.mxu0 0.0
    %756 = vmatprep.subr.mxu0 0.0
    %757 = vmatpush1.msra.mxu0 0.0
    %758 = vmatprep.subr.mxu0 0.0
    %759 = vmatpush1.msra.mxu0 0.0
    %760 = vmatprep.mubr.f32.mxu0 0.0
    %761 = vmatmul.mubr.f32.gmra.mrb[0].mxu0 %v691
    %v762 = vpop.f32.mrb[0].mxu0
    %v763 = vadd.f32 0.0, %v762
    %v764 = vpop.f32.mrb[0].mxu0
    %765 = vmatprep.mubr.f32.mxu0 0.0
    %766 = vmatmul.mubr.f32.gmra.mrb[0].mxu0 %v694
    %v767 = vpop.f32.mrb[0].mxu0
    %v768 = vadd.f32 0.0, %v767
    %v769 = vpop.f32.mrb[0].mxu0
    %770 = vdwg.mxu0
    %v772 = vsel %vm217, %v688, 0
    %v775 = vsel %vm217, %v689, 0
    %777 = vmatprep.subr.mxu0 0.0
    %778 = vmatpush1.msra.mxu0 %v107
    %779 = vmatprep.subr.mxu0 0.0
    %780 = vmatpush1.msra.mxu0 %v108
    %781 = vmatprep.subr.mxu0 0.0
    %782 = vmatpush1.msra.mxu0 0.0
    %783 = vmatprep.subr.mxu0 0.0
    %784 = vmatpush1.msra.mxu0 0.0
    %785 = vmatprep.subr.mxu0 0.0
    %786 = vmatpush1.msra.mxu0 0.0
    %787 = vmatprep.subr.mxu0 0.0
    %788 = vmatpush1.msra.mxu0 0.0
    %789 = vmatprep.subr.mxu0 0.0
    %790 = vmatpush1.msra.mxu0 0.0
    %791 = vmatprep.subr.mxu0 0.0
    %792 = vmatpush1.msra.mxu0 0.0
    %793 = vmatprep.subr.mxu0 0.0
    %794 = vmatpush1.msra.mxu0 0.0
    %795 = vmatprep.subr.mxu0 0.0
    %796 = vmatpush1.msra.mxu0 0.0
    %797 = vmatprep.subr.mxu0 0.0
    %798 = vmatpush1.msra.mxu0 0.0
    %799 = vmatprep.subr.mxu0 0.0
    %800 = vmatpush1.msra.mxu0 0.0
    %801 = vmatprep.subr.mxu0 0.0
    %802 = vmatpush1.msra.mxu0 0.0
    %803 = vmatprep.subr.mxu0 0.0
    %804 = vmatpush1.msra.mxu0 0.0
    %805 = vmatprep.subr.mxu0 0.0
    %806 = vmatpush1.msra.mxu0 0.0
    %807 = vmatprep.subr.mxu0 0.0
    %808 = vmatpush1.msra.mxu0 0.0
    %809 = vmatprep.subr.mxu0 0.0
    %810 = vmatpush1.msra.mxu0 0.0
    %811 = vmatprep.subr.mxu0 0.0
    %812 = vmatpush1.msra.mxu0 0.0
    %813 = vmatprep.subr.mxu0 0.0
    %814 = vmatpush1.msra.mxu0 0.0
    %815 = vmatprep.subr.mxu0 0.0
    %816 = vmatpush1.msra.mxu0 0.0
    %817 = vmatprep.subr.mxu0 0.0
    %818 = vmatpush1.msra.mxu0 0.0
    %819 = vmatprep.subr.mxu0 0.0
    %820 = vmatpush1.msra.mxu0 0.0
    %821 = vmatprep.subr.mxu0 0.0
    %822 = vmatpush1.msra.mxu0 0.0
    %823 = vmatprep.subr.mxu0 0.0
    %824 = vmatpush1.msra.mxu0 0.0
    %825 = vmatprep.subr.mxu0 0.0
    %826 = vmatpush1.msra.mxu0 0.0
    %827 = vmatprep.subr.mxu0 0.0
    %828 = vmatpush1.msra.mxu0 0.0
    %829 = vmatprep.subr.mxu0 0.0
    %830 = vmatpush1.msra.mxu0 0.0
    %831 = vmatprep.subr.mxu0 0.0
    %832 = vmatpush1.msra.mxu0 0.0
    %833 = vmatprep.subr.mxu0 0.0
    %834 = vmatpush1.msra.mxu0 0.0
    %835 = vmatprep.subr.mxu0 0.0
    %836 = vmatpush1.msra.mxu0 0.0
    %837 = vmatprep.subr.mxu0 0.0
    %838 = vmatpush1.msra.mxu0 0.0
    %839 = vmatprep.subr.mxu0 0.0
    %840 = vmatpush1.msra.mxu0 0.0
    %841 = vmatprep.mubr.f32.mxu0 0.0
    %842 = vmatmul.mubr.f32.gmra.mrb[0].mxu0 %v772
    %v843 = vpop.f32.mrb[0].mxu0
    %v844 = vadd.f32 %v763, %v843
    %v845 = vpop.f32.mrb[0].mxu0
    %846 = vmatprep.mubr.f32.mxu0 0.0
    %847 = vmatmul.mubr.f32.gmra.mrb[0].mxu0 %v775
    %v848 = vpop.f32.mrb[0].mxu0
    %v849 = vadd.f32 %v768, %v848
    %v850 = vpop.f32.mrb[0].mxu0
    %851 = vdwg.mxu0
    %v852 = vadd.f32 %v844, %v122
    %v853 = vadd.f32 %v849, %v122
    %v854 = vmax.f32 %v852, 0.0
    %v855 = vmax.f32 %v853, 0.0
    %858 = vrot.lane.b32.xlu0 %v854, 96
    %v859 = vpop.permute.xlu0 %858
    %860 = vrot.lane.b32.xlu0 %v855, 96
    %v861 = vpop.permute.xlu0 %860
    %v862 = vsel %vm135, %v859, 0
    %v864 = vsel %vm135, %v861, 0
    %866 = vmatprep.subr.mxu0 0.0
    %867 = vmatpush1.msra.mxu0 %v113
    %868 = vmatprep.subr.mxu0 0.0
    %869 = vmatpush1.msra.mxu0 %v114
    %870 = vmatprep.subr.mxu0 0.0
    %871 = vmatpush1.msra.mxu0 %v115
    %872 = vmatprep.subr.mxu0 0.0
    %873 = vmatpush1.msra.mxu0 %v116
    %874 = vmatprep.subr.mxu0 0.0
    %875 = vmatpush1.msra.mxu0 0.0
    %876 = vmatprep.subr.mxu0 0.0
    %877 = vmatpush1.msra.mxu0 0.0
    %878 = vmatprep.subr.mxu0 0.0
    %879 = vmatpush1.msra.mxu0 0.0
    %880 = vmatprep.subr.mxu0 0.0
    %881 = vmatpush1.msra.mxu0 0.0
    %882 = vmatprep.subr.mxu0 0.0
    %883 = vmatpush1.msra.mxu0 0.0
    %884 = vmatprep.subr.mxu0 0.0
    %885 = vmatpush1.msra.mxu0 0.0
    %886 = vmatprep.subr.mxu0 0.0
    %887 = vmatpush1.msra.mxu0 0.0
    %888 = vmatprep.subr.mxu0 0.0
    %889 = vmatpush1.msra.mxu0 0.0
    %890 = vmatprep.subr.mxu0 0.0
    %891 = vmatpush1.msra.mxu0 0.0
    %892 = vmatprep.subr.mxu0 0.0
    %893 = vmatpush1.msra.mxu0 0.0
    %894 = vmatprep.subr.mxu0 0.0
    %895 = vmatpush1.msra.mxu0 0.0
    %896 = vmatprep.subr.mxu0 0.0
    %897 = vmatpush1.msra.mxu0 0.0
    %898 = vmatprep.subr.mxu0 0.0
    %899 = vmatpush1.msra.mxu0 0.0
    %900 = vmatprep.subr.mxu0 0.0
    %901 = vmatpush1.msra.mxu0 0.0
    %902 = vmatprep.subr.mxu0 0.0
    %903 = vmatpush1.msra.mxu0 0.0
    %904 = vmatprep.subr.mxu0 0.0
    %905 = vmatpush1.msra.mxu0 0.0
    %906 = vmatprep.subr.mxu0 0.0
    %907 = vmatpush1.msra.mxu0 0.0
    %908 = vmatprep.subr.mxu0 0.0
    %909 = vmatpush1.msra.mxu0 0.0
    %910 = vmatprep.subr.mxu0 0.0
    %911 = vmatpush1.msra.mxu0 0.0
    %912 = vmatprep.subr.mxu0 0.0
    %913 = vmatpush1.msra.mxu0 0.0
    %914 = vmatprep.subr.mxu0 0.0
    %915 = vmatpush1.msra.mxu0 0.0
    %916 = vmatprep.subr.mxu0 0.0
    %917 = vmatpush1.msra.mxu0 0.0
    %918 = vmatprep.subr.mxu0 0.0
    %919 = vmatpush1.msra.mxu0 0.0
    %920 = vmatprep.subr.mxu0 0.0
    %921 = vmatpush1.msra.mxu0 0.0
    %922 = vmatprep.subr.mxu0 0.0
    %923 = vmatpush1.msra.mxu0 0.0
    %924 = vmatprep.subr.mxu0 0.0
    %925 = vmatpush1.msra.mxu0 0.0
    %926 = vmatprep.subr.mxu0 0.0
    %927 = vmatpush1.msra.mxu0 0.0
    %928 = vmatprep.subr.mxu0 0.0
    %929 = vmatpush1.msra.mxu0 0.0
    %930 = vmatprep.mubr.f32.mxu0 0.0
    %931 = vmatmul.mubr.f32.gmra.mrb[0].mxu0 %v862
    %v932 = vpop.f32.mrb[0].mxu0
    %v933 = vadd.f32 %v129, %v932
    %v934 = vpop.f32.mrb[0].mxu0
    %935 = vmatprep.mubr.f32.mxu0 0.0
    %936 = vmatmul.mubr.f32.gmra.mrb[0].mxu0 %v864
    %v937 = vpop.f32.mrb[0].mxu0
    %v938 = vadd.f32 %v129, %v937
    %v939 = vpop.f32.mrb[0].mxu0
    %940 = vdwg.mxu0
    %941 = vmax.xlane.f32.xlu0 %v933
    %v942 = vpop.xlane.xlu0 %941
    %943 = vmax.xlane.f32.xlu0 %v938
    %v944 = vpop.xlane.xlu0 %943
    %v945 = vsub.f32 %v933, %v942
    %v946 = vsub.f32 %v938, %v944
    %v947 = vmul.f32 %v945, 1.442695
    %v948 = vpow.pop %v947
    %v949 = vmul.f32 %v946, 1.442695
    %v950 = vpow.pop %v949
    %951 = vadd.xlane.f32.xlu0 %v948
    %v952 = vpop.xlane.xlu0 %951
    %953 = vadd.xlane.f32.xlu0 %v950
    %v954 = vpop.xlane.xlu0 %953
    %v955 = vlog2.pop %v952
    %v956 = vmul.f32 %v955, 0.6931472
    %v957 = vlog2.pop %v954
    %v958 = vmul.f32 %v957, 0.6931472
    %v959 = vsub.f32 %v945, %v956
    %v960 = vsub.f32 %v946, %v958
    %s961 = scalar_lea.vmem [#allocation11], 32
    %962 = vst [vmem:[%s961] sm:$0xff] %v959
    %963 = vst [vmem:[%s961 + $0x8] sm:$0xff] %v960
    %s964 = scalar_lea.vmem [#allocation2], 48
    %v965 = vld [vmem:[%s964] sm:$0xff]
    %v966 = vld [vmem:[%s964 + $0x8] sm:$0xff]
    %v968 = vsel %vm135, %v852, 0
    %v971 = vsel %vm135, %v853, 0
    %973 = vmatprep.subr.mxu0 0.0
    %974 = vmatpush1.msra.mxu0 %v109
    %975 = vmatprep.subr.mxu0 0.0
    %976 = vmatpush1.msra.mxu0 %v110
    %977 = vmatprep.subr.mxu0 0.0
    %978 = vmatpush1.msra.mxu0 %v111
    %979 = vmatprep.subr.mxu0 0.0
    %980 = vmatpush1.msra.mxu0 %v112
    %981 = vmatprep.subr.mxu0 0.0
    %982 = vmatpush1.msra.mxu0 0.0
    %983 = vmatprep.subr.mxu0 0.0
    %984 = vmatpush1.msra.mxu0 0.0
    %985 = vmatprep.subr.mxu0 0.0
    %986 = vmatpush1.msra.mxu0 0.0
    %987 = vmatprep.subr.mxu0 0.0
    %988 = vmatpush1.msra.mxu0 0.0
    %989 = vmatprep.subr.mxu0 0.0
    %990 = vmatpush1.msra.mxu0 0.0
    %991 = vmatprep.subr.mxu0 0.0
    %992 = vmatpush1.msra.mxu0 0.0
    %993 = vmatprep.subr.mxu0 0.0
    %994 = vmatpush1.msra.mxu0 0.0
    %995 = vmatprep.subr.mxu0 0.0
    %996 = vmatpush1.msra.mxu0 0.0
    %997 = vmatprep.subr.mxu0 0.0
    %998 = vmatpush1.msra.mxu0 0.0
    %999 = vmatprep.subr.mxu0 0.0
    %1000 = vmatpush1.msra.mxu0 0.0
    %1001 = vmatprep.subr.mxu0 0.0
    %1002 = vmatpush1.msra.mxu0 0.0
    %1003 = vmatprep.subr.mxu0 0.0
    %1004 = vmatpush1.msra.mxu0 0.0
    %1005 = vmatprep.subr.mxu0 0.0
    %1006 = vmatpush1.msra.mxu0 0.0
    %1007 = vmatprep.subr.mxu0 0.0
    %1008 = vmatpush1.msra.mxu0 0.0
    %1009 = vmatprep.subr.mxu0 0.0
    %1010 = vmatpush1.msra.mxu0 0.0
    %1011 = vmatprep.subr.mxu0 0.0
    %1012 = vmatpush1.msra.mxu0 0.0
    %1013 = vmatprep.subr.mxu0 0.0
    %1014 = vmatpush1.msra.mxu0 0.0
    %1015 = vmatprep.subr.mxu0 0.0
    %1016 = vmatpush1.msra.mxu0 0.0
    %1017 = vmatprep.subr.mxu0 0.0
    %1018 = vmatpush1.msra.mxu0 0.0
    %1019 = vmatprep.subr.mxu0 0.0
    %1020 = vmatpush1.msra.mxu0 0.0
    %1021 = vmatprep.subr.mxu0 0.0
    %1022 = vmatpush1.msra.mxu0 0.0
    %1023 = vmatprep.subr.mxu0 0.0
    %1024 = vmatpush1.msra.mxu0 0.0
    %1025 = vmatprep.subr.mxu0 0.0
    %1026 = vmatpush1.msra.mxu0 0.0
    %1027 = vmatprep.subr.mxu0 0.0
    %1028 = vmatpush1.msra.mxu0 0.0
    %1029 = vmatprep.subr.mxu0 0.0
    %1030 = vmatpush1.msra.mxu0 0.0
    %1031 = vmatprep.subr.mxu0 0.0
    %1032 = vmatpush1.msra.mxu0 0.0
    %1033 = vmatprep.subr.mxu0 0.0
    %1034 = vmatpush1.msra.mxu0 0.0
    %1035 = vmatprep.subr.mxu0 0.0
    %1036 = vmatpush1.msra.mxu0 0.0
    %1037 = vmatprep.mubr.f32.mxu0 0.0
    %1038 = vmatmul.mubr.f32.gmra.mrb[0].mxu0 %v968
    %v1039 = vpop.f32.mrb[0].mxu0
    %v1040 = vadd.f32 0.0, %v1039
    %v1041 = vpop.f32.mrb[0].mxu0
    %1042 = vmatprep.mubr.f32.mxu0 0.0
    %1043 = vmatmul.mubr.f32.gmra.mrb[0].mxu0 %v971
    %v1044 = vpop.f32.mrb[0].mxu0
    %v1045 = vadd.f32 0.0, %v1044
    %v1046 = vpop.f32.mrb[0].mxu0
    %1047 = vdwg.mxu0
    %v1049 = vsel %vm217, %v965, 0
    %v1052 = vsel %vm217, %v966, 0
    %1054 = vmatprep.subr.mxu0 0.0
    %1055 = vmatpush1.msra.mxu0 %v107
    %1056 = vmatprep.subr.mxu0 0.0
    %1057 = vmatpush1.msra.mxu0 %v108
    %1058 = vmatprep.subr.mxu0 0.0
    %1059 = vmatpush1.msra.mxu0 0.0
    %1060 = vmatprep.subr.mxu0 0.0
    %1061 = vmatpush1.msra.mxu0 0.0
    %1062 = vmatprep.subr.mxu0 0.0
    %1063 = vmatpush1.msra.mxu0 0.0
    %1064 = vmatprep.subr.mxu0 0.0
    %1065 = vmatpush1.msra.mxu0 0.0
    %1066 = vmatprep.subr.mxu0 0.0
    %1067 = vmatpush1.msra.mxu0 0.0
    %1068 = vmatprep.subr.mxu0 0.0
    %1069 = vmatpush1.msra.mxu0 0.0
    %1070 = vmatprep.subr.mxu0 0.0
    %1071 = vmatpush1.msra.mxu0 0.0
    %1072 = vmatprep.subr.mxu0 0.0
    %1073 = vmatpush1.msra.mxu0 0.0
    %1074 = vmatprep.subr.mxu0 0.0
    %1075 = vmatpush1.msra.mxu0 0.0
    %1076 = vmatprep.subr.mxu0 0.0
    %1077 = vmatpush1.msra.mxu0 0.0
    %1078 = vmatprep.subr.mxu0 0.0
    %1079 = vmatpush1.msra.mxu0 0.0
    %1080 = vmatprep.subr.mxu0 0.0
    %1081 = vmatpush1.msra.mxu0 0.0
    %1082 = vmatprep.subr.mxu0 0.0
    %1083 = vmatpush1.msra.mxu0 0.0
    %1084 = vmatprep.subr.mxu0 0.0
    %1085 = vmatpush1.msra.mxu0 0.0
    %1086 = vmatprep.subr.mxu0 0.0
    %1087 = vmatpush1.msra.mxu0 0.0
    %1088 = vmatprep.subr.mxu0 0.0
    %1089 = vmatpush1.msra.mxu0 0.0
    %1090 = vmatprep.subr.mxu0 0.0
    %1091 = vmatpush1.msra.mxu0 0.0
    %1092 = vmatprep.subr.mxu0 0.0
    %1093 = vmatpush1.msra.mxu0 0.0
    %1094 = vmatprep.subr.mxu0 0.0
    %1095 = vmatpush1.msra.mxu0 0.0
    %1096 = vmatprep.subr.mxu0 0.0
    %1097 = vmatpush1.msra.mxu0 0.0
    %1098 = vmatprep.subr.mxu0 0.0
    %1099 = vmatpush1.msra.mxu0 0.0
    %1100 = vmatprep.subr.mxu0 0.0
    %1101 = vmatpush1.msra.mxu0 0.0
    %1102 = vmatprep.subr.mxu0 0.0
    %1103 = vmatpush1.msra.mxu0 0.0
    %1104 = vmatprep.subr.mxu0 0.0
    %1105 = vmatpush1.msra.mxu0 0.0
    %1106 = vmatprep.subr.mxu0 0.0
    %1107 = vmatpush1.msra.mxu0 0.0
    %1108 = vmatprep.subr.mxu0 0.0
    %1109 = vmatpush1.msra.mxu0 0.0
    %1110 = vmatprep.subr.mxu0 0.0
    %1111 = vmatpush1.msra.mxu0 0.0
    %1112 = vmatprep.subr.mxu0 0.0
    %1113 = vmatpush1.msra.mxu0 0.0
    %1114 = vmatprep.subr.mxu0 0.0
    %1115 = vmatpush1.msra.mxu0 0.0
    %1116 = vmatprep.subr.mxu0 0.0
    %1117 = vmatpush1.msra.mxu0 0.0
    %1118 = vmatprep.mubr.f32.mxu0 0.0
    %1119 = vmatmul.mubr.f32.gmra.mrb[0].mxu0 %v1049
    %v1120 = vpop.f32.mrb[0].mxu0
    %v1121 = vadd.f32 %v1040, %v1120
    %v1122 = vpop.f32.mrb[0].mxu0
    %1123 = vmatprep.mubr.f32.mxu0 0.0
    %1124 = vmatmul.mubr.f32.gmra.mrb[0].mxu0 %v1052
    %v1125 = vpop.f32.mrb[0].mxu0
    %v1126 = vadd.f32 %v1045, %v1125
    %v1127 = vpop.f32.mrb[0].mxu0
    %1128 = vdwg.mxu0
    %v1129 = vadd.f32 %v1121, %v122
    %v1130 = vadd.f32 %v1126, %v122
    %v1131 = vmax.f32 %v1129, 0.0
    %v1132 = vmax.f32 %v1130, 0.0
    %1135 = vrot.lane.b32.xlu0 %v1131, 96
    %v1136 = vpop.permute.xlu0 %1135
    %1137 = vrot.lane.b32.xlu0 %v1132, 96
    %v1138 = vpop.permute.xlu0 %1137
    %v1139 = vsel %vm135, %v1136, 0
    %v1141 = vsel %vm135, %v1138, 0
    %1143 = vmatprep.subr.mxu0 0.0
    %1144 = vmatpush1.msra.mxu0 %v113
    %1145 = vmatprep.subr.mxu0 0.0
    %1146 = vmatpush1.msra.mxu0 %v114
    %1147 = vmatprep.subr.mxu0 0.0
    %1148 = vmatpush1.msra.mxu0 %v115
    %1149 = vmatprep.subr.mxu0 0.0
    %1150 = vmatpush1.msra.mxu0 %v116
    %1151 = vmatprep.subr.mxu0 0.0
    %1152 = vmatpush1.msra.mxu0 0.0
    %1153 = vmatprep.subr.mxu0 0.0
    %1154 = vmatpush1.msra.mxu0 0.0
    %1155 = vmatprep.subr.mxu0 0.0
    %1156 = vmatpush1.msra.mxu0 0.0
    %1157 = vmatprep.subr.mxu0 0.0
    %1158 = vmatpush1.msra.mxu0 0.0
    %1159 = vmatprep.subr.mxu0 0.0
    %1160 = vmatpush1.msra.mxu0 0.0
    %1161 = vmatprep.subr.mxu0 0.0
    %1162 = vmatpush1.msra.mxu0 0.0
    %1163 = vmatprep.subr.mxu0 0.0
    %1164 = vmatpush1.msra.mxu0 0.0
    %1165 = vmatprep.subr.mxu0 0.0
    %1166 = vmatpush1.msra.mxu0 0.0
    %1167 = vmatprep.subr.mxu0 0.0
    %1168 = vmatpush1.msra.mxu0 0.0
    %1169 = vmatprep.subr.mxu0 0.0
    %1170 = vmatpush1.msra.mxu0 0.0
    %1171 = vmatprep.subr.mxu0 0.0
    %1172 = vmatpush1.msra.mxu0 0.0
    %1173 = vmatprep.subr.mxu0 0.0
    %1174 = vmatpush1.msra.mxu0 0.0
    %1175 = vmatprep.subr.mxu0 0.0
    %1176 = vmatpush1.msra.mxu0 0.0
    %1177 = vmatprep.subr.mxu0 0.0
    %1178 = vmatpush1.msra.mxu0 0.0
    %1179 = vmatprep.subr.mxu0 0.0
    %1180 = vmatpush1.msra.mxu0 0.0
    %1181 = vmatprep.subr.mxu0 0.0
    %1182 = vmatpush1.msra.mxu0 0.0
    %1183 = vmatprep.subr.mxu0 0.0
    %1184 = vmatpush1.msra.mxu0 0.0
    %1185 = vmatprep.subr.mxu0 0.0
    %1186 = vmatpush1.msra.mxu0 0.0
    %1187 = vmatprep.subr.mxu0 0.0
    %1188 = vmatpush1.msra.mxu0 0.0
    %1189 = vmatprep.subr.mxu0 0.0
    %1190 = vmatpush1.msra.mxu0 0.0
    %1191 = vmatprep.subr.mxu0 0.0
    %1192 = vmatpush1.msra.mxu0 0.0
    %1193 = vmatprep.subr.mxu0 0.0
    %1194 = vmatpush1.msra.mxu0 0.0
    %1195 = vmatprep.subr.mxu0 0.0
    %1196 = vmatpush1.msra.mxu0 0.0
    %1197 = vmatprep.subr.mxu0 0.0
    %1198 = vmatpush1.msra.mxu0 0.0
    %1199 = vmatprep.subr.mxu0 0.0
    %1200 = vmatpush1.msra.mxu0 0.0
    %1201 = vmatprep.subr.mxu0 0.0
    %1202 = vmatpush1.msra.mxu0 0.0
    %1203 = vmatprep.subr.mxu0 0.0
    %1204 = vmatpush1.msra.mxu0 0.0
    %1205 = vmatprep.subr.mxu0 0.0
    %1206 = vmatpush1.msra.mxu0 0.0
    %1207 = vmatprep.mubr.f32.mxu0 0.0
    %1208 = vmatmul.mubr.f32.gmra.mrb[0].mxu0 %v1139
    %v1209 = vpop.f32.mrb[0].mxu0
    %v1210 = vadd.f32 %v129, %v1209
    %v1211 = vpop.f32.mrb[0].mxu0
    %1212 = vmatprep.mubr.f32.mxu0 0.0
    %1213 = vmatmul.mubr.f32.gmra.mrb[0].mxu0 %v1141
    %v1214 = vpop.f32.mrb[0].mxu0
    %v1215 = vadd.f32 %v129, %v1214
    %v1216 = vpop.f32.mrb[0].mxu0
    %1217 = vdwg.mxu0
    %1218 = vmax.xlane.f32.xlu0 %v1210
    %v1219 = vpop.xlane.xlu0 %1218
    %1220 = vmax.xlane.f32.xlu0 %v1215
    %v1221 = vpop.xlane.xlu0 %1220
    %v1222 = vsub.f32 %v1210, %v1219
    %v1223 = vsub.f32 %v1215, %v1221
    %v1224 = vmul.f32 %v1222, 1.442695
    %v1225 = vpow.pop %v1224
    %v1226 = vmul.f32 %v1223, 1.442695
    %v1227 = vpow.pop %v1226
    %1228 = vadd.xlane.f32.xlu0 %v1225
    %v1229 = vpop.xlane.xlu0 %1228
    %1230 = vadd.xlane.f32.xlu0 %v1227
    %v1231 = vpop.xlane.xlu0 %1230
    %v1232 = vlog2.pop %v1229
    %v1233 = vmul.f32 %v1232, 0.6931472
    %v1234 = vlog2.pop %v1231
    %v1235 = vmul.f32 %v1234, 0.6931472
    %v1236 = vsub.f32 %v1222, %v1233
    %v1237 = vsub.f32 %v1223, %v1235
    %s1238 = scalar_lea.vmem [#allocation11], 48
    %1239 = vst [vmem:[%s1238] sm:$0xff] %v1236
    %1240 = vst [vmem:[%s1238 + $0x8] sm:$0xff] %v1237
    %s1241 = scalar_lea.vmem [#allocation2], 64
    %v1242 = vld [vmem:[%s1241] sm:$0xff]
    %v1243 = vld [vmem:[%s1241 + $0x8] sm:$0xff]
    %v1245 = vsel %vm135, %v1129, 0
    %v1248 = vsel %vm135, %v1130, 0
    %1250 = vmatprep.subr.mxu0 0.0
    %1251 = vmatpush1.msra.mxu0 %v109
    %1252 = vmatprep.subr.mxu0 0.0
    %1253 = vmatpush1.msra.mxu0 %v110
    %1254 = vmatprep.subr.mxu0 0.0
    %1255 = vmatpush1.msra.mxu0 %v111
    %1256 = vmatprep.subr.mxu0 0.0
    %1257 = vmatpush1.msra.mxu0 %v112
    %1258 = vmatprep.subr.mxu0 0.0
    %1259 = vmatpush1.msra.mxu0 0.0
    %1260 = vmatprep.subr.mxu0 0.0
    %1261 = vmatpush1.msra.mxu0 0.0
    %1262 = vmatprep.subr.mxu0 0.0
    %1263 = vmatpush1.msra.mxu0 0.0
    %1264 = vmatprep.subr.mxu0 0.0
    %1265 = vmatpush1.msra.mxu0 0.0
    %1266 = vmatprep.subr.mxu0 0.0
    %1267 = vmatpush1.msra.mxu0 0.0
    %1268 = vmatprep.subr.mxu0 0.0
    %1269 = vmatpush1.msra.mxu0 0.0
    %1270 = vmatprep.subr.mxu0 0.0
    %1271 = vmatpush1.msra.mxu0 0.0
    %1272 = vmatprep.subr.mxu0 0.0
    %1273 = vmatpush1.msra.mxu0 0.0
    %1274 = vmatprep.subr.mxu0 0.0
    %1275 = vmatpush1.msra.mxu0 0.0
    %1276 = vmatprep.subr.mxu0 0.0
    %1277 = vmatpush1.msra.mxu0 0.0
    %1278 = vmatprep.subr.mxu0 0.0
    %1279 = vmatpush1.msra.mxu0 0.0
    %1280 = vmatprep.subr.mxu0 0.0
    %1281 = vmatpush1.msra.mxu0 0.0
    %1282 = vmatprep.subr.mxu0 0.0
    %1283 = vmatpush1.msra.mxu0 0.0
    %1284 = vmatprep.subr.mxu0 0.0
    %1285 = vmatpush1.msra.mxu0 0.0
    %1286 = vmatprep.subr.mxu0 0.0
    %1287 = vmatpush1.msra.mxu0 0.0
    %1288 = vmatprep.subr.mxu0 0.0
    %1289 = vmatpush1.msra.mxu0 0.0
    %1290 = vmatprep.subr.mxu0 0.0
    %1291 = vmatpush1.msra.mxu0 0.0
    %1292 = vmatprep.subr.mxu0 0.0
    %1293 = vmatpush1.msra.mxu0 0.0
    %1294 = vmatprep.subr.mxu0 0.0
    %1295 = vmatpush1.msra.mxu0 0.0
    %1296 = vmatprep.subr.mxu0 0.0
    %1297 = vmatpush1.msra.mxu0 0.0
    %1298 = vmatprep.subr.mxu0 0.0
    %1299 = vmatpush1.msra.mxu0 0.0
    %1300 = vmatprep.subr.mxu0 0.0
    %1301 = vmatpush1.msra.mxu0 0.0
    %1302 = vmatprep.subr.mxu0 0.0
    %1303 = vmatpush1.msra.mxu0 0.0
    %1304 = vmatprep.subr.mxu0 0.0
    %1305 = vmatpush1.msra.mxu0 0.0
    %1306 = vmatprep.subr.mxu0 0.0
    %1307 = vmatpush1.msra.mxu0 0.0
    %1308 = vmatprep.subr.mxu0 0.0
    %1309 = vmatpush1.msra.mxu0 0.0
    %1310 = vmatprep.subr.mxu0 0.0
    %1311 = vmatpush1.msra.mxu0 0.0
    %1312 = vmatprep.subr.mxu0 0.0
    %1313 = vmatpush1.msra.mxu0 0.0
    %1314 = vmatprep.mubr.f32.mxu0 0.0
    %1315 = vmatmul.mubr.f32.gmra.mrb[0].mxu0 %v1245
    %v1316 = vpop.f32.mrb[0].mxu0
    %v1317 = vadd.f32 0.0, %v1316
    %v1318 = vpop.f32.mrb[0].mxu0
    %1319 = vmatprep.mubr.f32.mxu0 0.0
    %1320 = vmatmul.mubr.f32.gmra.mrb[0].mxu0 %v1248
    %v1321 = vpop.f32.mrb[0].mxu0
    %v1322 = vadd.f32 0.0, %v1321
    %v1323 = vpop.f32.mrb[0].mxu0
    %1324 = vdwg.mxu0
    %v1326 = vsel %vm217, %v1242, 0
    %v1329 = vsel %vm217, %v1243, 0
    %1331 = vmatprep.subr.mxu0 0.0
    %1332 = vmatpush1.msra.mxu0 %v107
    %1333 = vmatprep.subr.mxu0 0.0
    %1334 = vmatpush1.msra.mxu0 %v108
    %1335 = vmatprep.subr.mxu0 0.0
    %1336 = vmatpush1.msra.mxu0 0.0
    %1337 = vmatprep.subr.mxu0 0.0
    %1338 = vmatpush1.msra.mxu0 0.0
    %1339 = vmatprep.subr.mxu0 0.0
    %1340 = vmatpush1.msra.mxu0 0.0
    %1341 = vmatprep.subr.mxu0 0.0
    %1342 = vmatpush1.msra.mxu0 0.0
    %1343 = vmatprep.subr.mxu0 0.0
    %1344 = vmatpush1.msra.mxu0 0.0
    %1345 = vmatprep.subr.mxu0 0.0
    %1346 = vmatpush1.msra.mxu0 0.0
    %1347 = vmatprep.subr.mxu0 0.0
    %1348 = vmatpush1.msra.mxu0 0.0
    %1349 = vmatprep.subr.mxu0 0.0
    %1350 = vmatpush1.msra.mxu0 0.0
    %1351 = vmatprep.subr.mxu0 0.0
    %1352 = vmatpush1.msra.mxu0 0.0
    %1353 = vmatprep.subr.mxu0 0.0
    %1354 = vmatpush1.msra.mxu0 0.0
    %1355 = vmatprep.subr.mxu0 0.0
    %1356 = vmatpush1.msra.mxu0 0.0
    %1357 = vmatprep.subr.mxu0 0.0
    %1358 = vmatpush1.msra.mxu0 0.0
    %1359 = vmatprep.subr.mxu0 0.0
    %1360 = vmatpush1.msra.mxu0 0.0
    %1361 = vmatprep.subr.mxu0 0.0
    %1362 = vmatpush1.msra.mxu0 0.0
    %1363 = vmatprep.subr.mxu0 0.0
    %1364 = vmatpush1.msra.mxu0 0.0
    %1365 = vmatprep.subr.mxu0 0.0
    %1366 = vmatpush1.msra.mxu0 0.0
    %1367 = vmatprep.subr.mxu0 0.0
    %1368 = vmatpush1.msra.mxu0 0.0
    %1369 = vmatprep.subr.mxu0 0.0
    %1370 = vmatpush1.msra.mxu0 0.0
    %1371 = vmatprep.subr.mxu0 0.0
    %1372 = vmatpush1.msra.mxu0 0.0
    %1373 = vmatprep.subr.mxu0 0.0
    %1374 = vmatpush1.msra.mxu0 0.0
    %1375 = vmatprep.subr.mxu0 0.0
    %1376 = vmatpush1.msra.mxu0 0.0
    %1377 = vmatprep.subr.mxu0 0.0
    %1378 = vmatpush1.msra.mxu0 0.0
    %1379 = vmatprep.subr.mxu0 0.0
    %1380 = vmatpush1.msra.mxu0 0.0
    %1381 = vmatprep.subr.mxu0 0.0
    %1382 = vmatpush1.msra.mxu0 0.0
    %1383 = vmatprep.subr.mxu0 0.0
    %1384 = vmatpush1.msra.mxu0 0.0
    %1385 = vmatprep.subr.mxu0 0.0
    %1386 = vmatpush1.msra.mxu0 0.0
    %1387 = vmatprep.subr.mxu0 0.0
    %1388 = vmatpush1.msra.mxu0 0.0
    %1389 = vmatprep.subr.mxu0 0.0
    %1390 = vmatpush1.msra.mxu0 0.0
    %1391 = vmatprep.subr.mxu0 0.0
    %1392 = vmatpush1.msra.mxu0 0.0
    %1393 = vmatprep.subr.mxu0 0.0
    %1394 = vmatpush1.msra.mxu0 0.0
    %1395 = vmatprep.mubr.f32.mxu0 0.0
    %1396 = vmatmul.mubr.f32.gmra.mrb[0].mxu0 %v1326
    %v1397 = vpop.f32.mrb[0].mxu0
    %v1398 = vadd.f32 %v1317, %v1397
    %v1399 = vpop.f32.mrb[0].mxu0
    %1400 = vmatprep.mubr.f32.mxu0 0.0
    %1401 = vmatmul.mubr.f32.gmra.mrb[0].mxu0 %v1329
    %v1402 = vpop.f32.mrb[0].mxu0
    %v1403 = vadd.f32 %v1322, %v1402
    %v1404 = vpop.f32.mrb[0].mxu0
    %1405 = vdwg.mxu0
    %v1406 = vadd.f32 %v1398, %v122
    %v1407 = vadd.f32 %v1403, %v122
    %v1408 = vmax.f32 %v1406, 0.0
    %v1409 = vmax.f32 %v1407, 0.0
    %1412 = vrot.lane.b32.xlu0 %v1408, 96
    %v1413 = vpop.permute.xlu0 %1412
    %1414 = vrot.lane.b32.xlu0 %v1409, 96
    %v1415 = vpop.permute.xlu0 %1414
    %v1416 = vsel %vm135, %v1413, 0
    %v1418 = vsel %vm135, %v1415, 0
    %1420 = vmatprep.subr.mxu0 0.0
    %1421 = vmatpush1.msra.mxu0 %v113
    %1422 = vmatprep.subr.mxu0 0.0
    %1423 = vmatpush1.msra.mxu0 %v114
    %1424 = vmatprep.subr.mxu0 0.0
    %1425 = vmatpush1.msra.mxu0 %v115
    %1426 = vmatprep.subr.mxu0 0.0
    %1427 = vmatpush1.msra.mxu0 %v116
    %1428 = vmatprep.subr.mxu0 0.0
    %1429 = vmatpush1.msra.mxu0 0.0
    %1430 = vmatprep.subr.mxu0 0.0
    %1431 = vmatpush1.msra.mxu0 0.0
    %1432 = vmatprep.subr.mxu0 0.0
    %1433 = vmatpush1.msra.mxu0 0.0
    %1434 = vmatprep.subr.mxu0 0.0
    %1435 = vmatpush1.msra.mxu0 0.0
    %1436 = vmatprep.subr.mxu0 0.0
    %1437 = vmatpush1.msra.mxu0 0.0
    %1438 = vmatprep.subr.mxu0 0.0
    %1439 = vmatpush1.msra.mxu0 0.0
    %1440 = vmatprep.subr.mxu0 0.0
    %1441 = vmatpush1.msra.mxu0 0.0
    %1442 = vmatprep.subr.mxu0 0.0
    %1443 = vmatpush1.msra.mxu0 0.0
    %1444 = vmatprep.subr.mxu0 0.0
    %1445 = vmatpush1.msra.mxu0 0.0
    %1446 = vmatprep.subr.mxu0 0.0
    %1447 = vmatpush1.msra.mxu0 0.0
    %1448 = vmatprep.subr.mxu0 0.0
    %1449 = vmatpush1.msra.mxu0 0.0
    %1450 = vmatprep.subr.mxu0 0.0
    %1451 = vmatpush1.msra.mxu0 0.0
    %1452 = vmatprep.subr.mxu0 0.0
    %1453 = vmatpush1.msra.mxu0 0.0
    %1454 = vmatprep.subr.mxu0 0.0
    %1455 = vmatpush1.msra.mxu0 0.0
    %1456 = vmatprep.subr.mxu0 0.0
    %1457 = vmatpush1.msra.mxu0 0.0
    %1458 = vmatprep.subr.mxu0 0.0
    %1459 = vmatpush1.msra.mxu0 0.0
    %1460 = vmatprep.subr.mxu0 0.0
    %1461 = vmatpush1.msra.mxu0 0.0
    %1462 = vmatprep.subr.mxu0 0.0
    %1463 = vmatpush1.msra.mxu0 0.0
    %1464 = vmatprep.subr.mxu0 0.0
    %1465 = vmatpush1.msra.mxu0 0.0
    %1466 = vmatprep.subr.mxu0 0.0
    %1467 = vmatpush1.msra.mxu0 0.0
    %1468 = vmatprep.subr.mxu0 0.0
    %1469 = vmatpush1.msra.mxu0 0.0
    %1470 = vmatprep.subr.mxu0 0.0
    %1471 = vmatpush1.msra.mxu0 0.0
    %1472 = vmatprep.subr.mxu0 0.0
    %1473 = vmatpush1.msra.mxu0 0.0
    %1474 = vmatprep.subr.mxu0 0.0
    %1475 = vmatpush1.msra.mxu0 0.0
    %1476 = vmatprep.subr.mxu0 0.0
    %1477 = vmatpush1.msra.mxu0 0.0
    %1478 = vmatprep.subr.mxu0 0.0
    %1479 = vmatpush1.msra.mxu0 0.0
    %1480 = vmatprep.subr.mxu0 0.0
    %1481 = vmatpush1.msra.mxu0 0.0
    %1482 = vmatprep.subr.mxu0 0.0
    %1483 = vmatpush1.msra.mxu0 0.0
    %1484 = vmatprep.mubr.f32.mxu0 0.0
    %1485 = vmatmul.mubr.f32.gmra.mrb[0].mxu0 %v1416
    %v1486 = vpop.f32.mrb[0].mxu0
    %v1487 = vadd.f32 %v129, %v1486
    %v1488 = vpop.f32.mrb[0].mxu0
    %1489 = vmatprep.mubr.f32.mxu0 0.0
    %1490 = vmatmul.mubr.f32.gmra.mrb[0].mxu0 %v1418
    %v1491 = vpop.f32.mrb[0].mxu0
    %v1492 = vadd.f32 %v129, %v1491
    %v1493 = vpop.f32.mrb[0].mxu0
    %1494 = vdwg.mxu0
    %1495 = vmax.xlane.f32.xlu0 %v1487
    %v1496 = vpop.xlane.xlu0 %1495
    %1497 = vmax.xlane.f32.xlu0 %v1492
    %v1498 = vpop.xlane.xlu0 %1497
    %v1499 = vsub.f32 %v1487, %v1496
    %v1500 = vsub.f32 %v1492, %v1498
    %v1501 = vmul.f32 %v1499, 1.442695
    %v1502 = vpow.pop %v1501
    %v1503 = vmul.f32 %v1500, 1.442695
    %v1504 = vpow.pop %v1503
    %1505 = vadd.xlane.f32.xlu0 %v1502
    %v1506 = vpop.xlane.xlu0 %1505
    %1507 = vadd.xlane.f32.xlu0 %v1504
    %v1508 = vpop.xlane.xlu0 %1507
    %v1509 = vlog2.pop %v1506
    %v1510 = vmul.f32 %v1509, 0.6931472
    %v1511 = vlog2.pop %v1508
    %v1512 = vmul.f32 %v1511, 0.6931472
    %v1513 = vsub.f32 %v1499, %v1510
    %v1514 = vsub.f32 %v1500, %v1512
    %s1515 = scalar_lea.vmem [#allocation11], 64
    %1516 = vst [vmem:[%s1515] sm:$0xff] %v1513
    %1517 = vst [vmem:[%s1515 + $0x8] sm:$0xff] %v1514
    %s1518 = scalar_lea.vmem [#allocation2], 80
    %v1519 = vld [vmem:[%s1518] sm:$0xff]
    %v1520 = vld [vmem:[%s1518 + $0x8] sm:$0xff]
    %v1522 = vsel %vm135, %v1406, 0
    %v1525 = vsel %vm135, %v1407, 0
    %1527 = vmatprep.subr.mxu0 0.0
    %1528 = vmatpush1.msra.mxu0 %v109
    %1529 = vmatprep.subr.mxu0 0.0
    %1530 = vmatpush1.msra.mxu0 %v110
    %1531 = vmatprep.subr.mxu0 0.0
    %1532 = vmatpush1.msra.mxu0 %v111
    %1533 = vmatprep.subr.mxu0 0.0
    %1534 = vmatpush1.msra.mxu0 %v112
    %1535 = vmatprep.subr.mxu0 0.0
    %1536 = vmatpush1.msra.mxu0 0.0
    %1537 = vmatprep.subr.mxu0 0.0
    %1538 = vmatpush1.msra.mxu0 0.0
    %1539 = vmatprep.subr.mxu0 0.0
    %1540 = vmatpush1.msra.mxu0 0.0
    %1541 = vmatprep.subr.mxu0 0.0
    %1542 = vmatpush1.msra.mxu0 0.0
    %1543 = vmatprep.subr.mxu0 0.0
    %1544 = vmatpush1.msra.mxu0 0.0
    %1545 = vmatprep.subr.mxu0 0.0
    %1546 = vmatpush1.msra.mxu0 0.0
    %1547 = vmatprep.subr.mxu0 0.0
    %1548 = vmatpush1.msra.mxu0 0.0
    %1549 = vmatprep.subr.mxu0 0.0
    %1550 = vmatpush1.msra.mxu0 0.0
    %1551 = vmatprep.subr.mxu0 0.0
    %1552 = vmatpush1.msra.mxu0 0.0
    %1553 = vmatprep.subr.mxu0 0.0
    %1554 = vmatpush1.msra.mxu0 0.0
    %1555 = vmatprep.subr.mxu0 0.0
    %1556 = vmatpush1.msra.mxu0 0.0
    %1557 = vmatprep.subr.mxu0 0.0
    %1558 = vmatpush1.msra.mxu0 0.0
    %1559 = vmatprep.subr.mxu0 0.0
    %1560 = vmatpush1.msra.mxu0 0.0
    %1561 = vmatprep.subr.mxu0 0.0
    %1562 = vmatpush1.msra.mxu0 0.0
    %1563 = vmatprep.subr.mxu0 0.0
    %1564 = vmatpush1.msra.mxu0 0.0
    %1565 = vmatprep.subr.mxu0 0.0
    %1566 = vmatpush1.msra.mxu0 0.0
    %1567 = vmatprep.subr.mxu0 0.0
    %1568 = vmatpush1.msra.mxu0 0.0
    %1569 = vmatprep.subr.mxu0 0.0
    %1570 = vmatpush1.msra.mxu0 0.0
    %1571 = vmatprep.subr.mxu0 0.0
    %1572 = vmatpush1.msra.mxu0 0.0
    %1573 = vmatprep.subr.mxu0 0.0
    %1574 = vmatpush1.msra.mxu0 0.0
    %1575 = vmatprep.subr.mxu0 0.0
    %1576 = vmatpush1.msra.mxu0 0.0
    %1577 = vmatprep.subr.mxu0 0.0
    %1578 = vmatpush1.msra.mxu0 0.0
    %1579 = vmatprep.subr.mxu0 0.0
    %1580 = vmatpush1.msra.mxu0 0.0
    %1581 = vmatprep.subr.mxu0 0.0
    %1582 = vmatpush1.msra.mxu0 0.0
    %1583 = vmatprep.subr.mxu0 0.0
    %1584 = vmatpush1.msra.mxu0 0.0
    %1585 = vmatprep.subr.mxu0 0.0
    %1586 = vmatpush1.msra.mxu0 0.0
    %1587 = vmatprep.subr.mxu0 0.0
    %1588 = vmatpush1.msra.mxu0 0.0
    %1589 = vmatprep.subr.mxu0 0.0
    %1590 = vmatpush1.msra.mxu0 0.0
    %1591 = vmatprep.mubr.f32.mxu0 0.0
    %1592 = vmatmul.mubr.f32.gmra.mrb[0].mxu0 %v1522
    %v1593 = vpop.f32.mrb[0].mxu0
    %v1594 = vadd.f32 0.0, %v1593
    %v1595 = vpop.f32.mrb[0].mxu0
    %1596 = vmatprep.mubr.f32.mxu0 0.0
    %1597 = vmatmul.mubr.f32.gmra.mrb[0].mxu0 %v1525
    %v1598 = vpop.f32.mrb[0].mxu0
    %v1599 = vadd.f32 0.0, %v1598
    %v1600 = vpop.f32.mrb[0].mxu0
    %1601 = vdwg.mxu0
    %v1603 = vsel %vm217, %v1519, 0
    %v1606 = vsel %vm217, %v1520, 0
    %1608 = vmatprep.subr.mxu0 0.0
    %1609 = vmatpush1.msra.mxu0 %v107
    %1610 = vmatprep.subr.mxu0 0.0
    %1611 = vmatpush1.msra.mxu0 %v108
    %1612 = vmatprep.subr.mxu0 0.0
    %1613 = vmatpush1.msra.mxu0 0.0
    %1614 = vmatprep.subr.mxu0 0.0
    %1615 = vmatpush1.msra.mxu0 0.0
    %1616 = vmatprep.subr.mxu0 0.0
    %1617 = vmatpush1.msra.mxu0 0.0
    %1618 = vmatprep.subr.mxu0 0.0
    %1619 = vmatpush1.msra.mxu0 0.0
    %1620 = vmatprep.subr.mxu0 0.0
    %1621 = vmatpush1.msra.mxu0 0.0
    %1622 = vmatprep.subr.mxu0 0.0
    %1623 = vmatpush1.msra.mxu0 0.0
    %1624 = vmatprep.subr.mxu0 0.0
    %1625 = vmatpush1.msra.mxu0 0.0
    %1626 = vmatprep.subr.mxu0 0.0
    %1627 = vmatpush1.msra.mxu0 0.0
    %1628 = vmatprep.subr.mxu0 0.0
    %1629 = vmatpush1.msra.mxu0 0.0
    %1630 = vmatprep.subr.mxu0 0.0
    %1631 = vmatpush1.msra.mxu0 0.0
    %1632 = vmatprep.subr.mxu0 0.0
    %1633 = vmatpush1.msra.mxu0 0.0
    %1634 = vmatprep.subr.mxu0 0.0
    %1635 = vmatpush1.msra.mxu0 0.0
    %1636 = vmatprep.subr.mxu0 0.0
    %1637 = vmatpush1.msra.mxu0 0.0
    %1638 = vmatprep.subr.mxu0 0.0
    %1639 = vmatpush1.msra.mxu0 0.0
    %1640 = vmatprep.subr.mxu0 0.0
    %1641 = vmatpush1.msra.mxu0 0.0
    %1642 = vmatprep.subr.mxu0 0.0
    %1643 = vmatpush1.msra.mxu0 0.0
    %1644 = vmatprep.subr.mxu0 0.0
    %1645 = vmatpush1.msra.mxu0 0.0
    %1646 = vmatprep.subr.mxu0 0.0
    %1647 = vmatpush1.msra.mxu0 0.0
    %1648 = vmatprep.subr.mxu0 0.0
    %1649 = vmatpush1.msra.mxu0 0.0
    %1650 = vmatprep.subr.mxu0 0.0
    %1651 = vmatpush1.msra.mxu0 0.0
    %1652 = vmatprep.subr.mxu0 0.0
    %1653 = vmatpush1.msra.mxu0 0.0
    %1654 = vmatprep.subr.mxu0 0.0
    %1655 = vmatpush1.msra.mxu0 0.0
    %1656 = vmatprep.subr.mxu0 0.0
    %1657 = vmatpush1.msra.mxu0 0.0
    %1658 = vmatprep.subr.mxu0 0.0
    %1659 = vmatpush1.msra.mxu0 0.0
    %1660 = vmatprep.subr.mxu0 0.0
    %1661 = vmatpush1.msra.mxu0 0.0
    %1662 = vmatprep.subr.mxu0 0.0
    %1663 = vmatpush1.msra.mxu0 0.0
    %1664 = vmatprep.subr.mxu0 0.0
    %1665 = vmatpush1.msra.mxu0 0.0
    %1666 = vmatprep.subr.mxu0 0.0
    %1667 = vmatpush1.msra.mxu0 0.0
    %1668 = vmatprep.subr.mxu0 0.0
    %1669 = vmatpush1.msra.mxu0 0.0
    %1670 = vmatprep.subr.mxu0 0.0
    %1671 = vmatpush1.msra.mxu0 0.0
    %1672 = vmatprep.mubr.f32.mxu0 0.0
    %1673 = vmatmul.mubr.f32.gmra.mrb[0].mxu0 %v1603
    %v1674 = vpop.f32.mrb[0].mxu0
    %v1675 = vadd.f32 %v1594, %v1674
    %v1676 = vpop.f32.mrb[0].mxu0
    %1677 = vmatprep.mubr.f32.mxu0 0.0
    %1678 = vmatmul.mubr.f32.gmra.mrb[0].mxu0 %v1606
    %v1679 = vpop.f32.mrb[0].mxu0
    %v1680 = vadd.f32 %v1599, %v1679
    %v1681 = vpop.f32.mrb[0].mxu0
    %1682 = vdwg.mxu0
    %v1683 = vadd.f32 %v1675, %v122
    %v1684 = vadd.f32 %v1680, %v122
    %v1685 = vmax.f32 %v1683, 0.0
    %v1686 = vmax.f32 %v1684, 0.0
    %1689 = vrot.lane.b32.xlu0 %v1685, 96
    %v1690 = vpop.permute.xlu0 %1689
    %1691 = vrot.lane.b32.xlu0 %v1686, 96
    %v1692 = vpop.permute.xlu0 %1691
    %v1693 = vsel %vm135, %v1690, 0
    %v1695 = vsel %vm135, %v1692, 0
    %1697 = vmatprep.subr.mxu0 0.0
    %1698 = vmatpush1.msra.mxu0 %v113
    %1699 = vmatprep.subr.mxu0 0.0
    %1700 = vmatpush1.msra.mxu0 %v114
    %1701 = vmatprep.subr.mxu0 0.0
    %1702 = vmatpush1.msra.mxu0 %v115
    %1703 = vmatprep.subr.mxu0 0.0
    %1704 = vmatpush1.msra.mxu0 %v116
    %1705 = vmatprep.subr.mxu0 0.0
    %1706 = vmatpush1.msra.mxu0 0.0
    %1707 = vmatprep.subr.mxu0 0.0
    %1708 = vmatpush1.msra.mxu0 0.0
    %1709 = vmatprep.subr.mxu0 0.0
    %1710 = vmatpush1.msra.mxu0 0.0
    %1711 = vmatprep.subr.mxu0 0.0
    %1712 = vmatpush1.msra.mxu0 0.0
    %1713 = vmatprep.subr.mxu0 0.0
    %1714 = vmatpush1.msra.mxu0 0.0
    %1715 = vmatprep.subr.mxu0 0.0
    %1716 = vmatpush1.msra.mxu0 0.0
    %1717 = vmatprep.subr.mxu0 0.0
    %1718 = vmatpush1.msra.mxu0 0.0
    %1719 = vmatprep.subr.mxu0 0.0
    %1720 = vmatpush1.msra.mxu0 0.0
    %1721 = vmatprep.subr.mxu0 0.0
    %1722 = vmatpush1.msra.mxu0 0.0
    %1723 = vmatprep.subr.mxu0 0.0
    %1724 = vmatpush1.msra.mxu0 0.0
    %1725 = vmatprep.subr.mxu0 0.0
    %1726 = vmatpush1.msra.mxu0 0.0
    %1727 = vmatprep.subr.mxu0 0.0
    %1728 = vmatpush1.msra.mxu0 0.0
    %1729 = vmatprep.subr.mxu0 0.0
    %1730 = vmatpush1.msra.mxu0 0.0
    %1731 = vmatprep.subr.mxu0 0.0
    %1732 = vmatpush1.msra.mxu0 0.0
    %1733 = vmatprep.subr.mxu0 0.0
    %1734 = vmatpush1.msra.mxu0 0.0
    %1735 = vmatprep.subr.mxu0 0.0
    %1736 = vmatpush1.msra.mxu0 0.0
    %1737 = vmatprep.subr.mxu0 0.0
    %1738 = vmatpush1.msra.mxu0 0.0
    %1739 = vmatprep.subr.mxu0 0.0
    %1740 = vmatpush1.msra.mxu0 0.0
    %1741 = vmatprep.subr.mxu0 0.0
    %1742 = vmatpush1.msra.mxu0 0.0
    %1743 = vmatprep.subr.mxu0 0.0
    %1744 = vmatpush1.msra.mxu0 0.0
    %1745 = vmatprep.subr.mxu0 0.0
    %1746 = vmatpush1.msra.mxu0 0.0
    %1747 = vmatprep.subr.mxu0 0.0
    %1748 = vmatpush1.msra.mxu0 0.0
    %1749 = vmatprep.subr.mxu0 0.0
    %1750 = vmatpush1.msra.mxu0 0.0
    %1751 = vmatprep.subr.mxu0 0.0
    %1752 = vmatpush1.msra.mxu0 0.0
    %1753 = vmatprep.subr.mxu0 0.0
    %1754 = vmatpush1.msra.mxu0 0.0
    %1755 = vmatprep.subr.mxu0 0.0
    %1756 = vmatpush1.msra.mxu0 0.0
    %1757 = vmatprep.subr.mxu0 0.0
    %1758 = vmatpush1.msra.mxu0 0.0
    %1759 = vmatprep.subr.mxu0 0.0
    %1760 = vmatpush1.msra.mxu0 0.0
    %1761 = vmatprep.mubr.f32.mxu0 0.0
    %1762 = vmatmul.mubr.f32.gmra.mrb[0].mxu0 %v1693
    %v1763 = vpop.f32.mrb[0].mxu0
    %v1764 = vadd.f32 %v129, %v1763
    %v1765 = vpop.f32.mrb[0].mxu0
    %1766 = vmatprep.mubr.f32.mxu0 0.0
    %1767 = vmatmul.mubr.f32.gmra.mrb[0].mxu0 %v1695
    %v1768 = vpop.f32.mrb[0].mxu0
    %v1769 = vadd.f32 %v129, %v1768
    %v1770 = vpop.f32.mrb[0].mxu0
    %1771 = vdwg.mxu0
    %1772 = vmax.xlane.f32.xlu0 %v1764
    %v1773 = vpop.xlane.xlu0 %1772
    %1774 = vmax.xlane.f32.xlu0 %v1769
    %v1775 = vpop.xlane.xlu0 %1774
    %v1776 = vsub.f32 %v1764, %v1773
    %v1777 = vsub.f32 %v1769, %v1775
    %v1778 = vmul.f32 %v1776, 1.442695
    %v1779 = vpow.pop %v1778
    %v1780 = vmul.f32 %v1777, 1.442695
    %v1781 = vpow.pop %v1780
    %1782 = vadd.xlane.f32.xlu0 %v1779
    %v1783 = vpop.xlane.xlu0 %1782
    %1784 = vadd.xlane.f32.xlu0 %v1781
    %v1785 = vpop.xlane.xlu0 %1784
    %v1786 = vlog2.pop %v1783
    %v1787 = vmul.f32 %v1786, 0.6931472
    %v1788 = vlog2.pop %v1785
    %v1789 = vmul.f32 %v1788, 0.6931472
    %v1790 = vsub.f32 %v1776, %v1787
    %v1791 = vsub.f32 %v1777, %v1789
    %s1792 = scalar_lea.vmem [#allocation11], 80
    %1793 = vst [vmem:[%s1792] sm:$0xff] %v1790
    %1794 = vst [vmem:[%s1792 + $0x8] sm:$0xff] %v1791
    %s1795 = scalar_lea.vmem [#allocation2], 96
    %v1796 = vld [vmem:[%s1795] sm:$0xff]
    %v1797 = vld [vmem:[%s1795 + $0x8] sm:$0xff]
    %v1799 = vsel %vm135, %v1683, 0
    %v1802 = vsel %vm135, %v1684, 0
    %1804 = vmatprep.subr.mxu0 0.0
    %1805 = vmatpush1.msra.mxu0 %v109
    %1806 = vmatprep.subr.mxu0 0.0
    %1807 = vmatpush1.msra.mxu0 %v110
    %1808 = vmatprep.subr.mxu0 0.0
    %1809 = vmatpush1.msra.mxu0 %v111
    %1810 = vmatprep.subr.mxu0 0.0
    %1811 = vmatpush1.msra.mxu0 %v112
    %1812 = vmatprep.subr.mxu0 0.0
    %1813 = vmatpush1.msra.mxu0 0.0
    %1814 = vmatprep.subr.mxu0 0.0
    %1815 = vmatpush1.msra.mxu0 0.0
    %1816 = vmatprep.subr.mxu0 0.0
    %1817 = vmatpush1.msra.mxu0 0.0
    %1818 = vmatprep.subr.mxu0 0.0
    %1819 = vmatpush1.msra.mxu0 0.0
    %1820 = vmatprep.subr.mxu0 0.0
    %1821 = vmatpush1.msra.mxu0 0.0
    %1822 = vmatprep.subr.mxu0 0.0
    %1823 = vmatpush1.msra.mxu0 0.0
    %1824 = vmatprep.subr.mxu0 0.0
    %1825 = vmatpush1.msra.mxu0 0.0
    %1826 = vmatprep.subr.mxu0 0.0
    %1827 = vmatpush1.msra.mxu0 0.0
    %1828 = vmatprep.subr.mxu0 0.0
    %1829 = vmatpush1.msra.mxu0 0.0
    %1830 = vmatprep.subr.mxu0 0.0
    %1831 = vmatpush1.msra.mxu0 0.0
    %1832 = vmatprep.subr.mxu0 0.0
    %1833 = vmatpush1.msra.mxu0 0.0
    %1834 = vmatprep.subr.mxu0 0.0
    %1835 = vmatpush1.msra.mxu0 0.0
    %1836 = vmatprep.subr.mxu0 0.0
    %1837 = vmatpush1.msra.mxu0 0.0
    %1838 = vmatprep.subr.mxu0 0.0
    %1839 = vmatpush1.msra.mxu0 0.0
    %1840 = vmatprep.subr.mxu0 0.0
    %1841 = vmatpush1.msra.mxu0 0.0
    %1842 = vmatprep.subr.mxu0 0.0
    %1843 = vmatpush1.msra.mxu0 0.0
    %1844 = vmatprep.subr.mxu0 0.0
    %1845 = vmatpush1.msra.mxu0 0.0
    %1846 = vmatprep.subr.mxu0 0.0
    %1847 = vmatpush1.msra.mxu0 0.0
    %1848 = vmatprep.subr.mxu0 0.0
    %1849 = vmatpush1.msra.mxu0 0.0
    %1850 = vmatprep.subr.mxu0 0.0
    %1851 = vmatpush1.msra.mxu0 0.0
    %1852 = vmatprep.subr.mxu0 0.0
    %1853 = vmatpush1.msra.mxu0 0.0
    %1854 = vmatprep.subr.mxu0 0.0
    %1855 = vmatpush1.msra.mxu0 0.0
    %1856 = vmatprep.subr.mxu0 0.0
    %1857 = vmatpush1.msra.mxu0 0.0
    %1858 = vmatprep.subr.mxu0 0.0
    %1859 = vmatpush1.msra.mxu0 0.0
    %1860 = vmatprep.subr.mxu0 0.0
    %1861 = vmatpush1.msra.mxu0 0.0
    %1862 = vmatprep.subr.mxu0 0.0
    %1863 = vmatpush1.msra.mxu0 0.0
    %1864 = vmatprep.subr.mxu0 0.0
    %1865 = vmatpush1.msra.mxu0 0.0
    %1866 = vmatprep.subr.mxu0 0.0
    %1867 = vmatpush1.msra.mxu0 0.0
    %1868 = vmatprep.mubr.f32.mxu0 0.0
    %1869 = vmatmul.mubr.f32.gmra.mrb[0].mxu0 %v1799
    %v1870 = vpop.f32.mrb[0].mxu0
    %v1871 = vadd.f32 0.0, %v1870
    %v1872 = vpop.f32.mrb[0].mxu0
    %1873 = vmatprep.mubr.f32.mxu0 0.0
    %1874 = vmatmul.mubr.f32.gmra.mrb[0].mxu0 %v1802
    %v1875 = vpop.f32.mrb[0].mxu0
    %v1876 = vadd.f32 0.0, %v1875
    %v1877 = vpop.f32.mrb[0].mxu0
    %1878 = vdwg.mxu0
    %v1880 = vsel %vm217, %v1796, 0
    %v1883 = vsel %vm217, %v1797, 0
    %1885 = vmatprep.subr.mxu0 0.0
    %1886 = vmatpush1.msra.mxu0 %v107
    %1887 = vmatprep.subr.mxu0 0.0
    %1888 = vmatpush1.msra.mxu0 %v108
    %1889 = vmatprep.subr.mxu0 0.0
    %1890 = vmatpush1.msra.mxu0 0.0
    %1891 = vmatprep.subr.mxu0 0.0
    %1892 = vmatpush1.msra.mxu0 0.0
    %1893 = vmatprep.subr.mxu0 0.0
    %1894 = vmatpush1.msra.mxu0 0.0
    %1895 = vmatprep.subr.mxu0 0.0
    %1896 = vmatpush1.msra.mxu0 0.0
    %1897 = vmatprep.subr.mxu0 0.0
    %1898 = vmatpush1.msra.mxu0 0.0
    %1899 = vmatprep.subr.mxu0 0.0
    %1900 = vmatpush1.msra.mxu0 0.0
    %1901 = vmatprep.subr.mxu0 0.0
    %1902 = vmatpush1.msra.mxu0 0.0
    %1903 = vmatprep.subr.mxu0 0.0
    %1904 = vmatpush1.msra.mxu0 0.0
    %1905 = vmatprep.subr.mxu0 0.0
    %1906 = vmatpush1.msra.mxu0 0.0
    %1907 = vmatprep.subr.mxu0 0.0
    %1908 = vmatpush1.msra.mxu0 0.0
    %1909 = vmatprep.subr.mxu0 0.0
    %1910 = vmatpush1.msra.mxu0 0.0
    %1911 = vmatprep.subr.mxu0 0.0
    %1912 = vmatpush1.msra.mxu0 0.0
    %1913 = vmatprep.subr.mxu0 0.0
    %1914 = vmatpush1.msra.mxu0 0.0
    %1915 = vmatprep.subr.mxu0 0.0
    %1916 = vmatpush1.msra.mxu0 0.0
    %1917 = vmatprep.subr.mxu0 0.0
    %1918 = vmatpush1.msra.mxu0 0.0
    %1919 = vmatprep.subr.mxu0 0.0
    %1920 = vmatpush1.msra.mxu0 0.0
    %1921 = vmatprep.subr.mxu0 0.0
    %1922 = vmatpush1.msra.mxu0 0.0
    %1923 = vmatprep.subr.mxu0 0.0
    %1924 = vmatpush1.msra.mxu0 0.0
    %1925 = vmatprep.subr.mxu0 0.0
    %1926 = vmatpush1.msra.mxu0 0.0
    %1927 = vmatprep.subr.mxu0 0.0
    %1928 = vmatpush1.msra.mxu0 0.0
    %1929 = vmatprep.subr.mxu0 0.0
    %1930 = vmatpush1.msra.mxu0 0.0
    %1931 = vmatprep.subr.mxu0 0.0
    %1932 = vmatpush1.msra.mxu0 0.0
    %1933 = vmatprep.subr.mxu0 0.0
    %1934 = vmatpush1.msra.mxu0 0.0
    %1935 = vmatprep.subr.mxu0 0.0
    %1936 = vmatpush1.msra.mxu0 0.0
    %1937 = vmatprep.subr.mxu0 0.0
    %1938 = vmatpush1.msra.mxu0 0.0
    %1939 = vmatprep.subr.mxu0 0.0
    %1940 = vmatpush1.msra.mxu0 0.0
    %1941 = vmatprep.subr.mxu0 0.0
    %1942 = vmatpush1.msra.mxu0 0.0
    %1943 = vmatprep.subr.mxu0 0.0
    %1944 = vmatpush1.msra.mxu0 0.0
    %1945 = vmatprep.subr.mxu0 0.0
    %1946 = vmatpush1.msra.mxu0 0.0
    %1947 = vmatprep.subr.mxu0 0.0
    %1948 = vmatpush1.msra.mxu0 0.0
    %1949 = vmatprep.mubr.f32.mxu0 0.0
    %1950 = vmatmul.mubr.f32.gmra.mrb[0].mxu0 %v1880
    %v1951 = vpop.f32.mrb[0].mxu0
    %v1952 = vadd.f32 %v1871, %v1951
    %v1953 = vpop.f32.mrb[0].mxu0
    %1954 = vmatprep.mubr.f32.mxu0 0.0
    %1955 = vmatmul.mubr.f32.gmra.mrb[0].mxu0 %v1883
    %v1956 = vpop.f32.mrb[0].mxu0
    %v1957 = vadd.f32 %v1876, %v1956
    %v1958 = vpop.f32.mrb[0].mxu0
    %1959 = vdwg.mxu0
    %v1960 = vadd.f32 %v1952, %v122
    %v1961 = vadd.f32 %v1957, %v122
    %v1962 = vmax.f32 %v1960, 0.0
    %v1963 = vmax.f32 %v1961, 0.0
    %1966 = vrot.lane.b32.xlu0 %v1962, 96
    %v1967 = vpop.permute.xlu0 %1966
    %1968 = vrot.lane.b32.xlu0 %v1963, 96
    %v1969 = vpop.permute.xlu0 %1968
    %v1970 = vsel %vm135, %v1967, 0
    %v1972 = vsel %vm135, %v1969, 0
    %1974 = vmatprep.subr.mxu0 0.0
    %1975 = vmatpush1.msra.mxu0 %v113
    %1976 = vmatprep.subr.mxu0 0.0
    %1977 = vmatpush1.msra.mxu0 %v114
    %1978 = vmatprep.subr.mxu0 0.0
    %1979 = vmatpush1.msra.mxu0 %v115
    %1980 = vmatprep.subr.mxu0 0.0
    %1981 = vmatpush1.msra.mxu0 %v116
    %1982 = vmatprep.subr.mxu0 0.0
    %1983 = vmatpush1.msra.mxu0 0.0
    %1984 = vmatprep.subr.mxu0 0.0
    %1985 = vmatpush1.msra.mxu0 0.0
    %1986 = vmatprep.subr.mxu0 0.0
    %1987 = vmatpush1.msra.mxu0 0.0
    %1988 = vmatprep.subr.mxu0 0.0
    %1989 = vmatpush1.msra.mxu0 0.0
    %1990 = vmatprep.subr.mxu0 0.0
    %1991 = vmatpush1.msra.mxu0 0.0
    %1992 = vmatprep.subr.mxu0 0.0
    %1993 = vmatpush1.msra.mxu0 0.0
    %1994 = vmatprep.subr.mxu0 0.0
    %1995 = vmatpush1.msra.mxu0 0.0
    %1996 = vmatprep.subr.mxu0 0.0
    %1997 = vmatpush1.msra.mxu0 0.0
    %1998 = vmatprep.subr.mxu0 0.0
    %1999 = vmatpush1.msra.mxu0 0.0
    %2000 = vmatprep.subr.mxu0 0.0
    %2001 = vmatpush1.msra.mxu0 0.0
    %2002 = vmatprep.subr.mxu0 0.0
    %2003 = vmatpush1.msra.mxu0 0.0
    %2004 = vmatprep.subr.mxu0 0.0
    %2005 = vmatpush1.msra.mxu0 0.0
    %2006 = vmatprep.subr.mxu0 0.0
    %2007 = vmatpush1.msra.mxu0 0.0
    %2008 = vmatprep.subr.mxu0 0.0
    %2009 = vmatpush1.msra.mxu0 0.0
    %2010 = vmatprep.subr.mxu0 0.0
    %2011 = vmatpush1.msra.mxu0 0.0
    %2012 = vmatprep.subr.mxu0 0.0
    %2013 = vmatpush1.msra.mxu0 0.0
    %2014 = vmatprep.subr.mxu0 0.0
    %2015 = vmatpush1.msra.mxu0 0.0
    %2016 = vmatprep.subr.mxu0 0.0
    %2017 = vmatpush1.msra.mxu0 0.0
    %2018 = vmatprep.subr.mxu0 0.0
    %2019 = vmatpush1.msra.mxu0 0.0
    %2020 = vmatprep.subr.mxu0 0.0
    %2021 = vmatpush1.msra.mxu0 0.0
    %2022 = vmatprep.subr.mxu0 0.0
    %2023 = vmatpush1.msra.mxu0 0.0
    %2024 = vmatprep.subr.mxu0 0.0
    %2025 = vmatpush1.msra.mxu0 0.0
    %2026 = vmatprep.subr.mxu0 0.0
    %2027 = vmatpush1.msra.mxu0 0.0
    %2028 = vmatprep.subr.mxu0 0.0
    %2029 = vmatpush1.msra.mxu0 0.0
    %2030 = vmatprep.subr.mxu0 0.0
    %2031 = vmatpush1.msra.mxu0 0.0
    %2032 = vmatprep.subr.mxu0 0.0
    %2033 = vmatpush1.msra.mxu0 0.0
    %2034 = vmatprep.subr.mxu0 0.0
    %2035 = vmatpush1.msra.mxu0 0.0
    %2036 = vmatprep.subr.mxu0 0.0
    %2037 = vmatpush1.msra.mxu0 0.0
    %2038 = vmatprep.mubr.f32.mxu0 0.0
    %2039 = vmatmul.mubr.f32.gmra.mrb[0].mxu0 %v1970
    %v2040 = vpop.f32.mrb[0].mxu0
    %v2041 = vadd.f32 %v129, %v2040
    %v2042 = vpop.f32.mrb[0].mxu0
    %2043 = vmatprep.mubr.f32.mxu0 0.0
    %2044 = vmatmul.mubr.f32.gmra.mrb[0].mxu0 %v1972
    %v2045 = vpop.f32.mrb[0].mxu0
    %v2046 = vadd.f32 %v129, %v2045
    %v2047 = vpop.f32.mrb[0].mxu0
    %2048 = vdwg.mxu0
    %2049 = vmax.xlane.f32.xlu0 %v2041
    %v2050 = vpop.xlane.xlu0 %2049
    %2051 = vmax.xlane.f32.xlu0 %v2046
    %v2052 = vpop.xlane.xlu0 %2051
    %v2053 = vsub.f32 %v2041, %v2050
    %v2054 = vsub.f32 %v2046, %v2052
    %v2055 = vmul.f32 %v2053, 1.442695
    %v2056 = vpow.pop %v2055
    %v2057 = vmul.f32 %v2054, 1.442695
    %v2058 = vpow.pop %v2057
    %2059 = vadd.xlane.f32.xlu0 %v2056
    %v2060 = vpop.xlane.xlu0 %2059
    %2061 = vadd.xlane.f32.xlu0 %v2058
    %v2062 = vpop.xlane.xlu0 %2061
    %v2063 = vlog2.pop %v2060
    %v2064 = vmul.f32 %v2063, 0.6931472
    %v2065 = vlog2.pop %v2062
    %v2066 = vmul.f32 %v2065, 0.6931472
    %v2067 = vsub.f32 %v2053, %v2064
    %v2068 = vsub.f32 %v2054, %v2066
    %s2069 = scalar_lea.vmem [#allocation11], 96
    %2070 = vst [vmem:[%s2069] sm:$0xff] %v2067
    %2071 = vst [vmem:[%s2069 + $0x8] sm:$0xff] %v2068
    %s2072 = scalar_lea.vmem [#allocation2], 112
    %v2073 = vld [vmem:[%s2072] sm:$0xff]
    %v2074 = vld [vmem:[%s2072 + $0x8] sm:$0xff]
    %v2076 = vsel %vm135, %v1960, 0
    %v2079 = vsel %vm135, %v1961, 0
    %2081 = vmatprep.subr.mxu0 0.0
    %2082 = vmatpush1.msra.mxu0 %v109
    %2083 = vmatprep.subr.mxu0 0.0
    %2084 = vmatpush1.msra.mxu0 %v110
    %2085 = vmatprep.subr.mxu0 0.0
    %2086 = vmatpush1.msra.mxu0 %v111
    %2087 = vmatprep.subr.mxu0 0.0
    %2088 = vmatpush1.msra.mxu0 %v112
    %2089 = vmatprep.subr.mxu0 0.0
    %2090 = vmatpush1.msra.mxu0 0.0
    %2091 = vmatprep.subr.mxu0 0.0
    %2092 = vmatpush1.msra.mxu0 0.0
    %2093 = vmatprep.subr.mxu0 0.0
    %2094 = vmatpush1.msra.mxu0 0.0
    %2095 = vmatprep.subr.mxu0 0.0
    %2096 = vmatpush1.msra.mxu0 0.0
    %2097 = vmatprep.subr.mxu0 0.0
    %2098 = vmatpush1.msra.mxu0 0.0
    %2099 = vmatprep.subr.mxu0 0.0
    %2100 = vmatpush1.msra.mxu0 0.0
    %2101 = vmatprep.subr.mxu0 0.0
    %2102 = vmatpush1.msra.mxu0 0.0
    %2103 = vmatprep.subr.mxu0 0.0
    %2104 = vmatpush1.msra.mxu0 0.0
    %2105 = vmatprep.subr.mxu0 0.0
    %2106 = vmatpush1.msra.mxu0 0.0
    %2107 = vmatprep.subr.mxu0 0.0
    %2108 = vmatpush1.msra.mxu0 0.0
    %2109 = vmatprep.subr.mxu0 0.0
    %2110 = vmatpush1.msra.mxu0 0.0
    %2111 = vmatprep.subr.mxu0 0.0
    %2112 = vmatpush1.msra.mxu0 0.0
    %2113 = vmatprep.subr.mxu0 0.0
    %2114 = vmatpush1.msra.mxu0 0.0
    %2115 = vmatprep.subr.mxu0 0.0
    %2116 = vmatpush1.msra.mxu0 0.0
    %2117 = vmatprep.subr.mxu0 0.0
    %2118 = vmatpush1.msra.mxu0 0.0
    %2119 = vmatprep.subr.mxu0 0.0
    %2120 = vmatpush1.msra.mxu0 0.0
    %2121 = vmatprep.subr.mxu0 0.0
    %2122 = vmatpush1.msra.mxu0 0.0
    %2123 = vmatprep.subr.mxu0 0.0
    %2124 = vmatpush1.msra.mxu0 0.0
    %2125 = vmatprep.subr.mxu0 0.0
    %2126 = vmatpush1.msra.mxu0 0.0
    %2127 = vmatprep.subr.mxu0 0.0
    %2128 = vmatpush1.msra.mxu0 0.0
    %2129 = vmatprep.subr.mxu0 0.0
    %2130 = vmatpush1.msra.mxu0 0.0
    %2131 = vmatprep.subr.mxu0 0.0
    %2132 = vmatpush1.msra.mxu0 0.0
    %2133 = vmatprep.subr.mxu0 0.0
    %2134 = vmatpush1.msra.mxu0 0.0
    %2135 = vmatprep.subr.mxu0 0.0
    %2136 = vmatpush1.msra.mxu0 0.0
    %2137 = vmatprep.subr.mxu0 0.0
    %2138 = vmatpush1.msra.mxu0 0.0
    %2139 = vmatprep.subr.mxu0 0.0
    %2140 = vmatpush1.msra.mxu0 0.0
    %2141 = vmatprep.subr.mxu0 0.0
    %2142 = vmatpush1.msra.mxu0 0.0
    %2143 = vmatprep.subr.mxu0 0.0
    %2144 = vmatpush1.msra.mxu0 0.0
    %2145 = vmatprep.mubr.f32.mxu0 0.0
    %2146 = vmatmul.mubr.f32.gmra.mrb[0].mxu0 %v2076
    %v2147 = vpop.f32.mrb[0].mxu0
    %v2148 = vadd.f32 0.0, %v2147
    %v2149 = vpop.f32.mrb[0].mxu0
    %2150 = vmatprep.mubr.f32.mxu0 0.0
    %2151 = vmatmul.mubr.f32.gmra.mrb[0].mxu0 %v2079
    %v2152 = vpop.f32.mrb[0].mxu0
    %v2153 = vadd.f32 0.0, %v2152
    %v2154 = vpop.f32.mrb[0].mxu0
    %2155 = vdwg.mxu0
    %v2157 = vsel %vm217, %v2073, 0
    %v2160 = vsel %vm217, %v2074, 0
    %2162 = vmatprep.subr.mxu0 0.0
    %2163 = vmatpush1.msra.mxu0 %v107
    %2164 = vmatprep.subr.mxu0 0.0
    %2165 = vmatpush1.msra.mxu0 %v108
    %2166 = vmatprep.subr.mxu0 0.0
    %2167 = vmatpush1.msra.mxu0 0.0
    %2168 = vmatprep.subr.mxu0 0.0
    %2169 = vmatpush1.msra.mxu0 0.0
    %2170 = vmatprep.subr.mxu0 0.0
    %2171 = vmatpush1.msra.mxu0 0.0
    %2172 = vmatprep.subr.mxu0 0.0
    %2173 = vmatpush1.msra.mxu0 0.0
    %2174 = vmatprep.subr.mxu0 0.0
    %2175 = vmatpush1.msra.mxu0 0.0
    %2176 = vmatprep.subr.mxu0 0.0
    %2177 = vmatpush1.msra.mxu0 0.0
    %2178 = vmatprep.subr.mxu0 0.0
    %2179 = vmatpush1.msra.mxu0 0.0
    %2180 = vmatprep.subr.mxu0 0.0
    %2181 = vmatpush1.msra.mxu0 0.0
    %2182 = vmatprep.subr.mxu0 0.0
    %2183 = vmatpush1.msra.mxu0 0.0
    %2184 = vmatprep.subr.mxu0 0.0
    %2185 = vmatpush1.msra.mxu0 0.0
    %2186 = vmatprep.subr.mxu0 0.0
    %2187 = vmatpush1.msra.mxu0 0.0
    %2188 = vmatprep.subr.mxu0 0.0
    %2189 = vmatpush1.msra.mxu0 0.0
    %2190 = vmatprep.subr.mxu0 0.0
    %2191 = vmatpush1.msra.mxu0 0.0
    %2192 = vmatprep.subr.mxu0 0.0
    %2193 = vmatpush1.msra.mxu0 0.0
    %2194 = vmatprep.subr.mxu0 0.0
    %2195 = vmatpush1.msra.mxu0 0.0
    %2196 = vmatprep.subr.mxu0 0.0
    %2197 = vmatpush1.msra.mxu0 0.0
    %2198 = vmatprep.subr.mxu0 0.0
    %2199 = vmatpush1.msra.mxu0 0.0
    %2200 = vmatprep.subr.mxu0 0.0
    %2201 = vmatpush1.msra.mxu0 0.0
    %2202 = vmatprep.subr.mxu0 0.0
    %2203 = vmatpush1.msra.mxu0 0.0
    %2204 = vmatprep.subr.mxu0 0.0
    %2205 = vmatpush1.msra.mxu0 0.0
    %2206 = vmatprep.subr.mxu0 0.0
    %2207 = vmatpush1.msra.mxu0 0.0
    %2208 = vmatprep.subr.mxu0 0.0
    %2209 = vmatpush1.msra.mxu0 0.0
    %2210 = vmatprep.subr.mxu0 0.0
    %2211 = vmatpush1.msra.mxu0 0.0
    %2212 = vmatprep.subr.mxu0 0.0
    %2213 = vmatpush1.msra.mxu0 0.0
    %2214 = vmatprep.subr.mxu0 0.0
    %2215 = vmatpush1.msra.mxu0 0.0
    %2216 = vmatprep.subr.mxu0 0.0
    %2217 = vmatpush1.msra.mxu0 0.0
    %2218 = vmatprep.subr.mxu0 0.0
    %2219 = vmatpush1.msra.mxu0 0.0
    %2220 = vmatprep.subr.mxu0 0.0
    %2221 = vmatpush1.msra.mxu0 0.0
    %2222 = vmatprep.subr.mxu0 0.0
    %2223 = vmatpush1.msra.mxu0 0.0
    %2224 = vmatprep.subr.mxu0 0.0
    %2225 = vmatpush1.msra.mxu0 0.0
    %2226 = vmatprep.mubr.f32.mxu0 0.0
    %2227 = vmatmul.mubr.f32.gmra.mrb[0].mxu0 %v2157
    %v2228 = vpop.f32.mrb[0].mxu0
    %v2229 = vadd.f32 %v2148, %v2228
    %v2230 = vpop.f32.mrb[0].mxu0
    %2231 = vmatprep.mubr.f32.mxu0 0.0
    %2232 = vmatmul.mubr.f32.gmra.mrb[0].mxu0 %v2160
    %v2233 = vpop.f32.mrb[0].mxu0
    %v2234 = vadd.f32 %v2153, %v2233
    %v2235 = vpop.f32.mrb[0].mxu0
    %2236 = vdwg.mxu0
    %v2237 = vadd.f32 %v2229, %v122
    %v2238 = vadd.f32 %v2234, %v122
    %v2239 = vmax.f32 %v2237, 0.0
    %v2240 = vmax.f32 %v2238, 0.0
    %2243 = vrot.lane.b32.xlu0 %v2239, 96
    %v2244 = vpop.permute.xlu0 %2243
    %2245 = vrot.lane.b32.xlu0 %v2240, 96
    %v2246 = vpop.permute.xlu0 %2245
    %v2247 = vsel %vm135, %v2244, 0
    %v2249 = vsel %vm135, %v2246, 0
    %2251 = vmatprep.subr.mxu0 0.0
    %2252 = vmatpush1.msra.mxu0 %v113
    %2253 = vmatprep.subr.mxu0 0.0
    %2254 = vmatpush1.msra.mxu0 %v114
    %2255 = vmatprep.subr.mxu0 0.0
    %2256 = vmatpush1.msra.mxu0 %v115
    %2257 = vmatprep.subr.mxu0 0.0
    %2258 = vmatpush1.msra.mxu0 %v116
    %2259 = vmatprep.subr.mxu0 0.0
    %2260 = vmatpush1.msra.mxu0 0.0
    %2261 = vmatprep.subr.mxu0 0.0
    %2262 = vmatpush1.msra.mxu0 0.0
    %2263 = vmatprep.subr.mxu0 0.0
    %2264 = vmatpush1.msra.mxu0 0.0
    %2265 = vmatprep.subr.mxu0 0.0
    %2266 = vmatpush1.msra.mxu0 0.0
    %2267 = vmatprep.subr.mxu0 0.0
    %2268 = vmatpush1.msra.mxu0 0.0
    %2269 = vmatprep.subr.mxu0 0.0
    %2270 = vmatpush1.msra.mxu0 0.0
    %2271 = vmatprep.subr.mxu0 0.0
    %2272 = vmatpush1.msra.mxu0 0.0
    %2273 = vmatprep.subr.mxu0 0.0
    %2274 = vmatpush1.msra.mxu0 0.0
    %2275 = vmatprep.subr.mxu0 0.0
    %2276 = vmatpush1.msra.mxu0 0.0
    %2277 = vmatprep.subr.mxu0 0.0
    %2278 = vmatpush1.msra.mxu0 0.0
    %2279 = vmatprep.subr.mxu0 0.0
    %2280 = vmatpush1.msra.mxu0 0.0
    %2281 = vmatprep.subr.mxu0 0.0
    %2282 = vmatpush1.msra.mxu0 0.0
    %2283 = vmatprep.subr.mxu0 0.0
    %2284 = vmatpush1.msra.mxu0 0.0
    %2285 = vmatprep.subr.mxu0 0.0
    %2286 = vmatpush1.msra.mxu0 0.0
    %2287 = vmatprep.subr.mxu0 0.0
    %2288 = vmatpush1.msra.mxu0 0.0
    %2289 = vmatprep.subr.mxu0 0.0
    %2290 = vmatpush1.msra.mxu0 0.0
    %2291 = vmatprep.subr.mxu0 0.0
    %2292 = vmatpush1.msra.mxu0 0.0
    %2293 = vmatprep.subr.mxu0 0.0
    %2294 = vmatpush1.msra.mxu0 0.0
    %2295 = vmatprep.subr.mxu0 0.0
    %2296 = vmatpush1.msra.mxu0 0.0
    %2297 = vmatprep.subr.mxu0 0.0
    %2298 = vmatpush1.msra.mxu0 0.0
    %2299 = vmatprep.subr.mxu0 0.0
    %2300 = vmatpush1.msra.mxu0 0.0
    %2301 = vmatprep.subr.mxu0 0.0
    %2302 = vmatpush1.msra.mxu0 0.0
    %2303 = vmatprep.subr.mxu0 0.0
    %2304 = vmatpush1.msra.mxu0 0.0
    %2305 = vmatprep.subr.mxu0 0.0
    %2306 = vmatpush1.msra.mxu0 0.0
    %2307 = vmatprep.subr.mxu0 0.0
    %2308 = vmatpush1.msra.mxu0 0.0
    %2309 = vmatprep.subr.mxu0 0.0
    %2310 = vmatpush1.msra.mxu0 0.0
    %2311 = vmatprep.subr.mxu0 0.0
    %2312 = vmatpush1.msra.mxu0 0.0
    %2313 = vmatprep.subr.mxu0 0.0
    %2314 = vmatpush1.msra.mxu0 0.0
    %2315 = vmatprep.mubr.f32.mxu0 0.0
    %2316 = vmatmul.mubr.f32.gmra.mrb[0].mxu0 %v2247
    %v2317 = vpop.f32.mrb[0].mxu0
    %v2318 = vadd.f32 %v129, %v2317
    %v2319 = vpop.f32.mrb[0].mxu0
    %2320 = vmatprep.mubr.f32.mxu0 0.0
    %2321 = vmatmul.mubr.f32.gmra.mrb[0].mxu0 %v2249
    %v2322 = vpop.f32.mrb[0].mxu0
    %v2323 = vadd.f32 %v129, %v2322
    %v2324 = vpop.f32.mrb[0].mxu0
    %2325 = vdwg.mxu0
    %2326 = vmax.xlane.f32.xlu0 %v2318
    %v2327 = vpop.xlane.xlu0 %2326
    %2328 = vmax.xlane.f32.xlu0 %v2323
    %v2329 = vpop.xlane.xlu0 %2328
    %v2330 = vsub.f32 %v2318, %v2327
    %v2331 = vsub.f32 %v2323, %v2329
    %v2332 = vmul.f32 %v2330, 1.442695
    %v2333 = vpow.pop %v2332
    %v2334 = vmul.f32 %v2331, 1.442695
    %v2335 = vpow.pop %v2334
    %2336 = vadd.xlane.f32.xlu0 %v2333
    %v2337 = vpop.xlane.xlu0 %2336
    %2338 = vadd.xlane.f32.xlu0 %v2335
    %v2339 = vpop.xlane.xlu0 %2338
    %v2340 = vlog2.pop %v2337
    %v2341 = vmul.f32 %v2340, 0.6931472
    %v2342 = vlog2.pop %v2339
    %v2343 = vmul.f32 %v2342, 0.6931472
    %v2344 = vsub.f32 %v2330, %v2341
    %v2345 = vsub.f32 %v2331, %v2343
    %s2346 = scalar_lea.vmem [#allocation11], 112
    %2347 = vst [vmem:[%s2346] sm:$0xff] %v2344
    %2348 = vst [vmem:[%s2346 + $0x8] sm:$0xff] %v2345
    %s2349 = scalar_lea.vmem [#allocation2], 128
    %v2350 = vld [vmem:[%s2349] sm:$0xff]
    %v2351 = vld [vmem:[%s2349 + $0x8] sm:$0xff]
    %v2353 = vsel %vm135, %v2237, 0
    %v2356 = vsel %vm135, %v2238, 0
    %2358 = vmatprep.subr.mxu0 0.0
    %2359 = vmatpush1.msra.mxu0 %v109
    %2360 = vmatprep.subr.mxu0 0.0
    %2361 = vmatpush1.msra.mxu0 %v110
    %2362 = vmatprep.subr.mxu0 0.0
    %2363 = vmatpush1.msra.mxu0 %v111
    %2364 = vmatprep.subr.mxu0 0.0
    %2365 = vmatpush1.msra.mxu0 %v112
    %2366 = vmatprep.subr.mxu0 0.0
    %2367 = vmatpush1.msra.mxu0 0.0
    %2368 = vmatprep.subr.mxu0 0.0
    %2369 = vmatpush1.msra.mxu0 0.0
    %2370 = vmatprep.subr.mxu0 0.0
    %2371 = vmatpush1.msra.mxu0 0.0
    %2372 = vmatprep.subr.mxu0 0.0
    %2373 = vmatpush1.msra.mxu0 0.0
    %2374 = vmatprep.subr.mxu0 0.0
    %2375 = vmatpush1.msra.mxu0 0.0
    %2376 = vmatprep.subr.mxu0 0.0
    %2377 = vmatpush1.msra.mxu0 0.0
    %2378 = vmatprep.subr.mxu0 0.0
    %2379 = vmatpush1.msra.mxu0 0.0
    %2380 = vmatprep.subr.mxu0 0.0
    %2381 = vmatpush1.msra.mxu0 0.0
    %2382 = vmatprep.subr.mxu0 0.0
    %2383 = vmatpush1.msra.mxu0 0.0
    %2384 = vmatprep.subr.mxu0 0.0
    %2385 = vmatpush1.msra.mxu0 0.0
    %2386 = vmatprep.subr.mxu0 0.0
    %2387 = vmatpush1.msra.mxu0 0.0
    %2388 = vmatprep.subr.mxu0 0.0
    %2389 = vmatpush1.msra.mxu0 0.0
    %2390 = vmatprep.subr.mxu0 0.0
    %2391 = vmatpush1.msra.mxu0 0.0
    %2392 = vmatprep.subr.mxu0 0.0
    %2393 = vmatpush1.msra.mxu0 0.0
    %2394 = vmatprep.subr.mxu0 0.0
    %2395 = vmatpush1.msra.mxu0 0.0
    %2396 = vmatprep.subr.mxu0 0.0
    %2397 = vmatpush1.msra.mxu0 0.0
    %2398 = vmatprep.subr.mxu0 0.0
    %2399 = vmatpush1.msra.mxu0 0.0
    %2400 = vmatprep.subr.mxu0 0.0
    %2401 = vmatpush1.msra.mxu0 0.0
    %2402 = vmatprep.subr.mxu0 0.0
    %2403 = vmatpush1.msra.mxu0 0.0
    %2404 = vmatprep.subr.mxu0 0.0
    %2405 = vmatpush1.msra.mxu0 0.0
    %2406 = vmatprep.subr.mxu0 0.0
    %2407 = vmatpush1.msra.mxu0 0.0
    %2408 = vmatprep.subr.mxu0 0.0
    %2409 = vmatpush1.msra.mxu0 0.0
    %2410 = vmatprep.subr.mxu0 0.0
    %2411 = vmatpush1.msra.mxu0 0.0
    %2412 = vmatprep.subr.mxu0 0.0
    %2413 = vmatpush1.msra.mxu0 0.0
    %2414 = vmatprep.subr.mxu0 0.0
    %2415 = vmatpush1.msra.mxu0 0.0
    %2416 = vmatprep.subr.mxu0 0.0
    %2417 = vmatpush1.msra.mxu0 0.0
    %2418 = vmatprep.subr.mxu0 0.0
    %2419 = vmatpush1.msra.mxu0 0.0
    %2420 = vmatprep.subr.mxu0 0.0
    %2421 = vmatpush1.msra.mxu0 0.0
    %2422 = vmatprep.mubr.f32.mxu0 0.0
    %2423 = vmatmul.mubr.f32.gmra.mrb[0].mxu0 %v2353
    %v2424 = vpop.f32.mrb[0].mxu0
    %v2425 = vadd.f32 0.0, %v2424
    %v2426 = vpop.f32.mrb[0].mxu0
    %2427 = vmatprep.mubr.f32.mxu0 0.0
    %2428 = vmatmul.mubr.f32.gmra.mrb[0].mxu0 %v2356
    %v2429 = vpop.f32.mrb[0].mxu0
    %v2430 = vadd.f32 0.0, %v2429
    %v2431 = vpop.f32.mrb[0].mxu0
    %2432 = vdwg.mxu0
    %v2434 = vsel %vm217, %v2350, 0
    %v2437 = vsel %vm217, %v2351, 0
    %2439 = vmatprep.subr.mxu0 0.0
    %2440 = vmatpush1.msra.mxu0 %v107
    %2441 = vmatprep.subr.mxu0 0.0
    %2442 = vmatpush1.msra.mxu0 %v108
    %2443 = vmatprep.subr.mxu0 0.0
    %2444 = vmatpush1.msra.mxu0 0.0
    %2445 = vmatprep.subr.mxu0 0.0
    %2446 = vmatpush1.msra.mxu0 0.0
    %2447 = vmatprep.subr.mxu0 0.0
    %2448 = vmatpush1.msra.mxu0 0.0
    %2449 = vmatprep.subr.mxu0 0.0
    %2450 = vmatpush1.msra.mxu0 0.0
    %2451 = vmatprep.subr.mxu0 0.0
    %2452 = vmatpush1.msra.mxu0 0.0
    %2453 = vmatprep.subr.mxu0 0.0
    %2454 = vmatpush1.msra.mxu0 0.0
    %2455 = vmatprep.subr.mxu0 0.0
    %2456 = vmatpush1.msra.mxu0 0.0
    %2457 = vmatprep.subr.mxu0 0.0
    %2458 = vmatpush1.msra.mxu0 0.0
    %2459 = vmatprep.subr.mxu0 0.0
    %2460 = vmatpush1.msra.mxu0 0.0
    %2461 = vmatprep.subr.mxu0 0.0
    %2462 = vmatpush1.msra.mxu0 0.0
    %2463 = vmatprep.subr.mxu0 0.0
    %2464 = vmatpush1.msra.mxu0 0.0
    %2465 = vmatprep.subr.mxu0 0.0
    %2466 = vmatpush1.msra.mxu0 0.0
    %2467 = vmatprep.subr.mxu0 0.0
    %2468 = vmatpush1.msra.mxu0 0.0
    %2469 = vmatprep.subr.mxu0 0.0
    %2470 = vmatpush1.msra.mxu0 0.0
    %2471 = vmatprep.subr.mxu0 0.0
    %2472 = vmatpush1.msra.mxu0 0.0
    %2473 = vmatprep.subr.mxu0 0.0
    %2474 = vmatpush1.msra.mxu0 0.0
    %2475 = vmatprep.subr.mxu0 0.0
    %2476 = vmatpush1.msra.mxu0 0.0
    %2477 = vmatprep.subr.mxu0 0.0
    %2478 = vmatpush1.msra.mxu0 0.0
    %2479 = vmatprep.subr.mxu0 0.0
    %2480 = vmatpush1.msra.mxu0 0.0
    %2481 = vmatprep.subr.mxu0 0.0
    %2482 = vmatpush1.msra.mxu0 0.0
    %2483 = vmatprep.subr.mxu0 0.0
    %2484 = vmatpush1.msra.mxu0 0.0
    %2485 = vmatprep.subr.mxu0 0.0
    %2486 = vmatpush1.msra.mxu0 0.0
    %2487 = vmatprep.subr.mxu0 0.0
    %2488 = vmatpush1.msra.mxu0 0.0
    %2489 = vmatprep.subr.mxu0 0.0
    %2490 = vmatpush1.msra.mxu0 0.0
    %2491 = vmatprep.subr.mxu0 0.0
    %2492 = vmatpush1.msra.mxu0 0.0
    %2493 = vmatprep.subr.mxu0 0.0
    %2494 = vmatpush1.msra.mxu0 0.0
    %2495 = vmatprep.subr.mxu0 0.0
    %2496 = vmatpush1.msra.mxu0 0.0
    %2497 = vmatprep.subr.mxu0 0.0
    %2498 = vmatpush1.msra.mxu0 0.0
    %2499 = vmatprep.subr.mxu0 0.0
    %2500 = vmatpush1.msra.mxu0 0.0
    %2501 = vmatprep.subr.mxu0 0.0
    %2502 = vmatpush1.msra.mxu0 0.0
    %2503 = vmatprep.mubr.f32.mxu0 0.0
    %2504 = vmatmul.mubr.f32.gmra.mrb[0].mxu0 %v2434
    %v2505 = vpop.f32.mrb[0].mxu0
    %v2506 = vadd.f32 %v2425, %v2505
    %v2507 = vpop.f32.mrb[0].mxu0
    %2508 = vmatprep.mubr.f32.mxu0 0.0
    %2509 = vmatmul.mubr.f32.gmra.mrb[0].mxu0 %v2437
    %v2510 = vpop.f32.mrb[0].mxu0
    %v2511 = vadd.f32 %v2430, %v2510
    %v2512 = vpop.f32.mrb[0].mxu0
    %2513 = vdwg.mxu0
    %v2514 = vadd.f32 %v2506, %v122
    %v2515 = vadd.f32 %v2511, %v122
    %v2516 = vmax.f32 %v2514, 0.0
    %v2517 = vmax.f32 %v2515, 0.0
    %2520 = vrot.lane.b32.xlu0 %v2516, 96
    %v2521 = vpop.permute.xlu0 %2520
    %2522 = vrot.lane.b32.xlu0 %v2517, 96
    %v2523 = vpop.permute.xlu0 %2522
    %v2524 = vsel %vm135, %v2521, 0
    %v2526 = vsel %vm135, %v2523, 0
    %2528 = vmatprep.subr.mxu0 0.0
    %2529 = vmatpush1.msra.mxu0 %v113
    %2530 = vmatprep.subr.mxu0 0.0
    %2531 = vmatpush1.msra.mxu0 %v114
    %2532 = vmatprep.subr.mxu0 0.0
    %2533 = vmatpush1.msra.mxu0 %v115
    %2534 = vmatprep.subr.mxu0 0.0
    %2535 = vmatpush1.msra.mxu0 %v116
    %2536 = vmatprep.subr.mxu0 0.0
    %2537 = vmatpush1.msra.mxu0 0.0
    %2538 = vmatprep.subr.mxu0 0.0
    %2539 = vmatpush1.msra.mxu0 0.0
    %2540 = vmatprep.subr.mxu0 0.0
    %2541 = vmatpush1.msra.mxu0 0.0
    %2542 = vmatprep.subr.mxu0 0.0
    %2543 = vmatpush1.msra.mxu0 0.0
    %2544 = vmatprep.subr.mxu0 0.0
    %2545 = vmatpush1.msra.mxu0 0.0
    %2546 = vmatprep.subr.mxu0 0.0
    %2547 = vmatpush1.msra.mxu0 0.0
    %2548 = vmatprep.subr.mxu0 0.0
    %2549 = vmatpush1.msra.mxu0 0.0
    %2550 = vmatprep.subr.mxu0 0.0
    %2551 = vmatpush1.msra.mxu0 0.0
    %2552 = vmatprep.subr.mxu0 0.0
    %2553 = vmatpush1.msra.mxu0 0.0
    %2554 = vmatprep.subr.mxu0 0.0
    %2555 = vmatpush1.msra.mxu0 0.0
    %2556 = vmatprep.subr.mxu0 0.0
    %2557 = vmatpush1.msra.mxu0 0.0
    %2558 = vmatprep.subr.mxu0 0.0
    %2559 = vmatpush1.msra.mxu0 0.0
    %2560 = vmatprep.subr.mxu0 0.0
    %2561 = vmatpush1.msra.mxu0 0.0
    %2562 = vmatprep.subr.mxu0 0.0
    %2563 = vmatpush1.msra.mxu0 0.0
    %2564 = vmatprep.subr.mxu0 0.0
    %2565 = vmatpush1.msra.mxu0 0.0
    %2566 = vmatprep.subr.mxu0 0.0
    %2567 = vmatpush1.msra.mxu0 0.0
    %2568 = vmatprep.subr.mxu0 0.0
    %2569 = vmatpush1.msra.mxu0 0.0
    %2570 = vmatprep.subr.mxu0 0.0
    %2571 = vmatpush1.msra.mxu0 0.0
    %2572 = vmatprep.subr.mxu0 0.0
    %2573 = vmatpush1.msra.mxu0 0.0
    %2574 = vmatprep.subr.mxu0 0.0
    %2575 = vmatpush1.msra.mxu0 0.0
    %2576 = vmatprep.subr.mxu0 0.0
    %2577 = vmatpush1.msra.mxu0 0.0
    %2578 = vmatprep.subr.mxu0 0.0
    %2579 = vmatpush1.msra.mxu0 0.0
    %2580 = vmatprep.subr.mxu0 0.0
    %2581 = vmatpush1.msra.mxu0 0.0
    %2582 = vmatprep.subr.mxu0 0.0
    %2583 = vmatpush1.msra.mxu0 0.0
    %2584 = vmatprep.subr.mxu0 0.0
    %2585 = vmatpush1.msra.mxu0 0.0
    %2586 = vmatprep.subr.mxu0 0.0
    %2587 = vmatpush1.msra.mxu0 0.0
    %2588 = vmatprep.subr.mxu0 0.0
    %2589 = vmatpush1.msra.mxu0 0.0
    %2590 = vmatprep.subr.mxu0 0.0
    %2591 = vmatpush1.msra.mxu0 0.0
    %2592 = vmatprep.mubr.f32.mxu0 0.0
    %2593 = vmatmul.mubr.f32.gmra.mrb[0].mxu0 %v2524
    %v2594 = vpop.f32.mrb[0].mxu0
    %v2595 = vadd.f32 %v129, %v2594
    %v2596 = vpop.f32.mrb[0].mxu0
    %2597 = vmatprep.mubr.f32.mxu0 0.0
    %2598 = vmatmul.mubr.f32.gmra.mrb[0].mxu0 %v2526
    %v2599 = vpop.f32.mrb[0].mxu0
    %v2600 = vadd.f32 %v129, %v2599
    %v2601 = vpop.f32.mrb[0].mxu0
    %2602 = vdwg.mxu0
    %2603 = vmax.xlane.f32.xlu0 %v2595
    %v2604 = vpop.xlane.xlu0 %2603
    %2605 = vmax.xlane.f32.xlu0 %v2600
    %v2606 = vpop.xlane.xlu0 %2605
    %v2607 = vsub.f32 %v2595, %v2604
    %v2608 = vsub.f32 %v2600, %v2606
    %v2609 = vmul.f32 %v2607, 1.442695
    %v2610 = vpow.pop %v2609
    %v2611 = vmul.f32 %v2608, 1.442695
    %v2612 = vpow.pop %v2611
    %2613 = vadd.xlane.f32.xlu0 %v2610
    %v2614 = vpop.xlane.xlu0 %2613
    %2615 = vadd.xlane.f32.xlu0 %v2612
    %v2616 = vpop.xlane.xlu0 %2615
    %v2617 = vlog2.pop %v2614
    %v2618 = vmul.f32 %v2617, 0.6931472
    %v2619 = vlog2.pop %v2616
    %v2620 = vmul.f32 %v2619, 0.6931472
    %v2621 = vsub.f32 %v2607, %v2618
    %v2622 = vsub.f32 %v2608, %v2620
    %s2623 = scalar_lea.vmem [#allocation11], 128
    %2624 = vst [vmem:[%s2623] sm:$0xff] %v2621
    %2625 = vst [vmem:[%s2623 + $0x8] sm:$0xff] %v2622
    %s2626 = scalar_lea.vmem [#allocation2], 144
    %v2627 = vld [vmem:[%s2626] sm:$0xff]
    %v2628 = vld [vmem:[%s2626 + $0x8] sm:$0xff]
    %v2630 = vsel %vm135, %v2514, 0
    %v2633 = vsel %vm135, %v2515, 0
    %2635 = vmatprep.subr.mxu0 0.0
    %2636 = vmatpush1.msra.mxu0 %v109
    %2637 = vmatprep.subr.mxu0 0.0
    %2638 = vmatpush1.msra.mxu0 %v110
    %2639 = vmatprep.subr.mxu0 0.0
    %2640 = vmatpush1.msra.mxu0 %v111
    %2641 = vmatprep.subr.mxu0 0.0
    %2642 = vmatpush1.msra.mxu0 %v112
    %2643 = vmatprep.subr.mxu0 0.0
    %2644 = vmatpush1.msra.mxu0 0.0
    %2645 = vmatprep.subr.mxu0 0.0
    %2646 = vmatpush1.msra.mxu0 0.0
    %2647 = vmatprep.subr.mxu0 0.0
    %2648 = vmatpush1.msra.mxu0 0.0
    %2649 = vmatprep.subr.mxu0 0.0
    %2650 = vmatpush1.msra.mxu0 0.0
    %2651 = vmatprep.subr.mxu0 0.0
    %2652 = vmatpush1.msra.mxu0 0.0
    %2653 = vmatprep.subr.mxu0 0.0
    %2654 = vmatpush1.msra.mxu0 0.0
    %2655 = vmatprep.subr.mxu0 0.0
    %2656 = vmatpush1.msra.mxu0 0.0
    %2657 = vmatprep.subr.mxu0 0.0
    %2658 = vmatpush1.msra.mxu0 0.0
    %2659 = vmatprep.subr.mxu0 0.0
    %2660 = vmatpush1.msra.mxu0 0.0
    %2661 = vmatprep.subr.mxu0 0.0
    %2662 = vmatpush1.msra.mxu0 0.0
    %2663 = vmatprep.subr.mxu0 0.0
    %2664 = vmatpush1.msra.mxu0 0.0
    %2665 = vmatprep.subr.mxu0 0.0
    %2666 = vmatpush1.msra.mxu0 0.0
    %2667 = vmatprep.subr.mxu0 0.0
    %2668 = vmatpush1.msra.mxu0 0.0
    %2669 = vmatprep.subr.mxu0 0.0
    %2670 = vmatpush1.msra.mxu0 0.0
    %2671 = vmatprep.subr.mxu0 0.0
    %2672 = vmatpush1.msra.mxu0 0.0
    %2673 = vmatprep.subr.mxu0 0.0
    %2674 = vmatpush1.msra.mxu0 0.0
    %2675 = vmatprep.subr.mxu0 0.0
    %2676 = vmatpush1.msra.mxu0 0.0
    %2677 = vmatprep.subr.mxu0 0.0
    %2678 = vmatpush1.msra.mxu0 0.0
    %2679 = vmatprep.subr.mxu0 0.0
    %2680 = vmatpush1.msra.mxu0 0.0
    %2681 = vmatprep.subr.mxu0 0.0
    %2682 = vmatpush1.msra.mxu0 0.0
    %2683 = vmatprep.subr.mxu0 0.0
    %2684 = vmatpush1.msra.mxu0 0.0
    %2685 = vmatprep.subr.mxu0 0.0
    %2686 = vmatpush1.msra.mxu0 0.0
    %2687 = vmatprep.subr.mxu0 0.0
    %2688 = vmatpush1.msra.mxu0 0.0
    %2689 = vmatprep.subr.mxu0 0.0
    %2690 = vmatpush1.msra.mxu0 0.0
    %2691 = vmatprep.subr.mxu0 0.0
    %2692 = vmatpush1.msra.mxu0 0.0
    %2693 = vmatprep.subr.mxu0 0.0
    %2694 = vmatpush1.msra.mxu0 0.0
    %2695 = vmatprep.subr.mxu0 0.0
    %2696 = vmatpush1.msra.mxu0 0.0
    %2697 = vmatprep.subr.mxu0 0.0
    %2698 = vmatpush1.msra.mxu0 0.0
    %2699 = vmatprep.mubr.f32.mxu0 0.0
    %2700 = vmatmul.mubr.f32.gmra.mrb[0].mxu0 %v2630
    %v2701 = vpop.f32.mrb[0].mxu0
    %v2702 = vadd.f32 0.0, %v2701
    %v2703 = vpop.f32.mrb[0].mxu0
    %2704 = vmatprep.mubr.f32.mxu0 0.0
    %2705 = vmatmul.mubr.f32.gmra.mrb[0].mxu0 %v2633
    %v2706 = vpop.f32.mrb[0].mxu0
    %v2707 = vadd.f32 0.0, %v2706
    %v2708 = vpop.f32.mrb[0].mxu0
    %2709 = vdwg.mxu0
    %v2711 = vsel %vm217, %v2627, 0
    %v2714 = vsel %vm217, %v2628, 0
    %2716 = vmatprep.subr.mxu0 0.0
    %2717 = vmatpush1.msra.mxu0 %v107
    %2718 = vmatprep.subr.mxu0 0.0
    %2719 = vmatpush1.msra.mxu0 %v108
    %2720 = vmatprep.subr.mxu0 0.0
    %2721 = vmatpush1.msra.mxu0 0.0
    %2722 = vmatprep.subr.mxu0 0.0
    %2723 = vmatpush1.msra.mxu0 0.0
    %2724 = vmatprep.subr.mxu0 0.0
    %2725 = vmatpush1.msra.mxu0 0.0
    %2726 = vmatprep.subr.mxu0 0.0
    %2727 = vmatpush1.msra.mxu0 0.0
    %2728 = vmatprep.subr.mxu0 0.0
    %2729 = vmatpush1.msra.mxu0 0.0
    %2730 = vmatprep.subr.mxu0 0.0
    %2731 = vmatpush1.msra.mxu0 0.0
    %2732 = vmatprep.subr.mxu0 0.0
    %2733 = vmatpush1.msra.mxu0 0.0
    %2734 = vmatprep.subr.mxu0 0.0
    %2735 = vmatpush1.msra.mxu0 0.0
    %2736 = vmatprep.subr.mxu0 0.0
    %2737 = vmatpush1.msra.mxu0 0.0
    %2738 = vmatprep.subr.mxu0 0.0
    %2739 = vmatpush1.msra.mxu0 0.0
    %2740 = vmatprep.subr.mxu0 0.0
    %2741 = vmatpush1.msra.mxu0 0.0
    %2742 = vmatprep.subr.mxu0 0.0
    %2743 = vmatpush1.msra.mxu0 0.0
    %2744 = vmatprep.subr.mxu0 0.0
    %2745 = vmatpush1.msra.mxu0 0.0
    %2746 = vmatprep.subr.mxu0 0.0
    %2747 = vmatpush1.msra.mxu0 0.0
    %2748 = vmatprep.subr.mxu0 0.0
    %2749 = vmatpush1.msra.mxu0 0.0
    %2750 = vmatprep.subr.mxu0 0.0
    %2751 = vmatpush1.msra.mxu0 0.0
    %2752 = vmatprep.subr.mxu0 0.0
    %2753 = vmatpush1.msra.mxu0 0.0
    %2754 = vmatprep.subr.mxu0 0.0
    %2755 = vmatpush1.msra.mxu0 0.0
    %2756 = vmatprep.subr.mxu0 0.0
    %2757 = vmatpush1.msra.mxu0 0.0
    %2758 = vmatprep.subr.mxu0 0.0
    %2759 = vmatpush1.msra.mxu0 0.0
    %2760 = vmatprep.subr.mxu0 0.0
    %2761 = vmatpush1.msra.mxu0 0.0
    %2762 = vmatprep.subr.mxu0 0.0
    %2763 = vmatpush1.msra.mxu0 0.0
    %2764 = vmatprep.subr.mxu0 0.0
    %2765 = vmatpush1.msra.mxu0 0.0
    %2766 = vmatprep.subr.mxu0 0.0
    %2767 = vmatpush1.msra.mxu0 0.0
    %2768 = vmatprep.subr.mxu0 0.0
    %2769 = vmatpush1.msra.mxu0 0.0
    %2770 = vmatprep.subr.mxu0 0.0
    %2771 = vmatpush1.msra.mxu0 0.0
    %2772 = vmatprep.subr.mxu0 0.0
    %2773 = vmatpush1.msra.mxu0 0.0
    %2774 = vmatprep.subr.mxu0 0.0
    %2775 = vmatpush1.msra.mxu0 0.0
    %2776 = vmatprep.subr.mxu0 0.0
    %2777 = vmatpush1.msra.mxu0 0.0
    %2778 = vmatprep.subr.mxu0 0.0
    %2779 = vmatpush1.msra.mxu0 0.0
    %2780 = vmatprep.mubr.f32.mxu0 0.0
    %2781 = vmatmul.mubr.f32.gmra.mrb[0].mxu0 %v2711
    %v2782 = vpop.f32.mrb[0].mxu0
    %v2783 = vadd.f32 %v2702, %v2782
    %v2784 = vpop.f32.mrb[0].mxu0
    %2785 = vmatprep.mubr.f32.mxu0 0.0
    %2786 = vmatmul.mubr.f32.gmra.mrb[0].mxu0 %v2714
    %v2787 = vpop.f32.mrb[0].mxu0
    %v2788 = vadd.f32 %v2707, %v2787
    %v2789 = vpop.f32.mrb[0].mxu0
    %2790 = vdwg.mxu0
    %v2791 = vadd.f32 %v2783, %v122
    %v2792 = vadd.f32 %v2788, %v122
    %v2793 = vmax.f32 %v2791, 0.0
    %v2794 = vmax.f32 %v2792, 0.0
    %2797 = vrot.lane.b32.xlu0 %v2793, 96
    %v2798 = vpop.permute.xlu0 %2797
    %2799 = vrot.lane.b32.xlu0 %v2794, 96
    %v2800 = vpop.permute.xlu0 %2799
    %v2801 = vsel %vm135, %v2798, 0
    %v2803 = vsel %vm135, %v2800, 0
    %2805 = vmatprep.subr.mxu0 0.0
    %2806 = vmatpush1.msra.mxu0 %v113
    %2807 = vmatprep.subr.mxu0 0.0
    %2808 = vmatpush1.msra.mxu0 %v114
    %2809 = vmatprep.subr.mxu0 0.0
    %2810 = vmatpush1.msra.mxu0 %v115
    %2811 = vmatprep.subr.mxu0 0.0
    %2812 = vmatpush1.msra.mxu0 %v116
    %2813 = vmatprep.subr.mxu0 0.0
    %2814 = vmatpush1.msra.mxu0 0.0
    %2815 = vmatprep.subr.mxu0 0.0
    %2816 = vmatpush1.msra.mxu0 0.0
    %2817 = vmatprep.subr.mxu0 0.0
    %2818 = vmatpush1.msra.mxu0 0.0
    %2819 = vmatprep.subr.mxu0 0.0
    %2820 = vmatpush1.msra.mxu0 0.0
    %2821 = vmatprep.subr.mxu0 0.0
    %2822 = vmatpush1.msra.mxu0 0.0
    %2823 = vmatprep.subr.mxu0 0.0
    %2824 = vmatpush1.msra.mxu0 0.0
    %2825 = vmatprep.subr.mxu0 0.0
    %2826 = vmatpush1.msra.mxu0 0.0
    %2827 = vmatprep.subr.mxu0 0.0
    %2828 = vmatpush1.msra.mxu0 0.0
    %2829 = vmatprep.subr.mxu0 0.0
    %2830 = vmatpush1.msra.mxu0 0.0
    %2831 = vmatprep.subr.mxu0 0.0
    %2832 = vmatpush1.msra.mxu0 0.0
    %2833 = vmatprep.subr.mxu0 0.0
    %2834 = vmatpush1.msra.mxu0 0.0
    %2835 = vmatprep.subr.mxu0 0.0
    %2836 = vmatpush1.msra.mxu0 0.0
    %2837 = vmatprep.subr.mxu0 0.0
    %2838 = vmatpush1.msra.mxu0 0.0
    %2839 = vmatprep.subr.mxu0 0.0
    %2840 = vmatpush1.msra.mxu0 0.0
    %2841 = vmatprep.subr.mxu0 0.0
    %2842 = vmatpush1.msra.mxu0 0.0
    %2843 = vmatprep.subr.mxu0 0.0
    %2844 = vmatpush1.msra.mxu0 0.0
    %2845 = vmatprep.subr.mxu0 0.0
    %2846 = vmatpush1.msra.mxu0 0.0
    %2847 = vmatprep.subr.mxu0 0.0
    %2848 = vmatpush1.msra.mxu0 0.0
    %2849 = vmatprep.subr.mxu0 0.0
    %2850 = vmatpush1.msra.mxu0 0.0
    %2851 = vmatprep.subr.mxu0 0.0
    %2852 = vmatpush1.msra.mxu0 0.0
    %2853 = vmatprep.subr.mxu0 0.0
    %2854 = vmatpush1.msra.mxu0 0.0
    %2855 = vmatprep.subr.mxu0 0.0
    %2856 = vmatpush1.msra.mxu0 0.0
    %2857 = vmatprep.subr.mxu0 0.0
    %2858 = vmatpush1.msra.mxu0 0.0
    %2859 = vmatprep.subr.mxu0 0.0
    %2860 = vmatpush1.msra.mxu0 0.0
    %2861 = vmatprep.subr.mxu0 0.0
    %2862 = vmatpush1.msra.mxu0 0.0
    %2863 = vmatprep.subr.mxu0 0.0
    %2864 = vmatpush1.msra.mxu0 0.0
    %2865 = vmatprep.subr.mxu0 0.0
    %2866 = vmatpush1.msra.mxu0 0.0
    %2867 = vmatprep.subr.mxu0 0.0
    %2868 = vmatpush1.msra.mxu0 0.0
    %2869 = vmatprep.mubr.f32.mxu0 0.0
    %2870 = vmatmul.mubr.f32.gmra.mrb[0].mxu0 %v2801
    %v2871 = vpop.f32.mrb[0].mxu0
    %v2872 = vadd.f32 %v129, %v2871
    %v2873 = vpop.f32.mrb[0].mxu0
    %2874 = vmatprep.mubr.f32.mxu0 0.0
    %2875 = vmatmul.mubr.f32.gmra.mrb[0].mxu0 %v2803
    %v2876 = vpop.f32.mrb[0].mxu0
    %v2877 = vadd.f32 %v129, %v2876
    %v2878 = vpop.f32.mrb[0].mxu0
    %2879 = vdwg.mxu0
    %2880 = vmax.xlane.f32.xlu0 %v2872
    %v2881 = vpop.xlane.xlu0 %2880
    %2882 = vmax.xlane.f32.xlu0 %v2877
    %v2883 = vpop.xlane.xlu0 %2882
    %v2884 = vsub.f32 %v2872, %v2881
    %v2885 = vsub.f32 %v2877, %v2883
    %v2886 = vmul.f32 %v2884, 1.442695
    %v2887 = vpow.pop %v2886
    %v2888 = vmul.f32 %v2885, 1.442695
    %v2889 = vpow.pop %v2888
    %2890 = vadd.xlane.f32.xlu0 %v2887
    %v2891 = vpop.xlane.xlu0 %2890
    %2892 = vadd.xlane.f32.xlu0 %v2889
    %v2893 = vpop.xlane.xlu0 %2892
    %v2894 = vlog2.pop %v2891
    %v2895 = vmul.f32 %v2894, 0.6931472
    %v2896 = vlog2.pop %v2893
    %v2897 = vmul.f32 %v2896, 0.6931472
    %v2898 = vsub.f32 %v2884, %v2895
    %v2899 = vsub.f32 %v2885, %v2897
    %s2900 = scalar_lea.vmem [#allocation11], 144
    %2901 = vst [vmem:[%s2900] sm:$0xff] %v2898
    %2902 = vst [vmem:[%s2900 + $0x8] sm:$0xff] %v2899
    %s2903 = scalar_lea.vmem [#allocation2], 160
    %v2904 = vld [vmem:[%s2903] sm:$0xff]
    %v2905 = vld [vmem:[%s2903 + $0x8] sm:$0xff]
    %v2907 = vsel %vm135, %v2791, 0
    %v2910 = vsel %vm135, %v2792, 0
    %2912 = vmatprep.subr.mxu0 0.0
    %2913 = vmatpush1.msra.mxu0 %v109
    %2914 = vmatprep.subr.mxu0 0.0
    %2915 = vmatpush1.msra.mxu0 %v110
    %2916 = vmatprep.subr.mxu0 0.0
    %2917 = vmatpush1.msra.mxu0 %v111
    %2918 = vmatprep.subr.mxu0 0.0
    %2919 = vmatpush1.msra.mxu0 %v112
    %2920 = vmatprep.subr.mxu0 0.0
    %2921 = vmatpush1.msra.mxu0 0.0
    %2922 = vmatprep.subr.mxu0 0.0
    %2923 = vmatpush1.msra.mxu0 0.0
    %2924 = vmatprep.subr.mxu0 0.0
    %2925 = vmatpush1.msra.mxu0 0.0
    %2926 = vmatprep.subr.mxu0 0.0
    %2927 = vmatpush1.msra.mxu0 0.0
    %2928 = vmatprep.subr.mxu0 0.0
    %2929 = vmatpush1.msra.mxu0 0.0
    %2930 = vmatprep.subr.mxu0 0.0
    %2931 = vmatpush1.msra.mxu0 0.0
    %2932 = vmatprep.subr.mxu0 0.0
    %2933 = vmatpush1.msra.mxu0 0.0
    %2934 = vmatprep.subr.mxu0 0.0
    %2935 = vmatpush1.msra.mxu0 0.0
    %2936 = vmatprep.subr.mxu0 0.0
    %2937 = vmatpush1.msra.mxu0 0.0
    %2938 = vmatprep.subr.mxu0 0.0
    %2939 = vmatpush1.msra.mxu0 0.0
    %2940 = vmatprep.subr.mxu0 0.0
    %2941 = vmatpush1.msra.mxu0 0.0
    %2942 = vmatprep.subr.mxu0 0.0
    %2943 = vmatpush1.msra.mxu0 0.0
    %2944 = vmatprep.subr.mxu0 0.0
    %2945 = vmatpush1.msra.mxu0 0.0
    %2946 = vmatprep.subr.mxu0 0.0
    %2947 = vmatpush1.msra.mxu0 0.0
    %2948 = vmatprep.subr.mxu0 0.0
    %2949 = vmatpush1.msra.mxu0 0.0
    %2950 = vmatprep.subr.mxu0 0.0
    %2951 = vmatpush1.msra.mxu0 0.0
    %2952 = vmatprep.subr.mxu0 0.0
    %2953 = vmatpush1.msra.mxu0 0.0
    %2954 = vmatprep.subr.mxu0 0.0
    %2955 = vmatpush1.msra.mxu0 0.0
    %2956 = vmatprep.subr.mxu0 0.0
    %2957 = vmatpush1.msra.mxu0 0.0
    %2958 = vmatprep.subr.mxu0 0.0
    %2959 = vmatpush1.msra.mxu0 0.0
    %2960 = vmatprep.subr.mxu0 0.0
    %2961 = vmatpush1.msra.mxu0 0.0
    %2962 = vmatprep.subr.mxu0 0.0
    %2963 = vmatpush1.msra.mxu0 0.0
    %2964 = vmatprep.subr.mxu0 0.0
    %2965 = vmatpush1.msra.mxu0 0.0
    %2966 = vmatprep.subr.mxu0 0.0
    %2967 = vmatpush1.msra.mxu0 0.0
    %2968 = vmatprep.subr.mxu0 0.0
    %2969 = vmatpush1.msra.mxu0 0.0
    %2970 = vmatprep.subr.mxu0 0.0
    %2971 = vmatpush1.msra.mxu0 0.0
    %2972 = vmatprep.subr.mxu0 0.0
    %2973 = vmatpush1.msra.mxu0 0.0
    %2974 = vmatprep.subr.mxu0 0.0
    %2975 = vmatpush1.msra.mxu0 0.0
    %2976 = vmatprep.mubr.f32.mxu0 0.0
    %2977 = vmatmul.mubr.f32.gmra.mrb[0].mxu0 %v2907
    %v2978 = vpop.f32.mrb[0].mxu0
    %v2979 = vadd.f32 0.0, %v2978
    %v2980 = vpop.f32.mrb[0].mxu0
    %2981 = vmatprep.mubr.f32.mxu0 0.0
    %2982 = vmatmul.mubr.f32.gmra.mrb[0].mxu0 %v2910
    %v2983 = vpop.f32.mrb[0].mxu0
    %v2984 = vadd.f32 0.0, %v2983
    %v2985 = vpop.f32.mrb[0].mxu0
    %2986 = vdwg.mxu0
    %v2988 = vsel %vm217, %v2904, 0
    %v2991 = vsel %vm217, %v2905, 0
    %2993 = vmatprep.subr.mxu0 0.0
    %2994 = vmatpush1.msra.mxu0 %v107
    %2995 = vmatprep.subr.mxu0 0.0
    %2996 = vmatpush1.msra.mxu0 %v108
    %2997 = vmatprep.subr.mxu0 0.0
    %2998 = vmatpush1.msra.mxu0 0.0
    %2999 = vmatprep.subr.mxu0 0.0
    %3000 = vmatpush1.msra.mxu0 0.0
    %3001 = vmatprep.subr.mxu0 0.0
    %3002 = vmatpush1.msra.mxu0 0.0
    %3003 = vmatprep.subr.mxu0 0.0
    %3004 = vmatpush1.msra.mxu0 0.0
    %3005 = vmatprep.subr.mxu0 0.0
    %3006 = vmatpush1.msra.mxu0 0.0
    %3007 = vmatprep.subr.mxu0 0.0
    %3008 = vmatpush1.msra.mxu0 0.0
    %3009 = vmatprep.subr.mxu0 0.0
    %3010 = vmatpush1.msra.mxu0 0.0
    %3011 = vmatprep.subr.mxu0 0.0
    %3012 = vmatpush1.msra.mxu0 0.0
    %3013 = vmatprep.subr.mxu0 0.0
    %3014 = vmatpush1.msra.mxu0 0.0
    %3015 = vmatprep.subr.mxu0 0.0
    %3016 = vmatpush1.msra.mxu0 0.0
    %3017 = vmatprep.subr.mxu0 0.0
    %3018 = vmatpush1.msra.mxu0 0.0
    %3019 = vmatprep.subr.mxu0 0.0
    %3020 = vmatpush1.msra.mxu0 0.0
    %3021 = vmatprep.subr.mxu0 0.0
    %3022 = vmatpush1.msra.mxu0 0.0
    %3023 = vmatprep.subr.mxu0 0.0
    %3024 = vmatpush1.msra.mxu0 0.0
    %3025 = vmatprep.subr.mxu0 0.0
    %3026 = vmatpush1.msra.mxu0 0.0
    %3027 = vmatprep.subr.mxu0 0.0
    %3028 = vmatpush1.msra.mxu0 0.0
    %3029 = vmatprep.subr.mxu0 0.0
    %3030 = vmatpush1.msra.mxu0 0.0
    %3031 = vmatprep.subr.mxu0 0.0
    %3032 = vmatpush1.msra.mxu0 0.0
    %3033 = vmatprep.subr.mxu0 0.0
    %3034 = vmatpush1.msra.mxu0 0.0
    %3035 = vmatprep.subr.mxu0 0.0
    %3036 = vmatpush1.msra.mxu0 0.0
    %3037 = vmatprep.subr.mxu0 0.0
    %3038 = vmatpush1.msra.mxu0 0.0
    %3039 = vmatprep.subr.mxu0 0.0
    %3040 = vmatpush1.msra.mxu0 0.0
    %3041 = vmatprep.subr.mxu0 0.0
    %3042 = vmatpush1.msra.mxu0 0.0
    %3043 = vmatprep.subr.mxu0 0.0
    %3044 = vmatpush1.msra.mxu0 0.0
    %3045 = vmatprep.subr.mxu0 0.0
    %3046 = vmatpush1.msra.mxu0 0.0
    %3047 = vmatprep.subr.mxu0 0.0
    %3048 = vmatpush1.msra.mxu0 0.0
    %3049 = vmatprep.subr.mxu0 0.0
    %3050 = vmatpush1.msra.mxu0 0.0
    %3051 = vmatprep.subr.mxu0 0.0
    %3052 = vmatpush1.msra.mxu0 0.0
    %3053 = vmatprep.subr.mxu0 0.0
    %3054 = vmatpush1.msra.mxu0 0.0
    %3055 = vmatprep.subr.mxu0 0.0
    %3056 = vmatpush1.msra.mxu0 0.0
    %3057 = vmatprep.mubr.f32.mxu0 0.0
    %3058 = vmatmul.mubr.f32.gmra.mrb[0].mxu0 %v2988
    %v3059 = vpop.f32.mrb[0].mxu0
    %v3060 = vadd.f32 %v2979, %v3059
    %v3061 = vpop.f32.mrb[0].mxu0
    %3062 = vmatprep.mubr.f32.mxu0 0.0
    %3063 = vmatmul.mubr.f32.gmra.mrb[0].mxu0 %v2991
    %v3064 = vpop.f32.mrb[0].mxu0
    %v3065 = vadd.f32 %v2984, %v3064
    %v3066 = vpop.f32.mrb[0].mxu0
    %3067 = vdwg.mxu0
    %v3068 = vadd.f32 %v3060, %v122
    %v3069 = vadd.f32 %v3065, %v122
    %v3070 = vmax.f32 %v3068, 0.0
    %v3071 = vmax.f32 %v3069, 0.0
    %3074 = vrot.lane.b32.xlu0 %v3070, 96
    %v3075 = vpop.permute.xlu0 %3074
    %3076 = vrot.lane.b32.xlu0 %v3071, 96
    %v3077 = vpop.permute.xlu0 %3076
    %v3078 = vsel %vm135, %v3075, 0
    %v3080 = vsel %vm135, %v3077, 0
    %3082 = vmatprep.subr.mxu0 0.0
    %3083 = vmatpush1.msra.mxu0 %v113
    %3084 = vmatprep.subr.mxu0 0.0
    %3085 = vmatpush1.msra.mxu0 %v114
    %3086 = vmatprep.subr.mxu0 0.0
    %3087 = vmatpush1.msra.mxu0 %v115
    %3088 = vmatprep.subr.mxu0 0.0
    %3089 = vmatpush1.msra.mxu0 %v116
    %3090 = vmatprep.subr.mxu0 0.0
    %3091 = vmatpush1.msra.mxu0 0.0
    %3092 = vmatprep.subr.mxu0 0.0
    %3093 = vmatpush1.msra.mxu0 0.0
    %3094 = vmatprep.subr.mxu0 0.0
    %3095 = vmatpush1.msra.mxu0 0.0
    %3096 = vmatprep.subr.mxu0 0.0
    %3097 = vmatpush1.msra.mxu0 0.0
    %3098 = vmatprep.subr.mxu0 0.0
    %3099 = vmatpush1.msra.mxu0 0.0
    %3100 = vmatprep.subr.mxu0 0.0
    %3101 = vmatpush1.msra.mxu0 0.0
    %3102 = vmatprep.subr.mxu0 0.0
    %3103 = vmatpush1.msra.mxu0 0.0
    %3104 = vmatprep.subr.mxu0 0.0
    %3105 = vmatpush1.msra.mxu0 0.0
    %3106 = vmatprep.subr.mxu0 0.0
    %3107 = vmatpush1.msra.mxu0 0.0
    %3108 = vmatprep.subr.mxu0 0.0
    %3109 = vmatpush1.msra.mxu0 0.0
    %3110 = vmatprep.subr.mxu0 0.0
    %3111 = vmatpush1.msra.mxu0 0.0
    %3112 = vmatprep.subr.mxu0 0.0
    %3113 = vmatpush1.msra.mxu0 0.0
    %3114 = vmatprep.subr.mxu0 0.0
    %3115 = vmatpush1.msra.mxu0 0.0
    %3116 = vmatprep.subr.mxu0 0.0
    %3117 = vmatpush1.msra.mxu0 0.0
    %3118 = vmatprep.subr.mxu0 0.0
    %3119 = vmatpush1.msra.mxu0 0.0
    %3120 = vmatprep.subr.mxu0 0.0
    %3121 = vmatpush1.msra.mxu0 0.0
    %3122 = vmatprep.subr.mxu0 0.0
    %3123 = vmatpush1.msra.mxu0 0.0
    %3124 = vmatprep.subr.mxu0 0.0
    %3125 = vmatpush1.msra.mxu0 0.0
    %3126 = vmatprep.subr.mxu0 0.0
    %3127 = vmatpush1.msra.mxu0 0.0
    %3128 = vmatprep.subr.mxu0 0.0
    %3129 = vmatpush1.msra.mxu0 0.0
    %3130 = vmatprep.subr.mxu0 0.0
    %3131 = vmatpush1.msra.mxu0 0.0
    %3132 = vmatprep.subr.mxu0 0.0
    %3133 = vmatpush1.msra.mxu0 0.0
    %3134 = vmatprep.subr.mxu0 0.0
    %3135 = vmatpush1.msra.mxu0 0.0
    %3136 = vmatprep.subr.mxu0 0.0
    %3137 = vmatpush1.msra.mxu0 0.0
    %3138 = vmatprep.subr.mxu0 0.0
    %3139 = vmatpush1.msra.mxu0 0.0
    %3140 = vmatprep.subr.mxu0 0.0
    %3141 = vmatpush1.msra.mxu0 0.0
    %3142 = vmatprep.subr.mxu0 0.0
    %3143 = vmatpush1.msra.mxu0 0.0
    %3144 = vmatprep.subr.mxu0 0.0
    %3145 = vmatpush1.msra.mxu0 0.0
    %3146 = vmatprep.mubr.f32.mxu0 0.0
    %3147 = vmatmul.mubr.f32.gmra.mrb[0].mxu0 %v3078
    %v3148 = vpop.f32.mrb[0].mxu0
    %v3149 = vadd.f32 %v129, %v3148
    %v3150 = vpop.f32.mrb[0].mxu0
    %3151 = vmatprep.mubr.f32.mxu0 0.0
    %3152 = vmatmul.mubr.f32.gmra.mrb[0].mxu0 %v3080
    %v3153 = vpop.f32.mrb[0].mxu0
    %v3154 = vadd.f32 %v129, %v3153
    %v3155 = vpop.f32.mrb[0].mxu0
    %3156 = vdwg.mxu0
    %3157 = vmax.xlane.f32.xlu0 %v3149
    %v3158 = vpop.xlane.xlu0 %3157
    %3159 = vmax.xlane.f32.xlu0 %v3154
    %v3160 = vpop.xlane.xlu0 %3159
    %v3161 = vsub.f32 %v3149, %v3158
    %v3162 = vsub.f32 %v3154, %v3160
    %v3163 = vmul.f32 %v3161, 1.442695
    %v3164 = vpow.pop %v3163
    %v3165 = vmul.f32 %v3162, 1.442695
    %v3166 = vpow.pop %v3165
    %3167 = vadd.xlane.f32.xlu0 %v3164
    %v3168 = vpop.xlane.xlu0 %3167
    %3169 = vadd.xlane.f32.xlu0 %v3166
    %v3170 = vpop.xlane.xlu0 %3169
    %v3171 = vlog2.pop %v3168
    %v3172 = vmul.f32 %v3171, 0.6931472
    %v3173 = vlog2.pop %v3170
    %v3174 = vmul.f32 %v3173, 0.6931472
    %v3175 = vsub.f32 %v3161, %v3172
    %v3176 = vsub.f32 %v3162, %v3174
    %s3177 = scalar_lea.vmem [#allocation11], 160
    %3178 = vst [vmem:[%s3177] sm:$0xff] %v3175
    %3179 = vst [vmem:[%s3177 + $0x8] sm:$0xff] %v3176
    %s3180 = scalar_lea.vmem [#allocation2], 176
    %v3181 = vld [vmem:[%s3180] sm:$0xff]
    %v3182 = vld [vmem:[%s3180 + $0x8] sm:$0xff]
    %v3184 = vsel %vm135, %v3068, 0
    %v3187 = vsel %vm135, %v3069, 0
    %3189 = vmatprep.subr.mxu0 0.0
    %3190 = vmatpush1.msra.mxu0 %v109
    %3191 = vmatprep.subr.mxu0 0.0
    %3192 = vmatpush1.msra.mxu0 %v110
    %3193 = vmatprep.subr.mxu0 0.0
    %3194 = vmatpush1.msra.mxu0 %v111
    %3195 = vmatprep.subr.mxu0 0.0
    %3196 = vmatpush1.msra.mxu0 %v112
    %3197 = vmatprep.subr.mxu0 0.0
    %3198 = vmatpush1.msra.mxu0 0.0
    %3199 = vmatprep.subr.mxu0 0.0
    %3200 = vmatpush1.msra.mxu0 0.0
    %3201 = vmatprep.subr.mxu0 0.0
    %3202 = vmatpush1.msra.mxu0 0.0
    %3203 = vmatprep.subr.mxu0 0.0
    %3204 = vmatpush1.msra.mxu0 0.0
    %3205 = vmatprep.subr.mxu0 0.0
    %3206 = vmatpush1.msra.mxu0 0.0
    %3207 = vmatprep.subr.mxu0 0.0
    %3208 = vmatpush1.msra.mxu0 0.0
    %3209 = vmatprep.subr.mxu0 0.0
    %3210 = vmatpush1.msra.mxu0 0.0
    %3211 = vmatprep.subr.mxu0 0.0
    %3212 = vmatpush1.msra.mxu0 0.0
    %3213 = vmatprep.subr.mxu0 0.0
    %3214 = vmatpush1.msra.mxu0 0.0
    %3215 = vmatprep.subr.mxu0 0.0
    %3216 = vmatpush1.msra.mxu0 0.0
    %3217 = vmatprep.subr.mxu0 0.0
    %3218 = vmatpush1.msra.mxu0 0.0
    %3219 = vmatprep.subr.mxu0 0.0
    %3220 = vmatpush1.msra.mxu0 0.0
    %3221 = vmatprep.subr.mxu0 0.0
    %3222 = vmatpush1.msra.mxu0 0.0
    %3223 = vmatprep.subr.mxu0 0.0
    %3224 = vmatpush1.msra.mxu0 0.0
    %3225 = vmatprep.subr.mxu0 0.0
    %3226 = vmatpush1.msra.mxu0 0.0
    %3227 = vmatprep.subr.mxu0 0.0
    %3228 = vmatpush1.msra.mxu0 0.0
    %3229 = vmatprep.subr.mxu0 0.0
    %3230 = vmatpush1.msra.mxu0 0.0
    %3231 = vmatprep.subr.mxu0 0.0
    %3232 = vmatpush1.msra.mxu0 0.0
    %3233 = vmatprep.subr.mxu0 0.0
    %3234 = vmatpush1.msra.mxu0 0.0
    %3235 = vmatprep.subr.mxu0 0.0
    %3236 = vmatpush1.msra.mxu0 0.0
    %3237 = vmatprep.subr.mxu0 0.0
    %3238 = vmatpush1.msra.mxu0 0.0
    %3239 = vmatprep.subr.mxu0 0.0
    %3240 = vmatpush1.msra.mxu0 0.0
    %3241 = vmatprep.subr.mxu0 0.0
    %3242 = vmatpush1.msra.mxu0 0.0
    %3243 = vmatprep.subr.mxu0 0.0
    %3244 = vmatpush1.msra.mxu0 0.0
    %3245 = vmatprep.subr.mxu0 0.0
    %3246 = vmatpush1.msra.mxu0 0.0
    %3247 = vmatprep.subr.mxu0 0.0
    %3248 = vmatpush1.msra.mxu0 0.0
    %3249 = vmatprep.subr.mxu0 0.0
    %3250 = vmatpush1.msra.mxu0 0.0
    %3251 = vmatprep.subr.mxu0 0.0
    %3252 = vmatpush1.msra.mxu0 0.0
    %3253 = vmatprep.mubr.f32.mxu0 0.0
    %3254 = vmatmul.mubr.f32.gmra.mrb[0].mxu0 %v3184
    %v3255 = vpop.f32.mrb[0].mxu0
    %v3256 = vadd.f32 0.0, %v3255
    %v3257 = vpop.f32.mrb[0].mxu0
    %3258 = vmatprep.mubr.f32.mxu0 0.0
    %3259 = vmatmul.mubr.f32.gmra.mrb[0].mxu0 %v3187
    %v3260 = vpop.f32.mrb[0].mxu0
    %v3261 = vadd.f32 0.0, %v3260
    %v3262 = vpop.f32.mrb[0].mxu0
    %3263 = vdwg.mxu0
    %v3265 = vsel %vm217, %v3181, 0
    %v3268 = vsel %vm217, %v3182, 0
    %3270 = vmatprep.subr.mxu0 0.0
    %3271 = vmatpush1.msra.mxu0 %v107
    %3272 = vmatprep.subr.mxu0 0.0
    %3273 = vmatpush1.msra.mxu0 %v108
    %3274 = vmatprep.subr.mxu0 0.0
    %3275 = vmatpush1.msra.mxu0 0.0
    %3276 = vmatprep.subr.mxu0 0.0
    %3277 = vmatpush1.msra.mxu0 0.0
    %3278 = vmatprep.subr.mxu0 0.0
    %3279 = vmatpush1.msra.mxu0 0.0
    %3280 = vmatprep.subr.mxu0 0.0
    %3281 = vmatpush1.msra.mxu0 0.0
    %3282 = vmatprep.subr.mxu0 0.0
    %3283 = vmatpush1.msra.mxu0 0.0
    %3284 = vmatprep.subr.mxu0 0.0
    %3285 = vmatpush1.msra.mxu0 0.0
    %3286 = vmatprep.subr.mxu0 0.0
    %3287 = vmatpush1.msra.mxu0 0.0
    %3288 = vmatprep.subr.mxu0 0.0
    %3289 = vmatpush1.msra.mxu0 0.0
    %3290 = vmatprep.subr.mxu0 0.0
    %3291 = vmatpush1.msra.mxu0 0.0
    %3292 = vmatprep.subr.mxu0 0.0
    %3293 = vmatpush1.msra.mxu0 0.0
    %3294 = vmatprep.subr.mxu0 0.0
    %3295 = vmatpush1.msra.mxu0 0.0
    %3296 = vmatprep.subr.mxu0 0.0
    %3297 = vmatpush1.msra.mxu0 0.0
    %3298 = vmatprep.subr.mxu0 0.0
    %3299 = vmatpush1.msra.mxu0 0.0
    %3300 = vmatprep.subr.mxu0 0.0
    %3301 = vmatpush1.msra.mxu0 0.0
    %3302 = vmatprep.subr.mxu0 0.0
    %3303 = vmatpush1.msra.mxu0 0.0
    %3304 = vmatprep.subr.mxu0 0.0
    %3305 = vmatpush1.msra.mxu0 0.0
    %3306 = vmatprep.subr.mxu0 0.0
    %3307 = vmatpush1.msra.mxu0 0.0
    %3308 = vmatprep.subr.mxu0 0.0
    %3309 = vmatpush1.msra.mxu0 0.0
    %3310 = vmatprep.subr.mxu0 0.0
    %3311 = vmatpush1.msra.mxu0 0.0
    %3312 = vmatprep.subr.mxu0 0.0
    %3313 = vmatpush1.msra.mxu0 0.0
    %3314 = vmatprep.subr.mxu0 0.0
    %3315 = vmatpush1.msra.mxu0 0.0
    %3316 = vmatprep.subr.mxu0 0.0
    %3317 = vmatpush1.msra.mxu0 0.0
    %3318 = vmatprep.subr.mxu0 0.0
    %3319 = vmatpush1.msra.mxu0 0.0
    %3320 = vmatprep.subr.mxu0 0.0
    %3321 = vmatpush1.msra.mxu0 0.0
    %3322 = vmatprep.subr.mxu0 0.0
    %3323 = vmatpush1.msra.mxu0 0.0
    %3324 = vmatprep.subr.mxu0 0.0
    %3325 = vmatpush1.msra.mxu0 0.0
    %3326 = vmatprep.subr.mxu0 0.0
    %3327 = vmatpush1.msra.mxu0 0.0
    %3328 = vmatprep.subr.mxu0 0.0
    %3329 = vmatpush1.msra.mxu0 0.0
    %3330 = vmatprep.subr.mxu0 0.0
    %3331 = vmatpush1.msra.mxu0 0.0
    %3332 = vmatprep.subr.mxu0 0.0
    %3333 = vmatpush1.msra.mxu0 0.0
    %3334 = vmatprep.mubr.f32.mxu0 0.0
    %3335 = vmatmul.mubr.f32.gmra.mrb[0].mxu0 %v3265
    %v3336 = vpop.f32.mrb[0].mxu0
    %v3337 = vadd.f32 %v3256, %v3336
    %v3338 = vpop.f32.mrb[0].mxu0
    %3339 = vmatprep.mubr.f32.mxu0 0.0
    %3340 = vmatmul.mubr.f32.gmra.mrb[0].mxu0 %v3268
    %v3341 = vpop.f32.mrb[0].mxu0
    %v3342 = vadd.f32 %v3261, %v3341
    %v3343 = vpop.f32.mrb[0].mxu0
    %3344 = vdwg.mxu0
    %v3345 = vadd.f32 %v3337, %v122
    %v3346 = vadd.f32 %v3342, %v122
    %v3347 = vmax.f32 %v3345, 0.0
    %v3348 = vmax.f32 %v3346, 0.0
    %3351 = vrot.lane.b32.xlu0 %v3347, 96
    %v3352 = vpop.permute.xlu0 %3351
    %3353 = vrot.lane.b32.xlu0 %v3348, 96
    %v3354 = vpop.permute.xlu0 %3353
    %v3355 = vsel %vm135, %v3352, 0
    %v3357 = vsel %vm135, %v3354, 0
    %3359 = vmatprep.subr.mxu0 0.0
    %3360 = vmatpush1.msra.mxu0 %v113
    %3361 = vmatprep.subr.mxu0 0.0
    %3362 = vmatpush1.msra.mxu0 %v114
    %3363 = vmatprep.subr.mxu0 0.0
    %3364 = vmatpush1.msra.mxu0 %v115
    %3365 = vmatprep.subr.mxu0 0.0
    %3366 = vmatpush1.msra.mxu0 %v116
    %3367 = vmatprep.subr.mxu0 0.0
    %3368 = vmatpush1.msra.mxu0 0.0
    %3369 = vmatprep.subr.mxu0 0.0
    %3370 = vmatpush1.msra.mxu0 0.0
    %3371 = vmatprep.subr.mxu0 0.0
    %3372 = vmatpush1.msra.mxu0 0.0
    %3373 = vmatprep.subr.mxu0 0.0
    %3374 = vmatpush1.msra.mxu0 0.0
    %3375 = vmatprep.subr.mxu0 0.0
    %3376 = vmatpush1.msra.mxu0 0.0
    %3377 = vmatprep.subr.mxu0 0.0
    %3378 = vmatpush1.msra.mxu0 0.0
    %3379 = vmatprep.subr.mxu0 0.0
    %3380 = vmatpush1.msra.mxu0 0.0
    %3381 = vmatprep.subr.mxu0 0.0
    %3382 = vmatpush1.msra.mxu0 0.0
    %3383 = vmatprep.subr.mxu0 0.0
    %3384 = vmatpush1.msra.mxu0 0.0
    %3385 = vmatprep.subr.mxu0 0.0
    %3386 = vmatpush1.msra.mxu0 0.0
    %3387 = vmatprep.subr.mxu0 0.0
    %3388 = vmatpush1.msra.mxu0 0.0
    %3389 = vmatprep.subr.mxu0 0.0
    %3390 = vmatpush1.msra.mxu0 0.0
    %3391 = vmatprep.subr.mxu0 0.0
    %3392 = vmatpush1.msra.mxu0 0.0
    %3393 = vmatprep.subr.mxu0 0.0
    %3394 = vmatpush1.msra.mxu0 0.0
    %3395 = vmatprep.subr.mxu0 0.0
    %3396 = vmatpush1.msra.mxu0 0.0
    %3397 = vmatprep.subr.mxu0 0.0
    %3398 = vmatpush1.msra.mxu0 0.0
    %3399 = vmatprep.subr.mxu0 0.0
    %3400 = vmatpush1.msra.mxu0 0.0
    %3401 = vmatprep.subr.mxu0 0.0
    %3402 = vmatpush1.msra.mxu0 0.0
    %3403 = vmatprep.subr.mxu0 0.0
    %3404 = vmatpush1.msra.mxu0 0.0
    %3405 = vmatprep.subr.mxu0 0.0
    %3406 = vmatpush1.msra.mxu0 0.0
    %3407 = vmatprep.subr.mxu0 0.0
    %3408 = vmatpush1.msra.mxu0 0.0
    %3409 = vmatprep.subr.mxu0 0.0
    %3410 = vmatpush1.msra.mxu0 0.0
    %3411 = vmatprep.subr.mxu0 0.0
    %3412 = vmatpush1.msra.mxu0 0.0
    %3413 = vmatprep.subr.mxu0 0.0
    %3414 = vmatpush1.msra.mxu0 0.0
    %3415 = vmatprep.subr.mxu0 0.0
    %3416 = vmatpush1.msra.mxu0 0.0
    %3417 = vmatprep.subr.mxu0 0.0
    %3418 = vmatpush1.msra.mxu0 0.0
    %3419 = vmatprep.subr.mxu0 0.0
    %3420 = vmatpush1.msra.mxu0 0.0
    %3421 = vmatprep.subr.mxu0 0.0
    %3422 = vmatpush1.msra.mxu0 0.0
    %3423 = vmatprep.mubr.f32.mxu0 0.0
    %3424 = vmatmul.mubr.f32.gmra.mrb[0].mxu0 %v3355
    %v3425 = vpop.f32.mrb[0].mxu0
    %v3426 = vadd.f32 %v129, %v3425
    %v3427 = vpop.f32.mrb[0].mxu0
    %3428 = vmatprep.mubr.f32.mxu0 0.0
    %3429 = vmatmul.mubr.f32.gmra.mrb[0].mxu0 %v3357
    %v3430 = vpop.f32.mrb[0].mxu0
    %v3431 = vadd.f32 %v129, %v3430
    %v3432 = vpop.f32.mrb[0].mxu0
    %3433 = vdwg.mxu0
    %3434 = vmax.xlane.f32.xlu0 %v3426
    %v3435 = vpop.xlane.xlu0 %3434
    %3436 = vmax.xlane.f32.xlu0 %v3431
    %v3437 = vpop.xlane.xlu0 %3436
    %v3438 = vsub.f32 %v3426, %v3435
    %v3439 = vsub.f32 %v3431, %v3437
    %v3440 = vmul.f32 %v3438, 1.442695
    %v3441 = vpow.pop %v3440
    %v3442 = vmul.f32 %v3439, 1.442695
    %v3443 = vpow.pop %v3442
    %3444 = vadd.xlane.f32.xlu0 %v3441
    %v3445 = vpop.xlane.xlu0 %3444
    %3446 = vadd.xlane.f32.xlu0 %v3443
    %v3447 = vpop.xlane.xlu0 %3446
    %v3448 = vlog2.pop %v3445
    %v3449 = vmul.f32 %v3448, 0.6931472
    %v3450 = vlog2.pop %v3447
    %v3451 = vmul.f32 %v3450, 0.6931472
    %v3452 = vsub.f32 %v3438, %v3449
    %v3453 = vsub.f32 %v3439, %v3451
    %s3454 = scalar_lea.vmem [#allocation11], 176
    %3455 = vst [vmem:[%s3454] sm:$0xff] %v3452
    %3456 = vst [vmem:[%s3454 + $0x8] sm:$0xff] %v3453
    %s3457 = scalar_lea.vmem [#allocation2], 192
    %v3458 = vld [vmem:[%s3457] sm:$0xff]
    %v3459 = vld [vmem:[%s3457 + $0x8] sm:$0xff]
    %v3461 = vsel %vm135, %v3345, 0
    %v3464 = vsel %vm135, %v3346, 0
    %3466 = vmatprep.subr.mxu0 0.0
    %3467 = vmatpush1.msra.mxu0 %v109
    %3468 = vmatprep.subr.mxu0 0.0
    %3469 = vmatpush1.msra.mxu0 %v110
    %3470 = vmatprep.subr.mxu0 0.0
    %3471 = vmatpush1.msra.mxu0 %v111
    %3472 = vmatprep.subr.mxu0 0.0
    %3473 = vmatpush1.msra.mxu0 %v112
    %3474 = vmatprep.subr.mxu0 0.0
    %3475 = vmatpush1.msra.mxu0 0.0
    %3476 = vmatprep.subr.mxu0 0.0
    %3477 = vmatpush1.msra.mxu0 0.0
    %3478 = vmatprep.subr.mxu0 0.0
    %3479 = vmatpush1.msra.mxu0 0.0
    %3480 = vmatprep.subr.mxu0 0.0
    %3481 = vmatpush1.msra.mxu0 0.0
    %3482 = vmatprep.subr.mxu0 0.0
    %3483 = vmatpush1.msra.mxu0 0.0
    %3484 = vmatprep.subr.mxu0 0.0
    %3485 = vmatpush1.msra.mxu0 0.0
    %3486 = vmatprep.subr.mxu0 0.0
    %3487 = vmatpush1.msra.mxu0 0.0
    %3488 = vmatprep.subr.mxu0 0.0
    %3489 = vmatpush1.msra.mxu0 0.0
    %3490 = vmatprep.subr.mxu0 0.0
    %3491 = vmatpush1.msra.mxu0 0.0
    %3492 = vmatprep.subr.mxu0 0.0
    %3493 = vmatpush1.msra.mxu0 0.0
    %3494 = vmatprep.subr.mxu0 0.0
    %3495 = vmatpush1.msra.mxu0 0.0
    %3496 = vmatprep.subr.mxu0 0.0
    %3497 = vmatpush1.msra.mxu0 0.0
    %3498 = vmatprep.subr.mxu0 0.0
    %3499 = vmatpush1.msra.mxu0 0.0
    %3500 = vmatprep.subr.mxu0 0.0
    %3501 = vmatpush1.msra.mxu0 0.0
    %3502 = vmatprep.subr.mxu0 0.0
    %3503 = vmatpush1.msra.mxu0 0.0
    %3504 = vmatprep.subr.mxu0 0.0
    %3505 = vmatpush1.msra.mxu0 0.0
    %3506 = vmatprep.subr.mxu0 0.0
    %3507 = vmatpush1.msra.mxu0 0.0
    %3508 = vmatprep.subr.mxu0 0.0
    %3509 = vmatpush1.msra.mxu0 0.0
    %3510 = vmatprep.subr.mxu0 0.0
    %3511 = vmatpush1.msra.mxu0 0.0
    %3512 = vmatprep.subr.mxu0 0.0
    %3513 = vmatpush1.msra.mxu0 0.0
    %3514 = vmatprep.subr.mxu0 0.0
    %3515 = vmatpush1.msra.mxu0 0.0
    %3516 = vmatprep.subr.mxu0 0.0
    %3517 = vmatpush1.msra.mxu0 0.0
    %3518 = vmatprep.subr.mxu0 0.0
    %3519 = vmatpush1.msra.mxu0 0.0
    %3520 = vmatprep.subr.mxu0 0.0
    %3521 = vmatpush1.msra.mxu0 0.0
    %3522 = vmatprep.subr.mxu0 0.0
    %3523 = vmatpush1.msra.mxu0 0.0
    %3524 = vmatprep.subr.mxu0 0.0
    %3525 = vmatpush1.msra.mxu0 0.0
    %3526 = vmatprep.subr.mxu0 0.0
    %3527 = vmatpush1.msra.mxu0 0.0
    %3528 = vmatprep.subr.mxu0 0.0
    %3529 = vmatpush1.msra.mxu0 0.0
    %3530 = vmatprep.mubr.f32.mxu0 0.0
    %3531 = vmatmul.mubr.f32.gmra.mrb[0].mxu0 %v3461
    %v3532 = vpop.f32.mrb[0].mxu0
    %v3533 = vadd.f32 0.0, %v3532
    %v3534 = vpop.f32.mrb[0].mxu0
    %3535 = vmatprep.mubr.f32.mxu0 0.0
    %3536 = vmatmul.mubr.f32.gmra.mrb[0].mxu0 %v3464
    %v3537 = vpop.f32.mrb[0].mxu0
    %v3538 = vadd.f32 0.0, %v3537
    %v3539 = vpop.f32.mrb[0].mxu0
    %3540 = vdwg.mxu0
    %v3542 = vsel %vm217, %v3458, 0
    %v3545 = vsel %vm217, %v3459, 0
    %3547 = vmatprep.subr.mxu0 0.0
    %3548 = vmatpush1.msra.mxu0 %v107
    %3549 = vmatprep.subr.mxu0 0.0
    %3550 = vmatpush1.msra.mxu0 %v108
    %3551 = vmatprep.subr.mxu0 0.0
    %3552 = vmatpush1.msra.mxu0 0.0
    %3553 = vmatprep.subr.mxu0 0.0
    %3554 = vmatpush1.msra.mxu0 0.0
    %3555 = vmatprep.subr.mxu0 0.0
    %3556 = vmatpush1.msra.mxu0 0.0
    %3557 = vmatprep.subr.mxu0 0.0
    %3558 = vmatpush1.msra.mxu0 0.0
    %3559 = vmatprep.subr.mxu0 0.0
    %3560 = vmatpush1.msra.mxu0 0.0
    %3561 = vmatprep.subr.mxu0 0.0
    %3562 = vmatpush1.msra.mxu0 0.0
    %3563 = vmatprep.subr.mxu0 0.0
    %3564 = vmatpush1.msra.mxu0 0.0
    %3565 = vmatprep.subr.mxu0 0.0
    %3566 = vmatpush1.msra.mxu0 0.0
    %3567 = vmatprep.subr.mxu0 0.0
    %3568 = vmatpush1.msra.mxu0 0.0
    %3569 = vmatprep.subr.mxu0 0.0
    %3570 = vmatpush1.msra.mxu0 0.0
    %3571 = vmatprep.subr.mxu0 0.0
    %3572 = vmatpush1.msra.mxu0 0.0
    %3573 = vmatprep.subr.mxu0 0.0
    %3574 = vmatpush1.msra.mxu0 0.0
    %3575 = vmatprep.subr.mxu0 0.0
    %3576 = vmatpush1.msra.mxu0 0.0
    %3577 = vmatprep.subr.mxu0 0.0
    %3578 = vmatpush1.msra.mxu0 0.0
    %3579 = vmatprep.subr.mxu0 0.0
    %3580 = vmatpush1.msra.mxu0 0.0
    %3581 = vmatprep.subr.mxu0 0.0
    %3582 = vmatpush1.msra.mxu0 0.0
    %3583 = vmatprep.subr.mxu0 0.0
    %3584 = vmatpush1.msra.mxu0 0.0
    %3585 = vmatprep.subr.mxu0 0.0
    %3586 = vmatpush1.msra.mxu0 0.0
    %3587 = vmatprep.subr.mxu0 0.0
    %3588 = vmatpush1.msra.mxu0 0.0
    %3589 = vmatprep.subr.mxu0 0.0
    %3590 = vmatpush1.msra.mxu0 0.0
    %3591 = vmatprep.subr.mxu0 0.0
    %3592 = vmatpush1.msra.mxu0 0.0
    %3593 = vmatprep.subr.mxu0 0.0
    %3594 = vmatpush1.msra.mxu0 0.0
    %3595 = vmatprep.subr.mxu0 0.0
    %3596 = vmatpush1.msra.mxu0 0.0
    %3597 = vmatprep.subr.mxu0 0.0
    %3598 = vmatpush1.msra.mxu0 0.0
    %3599 = vmatprep.subr.mxu0 0.0
    %3600 = vmatpush1.msra.mxu0 0.0
    %3601 = vmatprep.subr.mxu0 0.0
    %3602 = vmatpush1.msra.mxu0 0.0
    %3603 = vmatprep.subr.mxu0 0.0
    %3604 = vmatpush1.msra.mxu0 0.0
    %3605 = vmatprep.subr.mxu0 0.0
    %3606 = vmatpush1.msra.mxu0 0.0
    %3607 = vmatprep.subr.mxu0 0.0
    %3608 = vmatpush1.msra.mxu0 0.0
    %3609 = vmatprep.subr.mxu0 0.0
    %3610 = vmatpush1.msra.mxu0 0.0
    %3611 = vmatprep.mubr.f32.mxu0 0.0
    %3612 = vmatmul.mubr.f32.gmra.mrb[0].mxu0 %v3542
    %v3613 = vpop.f32.mrb[0].mxu0
    %v3614 = vadd.f32 %v3533, %v3613
    %v3615 = vpop.f32.mrb[0].mxu0
    %3616 = vmatprep.mubr.f32.mxu0 0.0
    %3617 = vmatmul.mubr.f32.gmra.mrb[0].mxu0 %v3545
    %v3618 = vpop.f32.mrb[0].mxu0
    %v3619 = vadd.f32 %v3538, %v3618
    %v3620 = vpop.f32.mrb[0].mxu0
    %3621 = vdwg.mxu0
    %v3622 = vadd.f32 %v3614, %v122
    %v3623 = vadd.f32 %v3619, %v122
    %v3624 = vmax.f32 %v3622, 0.0
    %v3625 = vmax.f32 %v3623, 0.0
    %3628 = vrot.lane.b32.xlu0 %v3624, 96
    %v3629 = vpop.permute.xlu0 %3628
    %3630 = vrot.lane.b32.xlu0 %v3625, 96
    %v3631 = vpop.permute.xlu0 %3630
    %v3632 = vsel %vm135, %v3629, 0
    %v3634 = vsel %vm135, %v3631, 0
    %3636 = vmatprep.subr.mxu0 0.0
    %3637 = vmatpush1.msra.mxu0 %v113
    %3638 = vmatprep.subr.mxu0 0.0
    %3639 = vmatpush1.msra.mxu0 %v114
    %3640 = vmatprep.subr.mxu0 0.0
    %3641 = vmatpush1.msra.mxu0 %v115
    %3642 = vmatprep.subr.mxu0 0.0
    %3643 = vmatpush1.msra.mxu0 %v116
    %3644 = vmatprep.subr.mxu0 0.0
    %3645 = vmatpush1.msra.mxu0 0.0
    %3646 = vmatprep.subr.mxu0 0.0
    %3647 = vmatpush1.msra.mxu0 0.0
    %3648 = vmatprep.subr.mxu0 0.0
    %3649 = vmatpush1.msra.mxu0 0.0
    %3650 = vmatprep.subr.mxu0 0.0
    %3651 = vmatpush1.msra.mxu0 0.0
    %3652 = vmatprep.subr.mxu0 0.0
    %3653 = vmatpush1.msra.mxu0 0.0
    %3654 = vmatprep.subr.mxu0 0.0
    %3655 = vmatpush1.msra.mxu0 0.0
    %3656 = vmatprep.subr.mxu0 0.0
    %3657 = vmatpush1.msra.mxu0 0.0
    %3658 = vmatprep.subr.mxu0 0.0
    %3659 = vmatpush1.msra.mxu0 0.0
    %3660 = vmatprep.subr.mxu0 0.0
    %3661 = vmatpush1.msra.mxu0 0.0
    %3662 = vmatprep.subr.mxu0 0.0
    %3663 = vmatpush1.msra.mxu0 0.0
    %3664 = vmatprep.subr.mxu0 0.0
    %3665 = vmatpush1.msra.mxu0 0.0
    %3666 = vmatprep.subr.mxu0 0.0
    %3667 = vmatpush1.msra.mxu0 0.0
    %3668 = vmatprep.subr.mxu0 0.0
    %3669 = vmatpush1.msra.mxu0 0.0
    %3670 = vmatprep.subr.mxu0 0.0
    %3671 = vmatpush1.msra.mxu0 0.0
    %3672 = vmatprep.subr.mxu0 0.0
    %3673 = vmatpush1.msra.mxu0 0.0
    %3674 = vmatprep.subr.mxu0 0.0
    %3675 = vmatpush1.msra.mxu0 0.0
    %3676 = vmatprep.subr.mxu0 0.0
    %3677 = vmatpush1.msra.mxu0 0.0
    %3678 = vmatprep.subr.mxu0 0.0
    %3679 = vmatpush1.msra.mxu0 0.0
    %3680 = vmatprep.subr.mxu0 0.0
    %3681 = vmatpush1.msra.mxu0 0.0
    %3682 = vmatprep.subr.mxu0 0.0
    %3683 = vmatpush1.msra.mxu0 0.0
    %3684 = vmatprep.subr.mxu0 0.0
    %3685 = vmatpush1.msra.mxu0 0.0
    %3686 = vmatprep.subr.mxu0 0.0
    %3687 = vmatpush1.msra.mxu0 0.0
    %3688 = vmatprep.subr.mxu0 0.0
    %3689 = vmatpush1.msra.mxu0 0.0
    %3690 = vmatprep.subr.mxu0 0.0
    %3691 = vmatpush1.msra.mxu0 0.0
    %3692 = vmatprep.subr.mxu0 0.0
    %3693 = vmatpush1.msra.mxu0 0.0
    %3694 = vmatprep.subr.mxu0 0.0
    %3695 = vmatpush1.msra.mxu0 0.0
    %3696 = vmatprep.subr.mxu0 0.0
    %3697 = vmatpush1.msra.mxu0 0.0
    %3698 = vmatprep.subr.mxu0 0.0
    %3699 = vmatpush1.msra.mxu0 0.0
    %3700 = vmatprep.mubr.f32.mxu0 0.0
    %3701 = vmatmul.mubr.f32.gmra.mrb[0].mxu0 %v3632
    %v3702 = vpop.f32.mrb[0].mxu0
    %v3703 = vadd.f32 %v129, %v3702
    %v3704 = vpop.f32.mrb[0].mxu0
    %3705 = vmatprep.mubr.f32.mxu0 0.0
    %3706 = vmatmul.mubr.f32.gmra.mrb[0].mxu0 %v3634
    %v3707 = vpop.f32.mrb[0].mxu0
    %v3708 = vadd.f32 %v129, %v3707
    %v3709 = vpop.f32.mrb[0].mxu0
    %3710 = vdwg.mxu0
    %3711 = vmax.xlane.f32.xlu0 %v3703
    %v3712 = vpop.xlane.xlu0 %3711
    %3713 = vmax.xlane.f32.xlu0 %v3708
    %v3714 = vpop.xlane.xlu0 %3713
    %v3715 = vsub.f32 %v3703, %v3712
    %v3716 = vsub.f32 %v3708, %v3714
    %v3717 = vmul.f32 %v3715, 1.442695
    %v3718 = vpow.pop %v3717
    %v3719 = vmul.f32 %v3716, 1.442695
    %v3720 = vpow.pop %v3719
    %3721 = vadd.xlane.f32.xlu0 %v3718
    %v3722 = vpop.xlane.xlu0 %3721
    %3723 = vadd.xlane.f32.xlu0 %v3720
    %v3724 = vpop.xlane.xlu0 %3723
    %v3725 = vlog2.pop %v3722
    %v3726 = vmul.f32 %v3725, 0.6931472
    %v3727 = vlog2.pop %v3724
    %v3728 = vmul.f32 %v3727, 0.6931472
    %v3729 = vsub.f32 %v3715, %v3726
    %v3730 = vsub.f32 %v3716, %v3728
    %s3731 = scalar_lea.vmem [#allocation11], 192
    %3732 = vst [vmem:[%s3731] sm:$0xff] %v3729
    %3733 = vst [vmem:[%s3731 + $0x8] sm:$0xff] %v3730
    %s3734 = scalar_lea.vmem [#allocation2], 208
    %v3735 = vld [vmem:[%s3734] sm:$0xff]
    %v3736 = vld [vmem:[%s3734 + $0x8] sm:$0xff]
    %v3738 = vsel %vm135, %v3622, 0
    %v3741 = vsel %vm135, %v3623, 0
    %3743 = vmatprep.subr.mxu0 0.0
    %3744 = vmatpush1.msra.mxu0 %v109
    %3745 = vmatprep.subr.mxu0 0.0
    %3746 = vmatpush1.msra.mxu0 %v110
    %3747 = vmatprep.subr.mxu0 0.0
    %3748 = vmatpush1.msra.mxu0 %v111
    %3749 = vmatprep.subr.mxu0 0.0
    %3750 = vmatpush1.msra.mxu0 %v112
    %3751 = vmatprep.subr.mxu0 0.0
    %3752 = vmatpush1.msra.mxu0 0.0
    %3753 = vmatprep.subr.mxu0 0.0
    %3754 = vmatpush1.msra.mxu0 0.0
    %3755 = vmatprep.subr.mxu0 0.0
    %3756 = vmatpush1.msra.mxu0 0.0
    %3757 = vmatprep.subr.mxu0 0.0
    %3758 = vmatpush1.msra.mxu0 0.0
    %3759 = vmatprep.subr.mxu0 0.0
    %3760 = vmatpush1.msra.mxu0 0.0
    %3761 = vmatprep.subr.mxu0 0.0
    %3762 = vmatpush1.msra.mxu0 0.0
    %3763 = vmatprep.subr.mxu0 0.0
    %3764 = vmatpush1.msra.mxu0 0.0
    %3765 = vmatprep.subr.mxu0 0.0
    %3766 = vmatpush1.msra.mxu0 0.0
    %3767 = vmatprep.subr.mxu0 0.0
    %3768 = vmatpush1.msra.mxu0 0.0
    %3769 = vmatprep.subr.mxu0 0.0
    %3770 = vmatpush1.msra.mxu0 0.0
    %3771 = vmatprep.subr.mxu0 0.0
    %3772 = vmatpush1.msra.mxu0 0.0
    %3773 = vmatprep.subr.mxu0 0.0
    %3774 = vmatpush1.msra.mxu0 0.0
    %3775 = vmatprep.subr.mxu0 0.0
    %3776 = vmatpush1.msra.mxu0 0.0
    %3777 = vmatprep.subr.mxu0 0.0
    %3778 = vmatpush1.msra.mxu0 0.0
    %3779 = vmatprep.subr.mxu0 0.0
    %3780 = vmatpush1.msra.mxu0 0.0
    %3781 = vmatprep.subr.mxu0 0.0
    %3782 = vmatpush1.msra.mxu0 0.0
    %3783 = vmatprep.subr.mxu0 0.0
    %3784 = vmatpush1.msra.mxu0 0.0
    %3785 = vmatprep.subr.mxu0 0.0
    %3786 = vmatpush1.msra.mxu0 0.0
    %3787 = vmatprep.subr.mxu0 0.0
    %3788 = vmatpush1.msra.mxu0 0.0
    %3789 = vmatprep.subr.mxu0 0.0
    %3790 = vmatpush1.msra.mxu0 0.0
    %3791 = vmatprep.subr.mxu0 0.0
    %3792 = vmatpush1.msra.mxu0 0.0
    %3793 = vmatprep.subr.mxu0 0.0
    %3794 = vmatpush1.msra.mxu0 0.0
    %3795 = vmatprep.subr.mxu0 0.0
    %3796 = vmatpush1.msra.mxu0 0.0
    %3797 = vmatprep.subr.mxu0 0.0
    %3798 = vmatpush1.msra.mxu0 0.0
    %3799 = vmatprep.subr.mxu0 0.0
    %3800 = vmatpush1.msra.mxu0 0.0
    %3801 = vmatprep.subr.mxu0 0.0
    %3802 = vmatpush1.msra.mxu0 0.0
    %3803 = vmatprep.subr.mxu0 0.0
    %3804 = vmatpush1.msra.mxu0 0.0
    %3805 = vmatprep.subr.mxu0 0.0
    %3806 = vmatpush1.msra.mxu0 0.0
    %3807 = vmatprep.mubr.f32.mxu0 0.0
    %3808 = vmatmul.mubr.f32.gmra.mrb[0].mxu0 %v3738
    %v3809 = vpop.f32.mrb[0].mxu0
    %v3810 = vadd.f32 0.0, %v3809
    %v3811 = vpop.f32.mrb[0].mxu0
    %3812 = vmatprep.mubr.f32.mxu0 0.0
    %3813 = vmatmul.mubr.f32.gmra.mrb[0].mxu0 %v3741
    %v3814 = vpop.f32.mrb[0].mxu0
    %v3815 = vadd.f32 0.0, %v3814
    %v3816 = vpop.f32.mrb[0].mxu0
    %3817 = vdwg.mxu0
    %v3819 = vsel %vm217, %v3735, 0
    %v3822 = vsel %vm217, %v3736, 0
    %3824 = vmatprep.subr.mxu0 0.0
    %3825 = vmatpush1.msra.mxu0 %v107
    %3826 = vmatprep.subr.mxu0 0.0
    %3827 = vmatpush1.msra.mxu0 %v108
    %3828 = vmatprep.subr.mxu0 0.0
    %3829 = vmatpush1.msra.mxu0 0.0
    %3830 = vmatprep.subr.mxu0 0.0
    %3831 = vmatpush1.msra.mxu0 0.0
    %3832 = vmatprep.subr.mxu0 0.0
    %3833 = vmatpush1.msra.mxu0 0.0
    %3834 = vmatprep.subr.mxu0 0.0
    %3835 = vmatpush1.msra.mxu0 0.0
    %3836 = vmatprep.subr.mxu0 0.0
    %3837 = vmatpush1.msra.mxu0 0.0
    %3838 = vmatprep.subr.mxu0 0.0
    %3839 = vmatpush1.msra.mxu0 0.0
    %3840 = vmatprep.subr.mxu0 0.0
    %3841 = vmatpush1.msra.mxu0 0.0
    %3842 = vmatprep.subr.mxu0 0.0
    %3843 = vmatpush1.msra.mxu0 0.0
    %3844 = vmatprep.subr.mxu0 0.0
    %3845 = vmatpush1.msra.mxu0 0.0
    %3846 = vmatprep.subr.mxu0 0.0
    %3847 = vmatpush1.msra.mxu0 0.0
    %3848 = vmatprep.subr.mxu0 0.0
    %3849 = vmatpush1.msra.mxu0 0.0
    %3850 = vmatprep.subr.mxu0 0.0
    %3851 = vmatpush1.msra.mxu0 0.0
    %3852 = vmatprep.subr.mxu0 0.0
    %3853 = vmatpush1.msra.mxu0 0.0
    %3854 = vmatprep.subr.mxu0 0.0
    %3855 = vmatpush1.msra.mxu0 0.0
    %3856 = vmatprep.subr.mxu0 0.0
    %3857 = vmatpush1.msra.mxu0 0.0
    %3858 = vmatprep.subr.mxu0 0.0
    %3859 = vmatpush1.msra.mxu0 0.0
    %3860 = vmatprep.subr.mxu0 0.0
    %3861 = vmatpush1.msra.mxu0 0.0
    %3862 = vmatprep.subr.mxu0 0.0
    %3863 = vmatpush1.msra.mxu0 0.0
    %3864 = vmatprep.subr.mxu0 0.0
    %3865 = vmatpush1.msra.mxu0 0.0
    %3866 = vmatprep.subr.mxu0 0.0
    %3867 = vmatpush1.msra.mxu0 0.0
    %3868 = vmatprep.subr.mxu0 0.0
    %3869 = vmatpush1.msra.mxu0 0.0
    %3870 = vmatprep.subr.mxu0 0.0
    %3871 = vmatpush1.msra.mxu0 0.0
    %3872 = vmatprep.subr.mxu0 0.0
    %3873 = vmatpush1.msra.mxu0 0.0
    %3874 = vmatprep.subr.mxu0 0.0
    %3875 = vmatpush1.msra.mxu0 0.0
    %3876 = vmatprep.subr.mxu0 0.0
    %3877 = vmatpush1.msra.mxu0 0.0
    %3878 = vmatprep.subr.mxu0 0.0
    %3879 = vmatpush1.msra.mxu0 0.0
    %3880 = vmatprep.subr.mxu0 0.0
    %3881 = vmatpush1.msra.mxu0 0.0
    %3882 = vmatprep.subr.mxu0 0.0
    %3883 = vmatpush1.msra.mxu0 0.0
    %3884 = vmatprep.subr.mxu0 0.0
    %3885 = vmatpush1.msra.mxu0 0.0
    %3886 = vmatprep.subr.mxu0 0.0
    %3887 = vmatpush1.msra.mxu0 0.0
    %3888 = vmatprep.mubr.f32.mxu0 0.0
    %3889 = vmatmul.mubr.f32.gmra.mrb[0].mxu0 %v3819
    %v3890 = vpop.f32.mrb[0].mxu0
    %v3891 = vadd.f32 %v3810, %v3890
    %v3892 = vpop.f32.mrb[0].mxu0
    %3893 = vmatprep.mubr.f32.mxu0 0.0
    %3894 = vmatmul.mubr.f32.gmra.mrb[0].mxu0 %v3822
    %v3895 = vpop.f32.mrb[0].mxu0
    %v3896 = vadd.f32 %v3815, %v3895
    %v3897 = vpop.f32.mrb[0].mxu0
    %3898 = vdwg.mxu0
    %v3899 = vadd.f32 %v3891, %v122
    %v3900 = vadd.f32 %v3896, %v122
    %v3901 = vmax.f32 %v3899, 0.0
    %v3902 = vmax.f32 %v3900, 0.0
    %3905 = vrot.lane.b32.xlu0 %v3901, 96
    %v3906 = vpop.permute.xlu0 %3905
    %3907 = vrot.lane.b32.xlu0 %v3902, 96
    %v3908 = vpop.permute.xlu0 %3907
    %v3909 = vsel %vm135, %v3906, 0
    %v3911 = vsel %vm135, %v3908, 0
    %3913 = vmatprep.subr.mxu0 0.0
    %3914 = vmatpush1.msra.mxu0 %v113
    %3915 = vmatprep.subr.mxu0 0.0
    %3916 = vmatpush1.msra.mxu0 %v114
    %3917 = vmatprep.subr.mxu0 0.0
    %3918 = vmatpush1.msra.mxu0 %v115
    %3919 = vmatprep.subr.mxu0 0.0
    %3920 = vmatpush1.msra.mxu0 %v116
    %3921 = vmatprep.subr.mxu0 0.0
    %3922 = vmatpush1.msra.mxu0 0.0
    %3923 = vmatprep.subr.mxu0 0.0
    %3924 = vmatpush1.msra.mxu0 0.0
    %3925 = vmatprep.subr.mxu0 0.0
    %3926 = vmatpush1.msra.mxu0 0.0
    %3927 = vmatprep.subr.mxu0 0.0
    %3928 = vmatpush1.msra.mxu0 0.0
    %3929 = vmatprep.subr.mxu0 0.0
    %3930 = vmatpush1.msra.mxu0 0.0
    %3931 = vmatprep.subr.mxu0 0.0
    %3932 = vmatpush1.msra.mxu0 0.0
    %3933 = vmatprep.subr.mxu0 0.0
    %3934 = vmatpush1.msra.mxu0 0.0
    %3935 = vmatprep.subr.mxu0 0.0
    %3936 = vmatpush1.msra.mxu0 0.0
    %3937 = vmatprep.subr.mxu0 0.0
    %3938 = vmatpush1.msra.mxu0 0.0
    %3939 = vmatprep.subr.mxu0 0.0
    %3940 = vmatpush1.msra.mxu0 0.0
    %3941 = vmatprep.subr.mxu0 0.0
    %3942 = vmatpush1.msra.mxu0 0.0
    %3943 = vmatprep.subr.mxu0 0.0
    %3944 = vmatpush1.msra.mxu0 0.0
    %3945 = vmatprep.subr.mxu0 0.0
    %3946 = vmatpush1.msra.mxu0 0.0
    %3947 = vmatprep.subr.mxu0 0.0
    %3948 = vmatpush1.msra.mxu0 0.0
    %3949 = vmatprep.subr.mxu0 0.0
    %3950 = vmatpush1.msra.mxu0 0.0
    %3951 = vmatprep.subr.mxu0 0.0
    %3952 = vmatpush1.msra.mxu0 0.0
    %3953 = vmatprep.subr.mxu0 0.0
    %3954 = vmatpush1.msra.mxu0 0.0
    %3955 = vmatprep.subr.mxu0 0.0
    %3956 = vmatpush1.msra.mxu0 0.0
    %3957 = vmatprep.subr.mxu0 0.0
    %3958 = vmatpush1.msra.mxu0 0.0
    %3959 = vmatprep.subr.mxu0 0.0
    %3960 = vmatpush1.msra.mxu0 0.0
    %3961 = vmatprep.subr.mxu0 0.0
    %3962 = vmatpush1.msra.mxu0 0.0
    %3963 = vmatprep.subr.mxu0 0.0
    %3964 = vmatpush1.msra.mxu0 0.0
    %3965 = vmatprep.subr.mxu0 0.0
    %3966 = vmatpush1.msra.mxu0 0.0
    %3967 = vmatprep.subr.mxu0 0.0
    %3968 = vmatpush1.msra.mxu0 0.0
    %3969 = vmatprep.subr.mxu0 0.0
    %3970 = vmatpush1.msra.mxu0 0.0
    %3971 = vmatprep.subr.mxu0 0.0
    %3972 = vmatpush1.msra.mxu0 0.0
    %3973 = vmatprep.subr.mxu0 0.0
    %3974 = vmatpush1.msra.mxu0 0.0
    %3975 = vmatprep.subr.mxu0 0.0
    %3976 = vmatpush1.msra.mxu0 0.0
    %3977 = vmatprep.mubr.f32.mxu0 0.0
    %3978 = vmatmul.mubr.f32.gmra.mrb[0].mxu0 %v3909
    %v3979 = vpop.f32.mrb[0].mxu0
    %v3980 = vadd.f32 %v129, %v3979
    %v3981 = vpop.f32.mrb[0].mxu0
    %3982 = vmatprep.mubr.f32.mxu0 0.0
    %3983 = vmatmul.mubr.f32.gmra.mrb[0].mxu0 %v3911
    %v3984 = vpop.f32.mrb[0].mxu0
    %v3985 = vadd.f32 %v129, %v3984
    %v3986 = vpop.f32.mrb[0].mxu0
    %3987 = vdwg.mxu0
    %3988 = vmax.xlane.f32.xlu0 %v3980
    %v3989 = vpop.xlane.xlu0 %3988
    %3990 = vmax.xlane.f32.xlu0 %v3985
    %v3991 = vpop.xlane.xlu0 %3990
    %v3992 = vsub.f32 %v3980, %v3989
    %v3993 = vsub.f32 %v3985, %v3991
    %v3994 = vmul.f32 %v3992, 1.442695
    %v3995 = vpow.pop %v3994
    %v3996 = vmul.f32 %v3993, 1.442695
    %v3997 = vpow.pop %v3996
    %3998 = vadd.xlane.f32.xlu0 %v3995
    %v3999 = vpop.xlane.xlu0 %3998
    %4000 = vadd.xlane.f32.xlu0 %v3997
    %v4001 = vpop.xlane.xlu0 %4000
    %v4002 = vlog2.pop %v3999
    %v4003 = vmul.f32 %v4002, 0.6931472
    %v4004 = vlog2.pop %v4001
    %v4005 = vmul.f32 %v4004, 0.6931472
    %v4006 = vsub.f32 %v3992, %v4003
    %v4007 = vsub.f32 %v3993, %v4005
    %s4008 = scalar_lea.vmem [#allocation11], 208
    %4009 = vst [vmem:[%s4008] sm:$0xff] %v4006
    %4010 = vst [vmem:[%s4008 + $0x8] sm:$0xff] %v4007
    %s4011 = scalar_lea.vmem [#allocation2], 224
    %v4012 = vld [vmem:[%s4011] sm:$0xff]
    %v4013 = vld [vmem:[%s4011 + $0x8] sm:$0xff]
    %v4015 = vsel %vm135, %v3899, 0
    %v4018 = vsel %vm135, %v3900, 0
    %4020 = vmatprep.subr.mxu0 0.0
    %4021 = vmatpush1.msra.mxu0 %v109
    %4022 = vmatprep.subr.mxu0 0.0
    %4023 = vmatpush1.msra.mxu0 %v110
    %4024 = vmatprep.subr.mxu0 0.0
    %4025 = vmatpush1.msra.mxu0 %v111
    %4026 = vmatprep.subr.mxu0 0.0
    %4027 = vmatpush1.msra.mxu0 %v112
    %4028 = vmatprep.subr.mxu0 0.0
    %4029 = vmatpush1.msra.mxu0 0.0
    %4030 = vmatprep.subr.mxu0 0.0
    %4031 = vmatpush1.msra.mxu0 0.0
    %4032 = vmatprep.subr.mxu0 0.0
    %4033 = vmatpush1.msra.mxu0 0.0
    %4034 = vmatprep.subr.mxu0 0.0
    %4035 = vmatpush1.msra.mxu0 0.0
    %4036 = vmatprep.subr.mxu0 0.0
    %4037 = vmatpush1.msra.mxu0 0.0
    %4038 = vmatprep.subr.mxu0 0.0
    %4039 = vmatpush1.msra.mxu0 0.0
    %4040 = vmatprep.subr.mxu0 0.0
    %4041 = vmatpush1.msra.mxu0 0.0
    %4042 = vmatprep.subr.mxu0 0.0
    %4043 = vmatpush1.msra.mxu0 0.0
    %4044 = vmatprep.subr.mxu0 0.0
    %4045 = vmatpush1.msra.mxu0 0.0
    %4046 = vmatprep.subr.mxu0 0.0
    %4047 = vmatpush1.msra.mxu0 0.0
    %4048 = vmatprep.subr.mxu0 0.0
    %4049 = vmatpush1.msra.mxu0 0.0
    %4050 = vmatprep.subr.mxu0 0.0
    %4051 = vmatpush1.msra.mxu0 0.0
    %4052 = vmatprep.subr.mxu0 0.0
    %4053 = vmatpush1.msra.mxu0 0.0
    %4054 = vmatprep.subr.mxu0 0.0
    %4055 = vmatpush1.msra.mxu0 0.0
    %4056 = vmatprep.subr.mxu0 0.0
    %4057 = vmatpush1.msra.mxu0 0.0
    %4058 = vmatprep.subr.mxu0 0.0
    %4059 = vmatpush1.msra.mxu0 0.0
    %4060 = vmatprep.subr.mxu0 0.0
    %4061 = vmatpush1.msra.mxu0 0.0
    %4062 = vmatprep.subr.mxu0 0.0
    %4063 = vmatpush1.msra.mxu0 0.0
    %4064 = vmatprep.subr.mxu0 0.0
    %4065 = vmatpush1.msra.mxu0 0.0
    %4066 = vmatprep.subr.mxu0 0.0
    %4067 = vmatpush1.msra.mxu0 0.0
    %4068 = vmatprep.subr.mxu0 0.0
    %4069 = vmatpush1.msra.mxu0 0.0
    %4070 = vmatprep.subr.mxu0 0.0
    %4071 = vmatpush1.msra.mxu0 0.0
    %4072 = vmatprep.subr.mxu0 0.0
    %4073 = vmatpush1.msra.mxu0 0.0
    %4074 = vmatprep.subr.mxu0 0.0
    %4075 = vmatpush1.msra.mxu0 0.0
    %4076 = vmatprep.subr.mxu0 0.0
    %4077 = vmatpush1.msra.mxu0 0.0
    %4078 = vmatprep.subr.mxu0 0.0
    %4079 = vmatpush1.msra.mxu0 0.0
    %4080 = vmatprep.subr.mxu0 0.0
    %4081 = vmatpush1.msra.mxu0 0.0
    %4082 = vmatprep.subr.mxu0 0.0
    %4083 = vmatpush1.msra.mxu0 0.0
    %4084 = vmatprep.mubr.f32.mxu0 0.0
    %4085 = vmatmul.mubr.f32.gmra.mrb[0].mxu0 %v4015
    %v4086 = vpop.f32.mrb[0].mxu0
    %v4087 = vadd.f32 0.0, %v4086
    %v4088 = vpop.f32.mrb[0].mxu0
    %4089 = vmatprep.mubr.f32.mxu0 0.0
    %4090 = vmatmul.mubr.f32.gmra.mrb[0].mxu0 %v4018
    %v4091 = vpop.f32.mrb[0].mxu0
    %v4092 = vadd.f32 0.0, %v4091
    %v4093 = vpop.f32.mrb[0].mxu0
    %4094 = vdwg.mxu0
    %v4096 = vsel %vm217, %v4012, 0
    %v4099 = vsel %vm217, %v4013, 0
    %4101 = vmatprep.subr.mxu0 0.0
    %4102 = vmatpush1.msra.mxu0 %v107
    %4103 = vmatprep.subr.mxu0 0.0
    %4104 = vmatpush1.msra.mxu0 %v108
    %4105 = vmatprep.subr.mxu0 0.0
    %4106 = vmatpush1.msra.mxu0 0.0
    %4107 = vmatprep.subr.mxu0 0.0
    %4108 = vmatpush1.msra.mxu0 0.0
    %4109 = vmatprep.subr.mxu0 0.0
    %4110 = vmatpush1.msra.mxu0 0.0
    %4111 = vmatprep.subr.mxu0 0.0
    %4112 = vmatpush1.msra.mxu0 0.0
    %4113 = vmatprep.subr.mxu0 0.0
    %4114 = vmatpush1.msra.mxu0 0.0
    %4115 = vmatprep.subr.mxu0 0.0
    %4116 = vmatpush1.msra.mxu0 0.0
    %4117 = vmatprep.subr.mxu0 0.0
    %4118 = vmatpush1.msra.mxu0 0.0
    %4119 = vmatprep.subr.mxu0 0.0
    %4120 = vmatpush1.msra.mxu0 0.0
    %4121 = vmatprep.subr.mxu0 0.0
    %4122 = vmatpush1.msra.mxu0 0.0
    %4123 = vmatprep.subr.mxu0 0.0
    %4124 = vmatpush1.msra.mxu0 0.0
    %4125 = vmatprep.subr.mxu0 0.0
    %4126 = vmatpush1.msra.mxu0 0.0
    %4127 = vmatprep.subr.mxu0 0.0
    %4128 = vmatpush1.msra.mxu0 0.0
    %4129 = vmatprep.subr.mxu0 0.0
    %4130 = vmatpush1.msra.mxu0 0.0
    %4131 = vmatprep.subr.mxu0 0.0
    %4132 = vmatpush1.msra.mxu0 0.0
    %4133 = vmatprep.subr.mxu0 0.0
    %4134 = vmatpush1.msra.mxu0 0.0
    %4135 = vmatprep.subr.mxu0 0.0
    %4136 = vmatpush1.msra.mxu0 0.0
    %4137 = vmatprep.subr.mxu0 0.0
    %4138 = vmatpush1.msra.mxu0 0.0
    %4139 = vmatprep.subr.mxu0 0.0
    %4140 = vmatpush1.msra.mxu0 0.0
    %4141 = vmatprep.subr.mxu0 0.0
    %4142 = vmatpush1.msra.mxu0 0.0
    %4143 = vmatprep.subr.mxu0 0.0
    %4144 = vmatpush1.msra.mxu0 0.0
    %4145 = vmatprep.subr.mxu0 0.0
    %4146 = vmatpush1.msra.mxu0 0.0
    %4147 = vmatprep.subr.mxu0 0.0
    %4148 = vmatpush1.msra.mxu0 0.0
    %4149 = vmatprep.subr.mxu0 0.0
    %4150 = vmatpush1.msra.mxu0 0.0
    %4151 = vmatprep.subr.mxu0 0.0
    %4152 = vmatpush1.msra.mxu0 0.0
    %4153 = vmatprep.subr.mxu0 0.0
    %4154 = vmatpush1.msra.mxu0 0.0
    %4155 = vmatprep.subr.mxu0 0.0
    %4156 = vmatpush1.msra.mxu0 0.0
    %4157 = vmatprep.subr.mxu0 0.0
    %4158 = vmatpush1.msra.mxu0 0.0
    %4159 = vmatprep.subr.mxu0 0.0
    %4160 = vmatpush1.msra.mxu0 0.0
    %4161 = vmatprep.subr.mxu0 0.0
    %4162 = vmatpush1.msra.mxu0 0.0
    %4163 = vmatprep.subr.mxu0 0.0
    %4164 = vmatpush1.msra.mxu0 0.0
    %4165 = vmatprep.mubr.f32.mxu0 0.0
    %4166 = vmatmul.mubr.f32.gmra.mrb[0].mxu0 %v4096
    %v4167 = vpop.f32.mrb[0].mxu0
    %v4168 = vadd.f32 %v4087, %v4167
    %v4169 = vpop.f32.mrb[0].mxu0
    %4170 = vmatprep.mubr.f32.mxu0 0.0
    %4171 = vmatmul.mubr.f32.gmra.mrb[0].mxu0 %v4099
    %v4172 = vpop.f32.mrb[0].mxu0
    %v4173 = vadd.f32 %v4092, %v4172
    %v4174 = vpop.f32.mrb[0].mxu0
    %4175 = vdwg.mxu0
    %v4176 = vadd.f32 %v4168, %v122
    %v4177 = vadd.f32 %v4173, %v122
    %v4178 = vmax.f32 %v4176, 0.0
    %v4179 = vmax.f32 %v4177, 0.0
    %4182 = vrot.lane.b32.xlu0 %v4178, 96
    %v4183 = vpop.permute.xlu0 %4182
    %4184 = vrot.lane.b32.xlu0 %v4179, 96
    %v4185 = vpop.permute.xlu0 %4184
    %v4186 = vsel %vm135, %v4183, 0
    %v4188 = vsel %vm135, %v4185, 0
    %4190 = vmatprep.subr.mxu0 0.0
    %4191 = vmatpush1.msra.mxu0 %v113
    %4192 = vmatprep.subr.mxu0 0.0
    %4193 = vmatpush1.msra.mxu0 %v114
    %4194 = vmatprep.subr.mxu0 0.0
    %4195 = vmatpush1.msra.mxu0 %v115
    %4196 = vmatprep.subr.mxu0 0.0
    %4197 = vmatpush1.msra.mxu0 %v116
    %4198 = vmatprep.subr.mxu0 0.0
    %4199 = vmatpush1.msra.mxu0 0.0
    %4200 = vmatprep.subr.mxu0 0.0
    %4201 = vmatpush1.msra.mxu0 0.0
    %4202 = vmatprep.subr.mxu0 0.0
    %4203 = vmatpush1.msra.mxu0 0.0
    %4204 = vmatprep.subr.mxu0 0.0
    %4205 = vmatpush1.msra.mxu0 0.0
    %4206 = vmatprep.subr.mxu0 0.0
    %4207 = vmatpush1.msra.mxu0 0.0
    %4208 = vmatprep.subr.mxu0 0.0
    %4209 = vmatpush1.msra.mxu0 0.0
    %4210 = vmatprep.subr.mxu0 0.0
    %4211 = vmatpush1.msra.mxu0 0.0
    %4212 = vmatprep.subr.mxu0 0.0
    %4213 = vmatpush1.msra.mxu0 0.0
    %4214 = vmatprep.subr.mxu0 0.0
    %4215 = vmatpush1.msra.mxu0 0.0
    %4216 = vmatprep.subr.mxu0 0.0
    %4217 = vmatpush1.msra.mxu0 0.0
    %4218 = vmatprep.subr.mxu0 0.0
    %4219 = vmatpush1.msra.mxu0 0.0
    %4220 = vmatprep.subr.mxu0 0.0
    %4221 = vmatpush1.msra.mxu0 0.0
    %4222 = vmatprep.subr.mxu0 0.0
    %4223 = vmatpush1.msra.mxu0 0.0
    %4224 = vmatprep.subr.mxu0 0.0
    %4225 = vmatpush1.msra.mxu0 0.0
    %4226 = vmatprep.subr.mxu0 0.0
    %4227 = vmatpush1.msra.mxu0 0.0
    %4228 = vmatprep.subr.mxu0 0.0
    %4229 = vmatpush1.msra.mxu0 0.0
    %4230 = vmatprep.subr.mxu0 0.0
    %4231 = vmatpush1.msra.mxu0 0.0
    %4232 = vmatprep.subr.mxu0 0.0
    %4233 = vmatpush1.msra.mxu0 0.0
    %4234 = vmatprep.subr.mxu0 0.0
    %4235 = vmatpush1.msra.mxu0 0.0
    %4236 = vmatprep.subr.mxu0 0.0
    %4237 = vmatpush1.msra.mxu0 0.0
    %4238 = vmatprep.subr.mxu0 0.0
    %4239 = vmatpush1.msra.mxu0 0.0
    %4240 = vmatprep.subr.mxu0 0.0
    %4241 = vmatpush1.msra.mxu0 0.0
    %4242 = vmatprep.subr.mxu0 0.0
    %4243 = vmatpush1.msra.mxu0 0.0
    %4244 = vmatprep.subr.mxu0 0.0
    %4245 = vmatpush1.msra.mxu0 0.0
    %4246 = vmatprep.subr.mxu0 0.0
    %4247 = vmatpush1.msra.mxu0 0.0
    %4248 = vmatprep.subr.mxu0 0.0
    %4249 = vmatpush1.msra.mxu0 0.0
    %4250 = vmatprep.subr.mxu0 0.0
    %4251 = vmatpush1.msra.mxu0 0.0
    %4252 = vmatprep.subr.mxu0 0.0
    %4253 = vmatpush1.msra.mxu0 0.0
    %4254 = vmatprep.mubr.f32.mxu0 0.0
    %4255 = vmatmul.mubr.f32.gmra.mrb[0].mxu0 %v4186
    %v4256 = vpop.f32.mrb[0].mxu0
    %v4257 = vadd.f32 %v129, %v4256
    %v4258 = vpop.f32.mrb[0].mxu0
    %4259 = vmatprep.mubr.f32.mxu0 0.0
    %4260 = vmatmul.mubr.f32.gmra.mrb[0].mxu0 %v4188
    %v4261 = vpop.f32.mrb[0].mxu0
    %v4262 = vadd.f32 %v129, %v4261
    %v4263 = vpop.f32.mrb[0].mxu0
    %4264 = vdwg.mxu0
    %4265 = vmax.xlane.f32.xlu0 %v4257
    %v4266 = vpop.xlane.xlu0 %4265
    %4267 = vmax.xlane.f32.xlu0 %v4262
    %v4268 = vpop.xlane.xlu0 %4267
    %v4269 = vsub.f32 %v4257, %v4266
    %v4270 = vsub.f32 %v4262, %v4268
    %v4271 = vmul.f32 %v4269, 1.442695
    %v4272 = vpow.pop %v4271
    %v4273 = vmul.f32 %v4270, 1.442695
    %v4274 = vpow.pop %v4273
    %4275 = vadd.xlane.f32.xlu0 %v4272
    %v4276 = vpop.xlane.xlu0 %4275
    %4277 = vadd.xlane.f32.xlu0 %v4274
    %v4278 = vpop.xlane.xlu0 %4277
    %v4279 = vlog2.pop %v4276
    %v4280 = vmul.f32 %v4279, 0.6931472
    %v4281 = vlog2.pop %v4278
    %v4282 = vmul.f32 %v4281, 0.6931472
    %v4283 = vsub.f32 %v4269, %v4280
    %v4284 = vsub.f32 %v4270, %v4282
    %s4285 = scalar_lea.vmem [#allocation11], 224
    %4286 = vst [vmem:[%s4285] sm:$0xff] %v4283
    %4287 = vst [vmem:[%s4285 + $0x8] sm:$0xff] %v4284
    %s4288 = scalar_lea.vmem [#allocation2], 240
    %v4289 = vld [vmem:[%s4288] sm:$0xff]
    %v4290 = vld [vmem:[%s4288 + $0x8] sm:$0xff]
    %v4292 = vsel %vm135, %v4176, 0
    %v4295 = vsel %vm135, %v4177, 0
    %4297 = vmatprep.subr.mxu0 0.0
    %4298 = vmatpush1.msra.mxu0 %v109
    %4299 = vmatprep.subr.mxu0 0.0
    %4300 = vmatpush1.msra.mxu0 %v110
    %4301 = vmatprep.subr.mxu0 0.0
    %4302 = vmatpush1.msra.mxu0 %v111
    %4303 = vmatprep.subr.mxu0 0.0
    %4304 = vmatpush1.msra.mxu0 %v112
    %4305 = vmatprep.subr.mxu0 0.0
    %4306 = vmatpush1.msra.mxu0 0.0
    %4307 = vmatprep.subr.mxu0 0.0
    %4308 = vmatpush1.msra.mxu0 0.0
    %4309 = vmatprep.subr.mxu0 0.0
    %4310 = vmatpush1.msra.mxu0 0.0
    %4311 = vmatprep.subr.mxu0 0.0
    %4312 = vmatpush1.msra.mxu0 0.0
    %4313 = vmatprep.subr.mxu0 0.0
    %4314 = vmatpush1.msra.mxu0 0.0
    %4315 = vmatprep.subr.mxu0 0.0
    %4316 = vmatpush1.msra.mxu0 0.0
    %4317 = vmatprep.subr.mxu0 0.0
    %4318 = vmatpush1.msra.mxu0 0.0
    %4319 = vmatprep.subr.mxu0 0.0
    %4320 = vmatpush1.msra.mxu0 0.0
    %4321 = vmatprep.subr.mxu0 0.0
    %4322 = vmatpush1.msra.mxu0 0.0
    %4323 = vmatprep.subr.mxu0 0.0
    %4324 = vmatpush1.msra.mxu0 0.0
    %4325 = vmatprep.subr.mxu0 0.0
    %4326 = vmatpush1.msra.mxu0 0.0
    %4327 = vmatprep.subr.mxu0 0.0
    %4328 = vmatpush1.msra.mxu0 0.0
    %4329 = vmatprep.subr.mxu0 0.0
    %4330 = vmatpush1.msra.mxu0 0.0
    %4331 = vmatprep.subr.mxu0 0.0
    %4332 = vmatpush1.msra.mxu0 0.0
    %4333 = vmatprep.subr.mxu0 0.0
    %4334 = vmatpush1.msra.mxu0 0.0
    %4335 = vmatprep.subr.mxu0 0.0
    %4336 = vmatpush1.msra.mxu0 0.0
    %4337 = vmatprep.subr.mxu0 0.0
    %4338 = vmatpush1.msra.mxu0 0.0
    %4339 = vmatprep.subr.mxu0 0.0
    %4340 = vmatpush1.msra.mxu0 0.0
    %4341 = vmatprep.subr.mxu0 0.0
    %4342 = vmatpush1.msra.mxu0 0.0
    %4343 = vmatprep.subr.mxu0 0.0
    %4344 = vmatpush1.msra.mxu0 0.0
    %4345 = vmatprep.subr.mxu0 0.0
    %4346 = vmatpush1.msra.mxu0 0.0
    %4347 = vmatprep.subr.mxu0 0.0
    %4348 = vmatpush1.msra.mxu0 0.0
    %4349 = vmatprep.subr.mxu0 0.0
    %4350 = vmatpush1.msra.mxu0 0.0
    %4351 = vmatprep.subr.mxu0 0.0
    %4352 = vmatpush1.msra.mxu0 0.0
    %4353 = vmatprep.subr.mxu0 0.0
    %4354 = vmatpush1.msra.mxu0 0.0
    %4355 = vmatprep.subr.mxu0 0.0
    %4356 = vmatpush1.msra.mxu0 0.0
    %4357 = vmatprep.subr.mxu0 0.0
    %4358 = vmatpush1.msra.mxu0 0.0
    %4359 = vmatprep.subr.mxu0 0.0
    %4360 = vmatpush1.msra.mxu0 0.0
    %4361 = vmatprep.mubr.f32.mxu0 0.0
    %4362 = vmatmul.mubr.f32.gmra.mrb[0].mxu0 %v4292
    %v4363 = vpop.f32.mrb[0].mxu0
    %v4364 = vadd.f32 0.0, %v4363
    %v4365 = vpop.f32.mrb[0].mxu0
    %4366 = vmatprep.mubr.f32.mxu0 0.0
    %4367 = vmatmul.mubr.f32.gmra.mrb[0].mxu0 %v4295
    %v4368 = vpop.f32.mrb[0].mxu0
    %v4369 = vadd.f32 0.0, %v4368
    %v4370 = vpop.f32.mrb[0].mxu0
    %4371 = vdwg.mxu0
    %v4373 = vsel %vm217, %v4289, 0
    %v4376 = vsel %vm217, %v4290, 0
    %4378 = vmatprep.subr.mxu0 0.0
    %4379 = vmatpush1.msra.mxu0 %v107
    %4380 = vmatprep.subr.mxu0 0.0
    %4381 = vmatpush1.msra.mxu0 %v108
    %4382 = vmatprep.subr.mxu0 0.0
    %4383 = vmatpush1.msra.mxu0 0.0
    %4384 = vmatprep.subr.mxu0 0.0
    %4385 = vmatpush1.msra.mxu0 0.0
    %4386 = vmatprep.subr.mxu0 0.0
    %4387 = vmatpush1.msra.mxu0 0.0
    %4388 = vmatprep.subr.mxu0 0.0
    %4389 = vmatpush1.msra.mxu0 0.0
    %4390 = vmatprep.subr.mxu0 0.0
    %4391 = vmatpush1.msra.mxu0 0.0
    %4392 = vmatprep.subr.mxu0 0.0
    %4393 = vmatpush1.msra.mxu0 0.0
    %4394 = vmatprep.subr.mxu0 0.0
    %4395 = vmatpush1.msra.mxu0 0.0
    %4396 = vmatprep.subr.mxu0 0.0
    %4397 = vmatpush1.msra.mxu0 0.0
    %4398 = vmatprep.subr.mxu0 0.0
    %4399 = vmatpush1.msra.mxu0 0.0
    %4400 = vmatprep.subr.mxu0 0.0
    %4401 = vmatpush1.msra.mxu0 0.0
    %4402 = vmatprep.subr.mxu0 0.0
    %4403 = vmatpush1.msra.mxu0 0.0
    %4404 = vmatprep.subr.mxu0 0.0
    %4405 = vmatpush1.msra.mxu0 0.0
    %4406 = vmatprep.subr.mxu0 0.0
    %4407 = vmatpush1.msra.mxu0 0.0
    %4408 = vmatprep.subr.mxu0 0.0
    %4409 = vmatpush1.msra.mxu0 0.0
    %4410 = vmatprep.subr.mxu0 0.0
    %4411 = vmatpush1.msra.mxu0 0.0
    %4412 = vmatprep.subr.mxu0 0.0
    %4413 = vmatpush1.msra.mxu0 0.0
    %4414 = vmatprep.subr.mxu0 0.0
    %4415 = vmatpush1.msra.mxu0 0.0
    %4416 = vmatprep.subr.mxu0 0.0
    %4417 = vmatpush1.msra.mxu0 0.0
    %4418 = vmatprep.subr.mxu0 0.0
    %4419 = vmatpush1.msra.mxu0 0.0
    %4420 = vmatprep.subr.mxu0 0.0
    %4421 = vmatpush1.msra.mxu0 0.0
    %4422 = vmatprep.subr.mxu0 0.0
    %4423 = vmatpush1.msra.mxu0 0.0
    %4424 = vmatprep.subr.mxu0 0.0
    %4425 = vmatpush1.msra.mxu0 0.0
    %4426 = vmatprep.subr.mxu0 0.0
    %4427 = vmatpush1.msra.mxu0 0.0
    %4428 = vmatprep.subr.mxu0 0.0
    %4429 = vmatpush1.msra.mxu0 0.0
    %4430 = vmatprep.subr.mxu0 0.0
    %4431 = vmatpush1.msra.mxu0 0.0
    %4432 = vmatprep.subr.mxu0 0.0
    %4433 = vmatpush1.msra.mxu0 0.0
    %4434 = vmatprep.subr.mxu0 0.0
    %4435 = vmatpush1.msra.mxu0 0.0
    %4436 = vmatprep.subr.mxu0 0.0
    %4437 = vmatpush1.msra.mxu0 0.0
    %4438 = vmatprep.subr.mxu0 0.0
    %4439 = vmatpush1.msra.mxu0 0.0
    %4440 = vmatprep.subr.mxu0 0.0
    %4441 = vmatpush1.msra.mxu0 0.0
    %4442 = vmatprep.mubr.f32.mxu0 0.0
    %4443 = vmatmul.mubr.f32.gmra.mrb[0].mxu0 %v4373
    %v4444 = vpop.f32.mrb[0].mxu0
    %v4445 = vadd.f32 %v4364, %v4444
    %v4446 = vpop.f32.mrb[0].mxu0
    %4447 = vmatprep.mubr.f32.mxu0 0.0
    %4448 = vmatmul.mubr.f32.gmra.mrb[0].mxu0 %v4376
    %v4449 = vpop.f32.mrb[0].mxu0
    %v4450 = vadd.f32 %v4369, %v4449
    %v4451 = vpop.f32.mrb[0].mxu0
    %4452 = vdwg.mxu0
    %v4453 = vadd.f32 %v4445, %v122
    %v4454 = vadd.f32 %v4450, %v122
    %v4455 = vmax.f32 %v4453, 0.0
    %v4456 = vmax.f32 %v4454, 0.0
    %4459 = vrot.lane.b32.xlu0 %v4455, 96
    %v4460 = vpop.permute.xlu0 %4459
    %4461 = vrot.lane.b32.xlu0 %v4456, 96
    %v4462 = vpop.permute.xlu0 %4461
    %v4463 = vsel %vm135, %v4460, 0
    %v4465 = vsel %vm135, %v4462, 0
    %4467 = vmatprep.subr.mxu0 0.0
    %4468 = vmatpush1.msra.mxu0 %v113
    %4469 = vmatprep.subr.mxu0 0.0
    %4470 = vmatpush1.msra.mxu0 %v114
    %4471 = vmatprep.subr.mxu0 0.0
    %4472 = vmatpush1.msra.mxu0 %v115
    %4473 = vmatprep.subr.mxu0 0.0
    %4474 = vmatpush1.msra.mxu0 %v116
    %4475 = vmatprep.subr.mxu0 0.0
    %4476 = vmatpush1.msra.mxu0 0.0
    %4477 = vmatprep.subr.mxu0 0.0
    %4478 = vmatpush1.msra.mxu0 0.0
    %4479 = vmatprep.subr.mxu0 0.0
    %4480 = vmatpush1.msra.mxu0 0.0
    %4481 = vmatprep.subr.mxu0 0.0
    %4482 = vmatpush1.msra.mxu0 0.0
    %4483 = vmatprep.subr.mxu0 0.0
    %4484 = vmatpush1.msra.mxu0 0.0
    %4485 = vmatprep.subr.mxu0 0.0
    %4486 = vmatpush1.msra.mxu0 0.0
    %4487 = vmatprep.subr.mxu0 0.0
    %4488 = vmatpush1.msra.mxu0 0.0
    %4489 = vmatprep.subr.mxu0 0.0
    %4490 = vmatpush1.msra.mxu0 0.0
    %4491 = vmatprep.subr.mxu0 0.0
    %4492 = vmatpush1.msra.mxu0 0.0
    %4493 = vmatprep.subr.mxu0 0.0
    %4494 = vmatpush1.msra.mxu0 0.0
    %4495 = vmatprep.subr.mxu0 0.0
    %4496 = vmatpush1.msra.mxu0 0.0
    %4497 = vmatprep.subr.mxu0 0.0
    %4498 = vmatpush1.msra.mxu0 0.0
    %4499 = vmatprep.subr.mxu0 0.0
    %4500 = vmatpush1.msra.mxu0 0.0
    %4501 = vmatprep.subr.mxu0 0.0
    %4502 = vmatpush1.msra.mxu0 0.0
    %4503 = vmatprep.subr.mxu0 0.0
    %4504 = vmatpush1.msra.mxu0 0.0
    %4505 = vmatprep.subr.mxu0 0.0
    %4506 = vmatpush1.msra.mxu0 0.0
    %4507 = vmatprep.subr.mxu0 0.0
    %4508 = vmatpush1.msra.mxu0 0.0
    %4509 = vmatprep.subr.mxu0 0.0
    %4510 = vmatpush1.msra.mxu0 0.0
    %4511 = vmatprep.subr.mxu0 0.0
    %4512 = vmatpush1.msra.mxu0 0.0
    %4513 = vmatprep.subr.mxu0 0.0
    %4514 = vmatpush1.msra.mxu0 0.0
    %4515 = vmatprep.subr.mxu0 0.0
    %4516 = vmatpush1.msra.mxu0 0.0
    %4517 = vmatprep.subr.mxu0 0.0
    %4518 = vmatpush1.msra.mxu0 0.0
    %4519 = vmatprep.subr.mxu0 0.0
    %4520 = vmatpush1.msra.mxu0 0.0
    %4521 = vmatprep.subr.mxu0 0.0
    %4522 = vmatpush1.msra.mxu0 0.0
    %4523 = vmatprep.subr.mxu0 0.0
    %4524 = vmatpush1.msra.mxu0 0.0
    %4525 = vmatprep.subr.mxu0 0.0
    %4526 = vmatpush1.msra.mxu0 0.0
    %4527 = vmatprep.subr.mxu0 0.0
    %4528 = vmatpush1.msra.mxu0 0.0
    %4529 = vmatprep.subr.mxu0 0.0
    %4530 = vmatpush1.msra.mxu0 0.0
    %4531 = vmatprep.mubr.f32.mxu0 0.0
    %4532 = vmatmul.mubr.f32.gmra.mrb[0].mxu0 %v4463
    %v4533 = vpop.f32.mrb[0].mxu0
    %v4534 = vadd.f32 %v129, %v4533
    %v4535 = vpop.f32.mrb[0].mxu0
    %4536 = vmatprep.mubr.f32.mxu0 0.0
    %4537 = vmatmul.mubr.f32.gmra.mrb[0].mxu0 %v4465
    %v4538 = vpop.f32.mrb[0].mxu0
    %v4539 = vadd.f32 %v129, %v4538
    %v4540 = vpop.f32.mrb[0].mxu0
    %4541 = vdwg.mxu0
    %4542 = vmax.xlane.f32.xlu0 %v4534
    %v4543 = vpop.xlane.xlu0 %4542
    %4544 = vmax.xlane.f32.xlu0 %v4539
    %v4545 = vpop.xlane.xlu0 %4544
    %v4546 = vsub.f32 %v4534, %v4543
    %v4547 = vsub.f32 %v4539, %v4545
    %v4548 = vmul.f32 %v4546, 1.442695
    %v4549 = vpow.pop %v4548
    %v4550 = vmul.f32 %v4547, 1.442695
    %v4551 = vpow.pop %v4550
    %4552 = vadd.xlane.f32.xlu0 %v4549
    %v4553 = vpop.xlane.xlu0 %4552
    %4554 = vadd.xlane.f32.xlu0 %v4551
    %v4555 = vpop.xlane.xlu0 %4554
    %v4556 = vlog2.pop %v4553
    %v4557 = vmul.f32 %v4556, 0.6931472
    %v4558 = vlog2.pop %v4555
    %v4559 = vmul.f32 %v4558, 0.6931472
    %v4560 = vsub.f32 %v4546, %v4557
    %v4561 = vsub.f32 %v4547, %v4559
    %s4562 = scalar_lea.vmem [#allocation11], 240
    %4563 = vst [vmem:[%s4562] sm:$0xff] %v4560
    %4564 = vst [vmem:[%s4562 + $0x8] sm:$0xff] %v4561
    %4565 = vst.msk [vmem:[#allocation12] sm:$0xff] %vm135, %v4453
    %4566 = vst.msk [vmem:[#allocation12 + $0x8] sm:$0xff] %vm135, %v4454
    // Predicated region
    $region54: #{tpu_custom_call.1} parent=1 // pred_check
      _
    $region55: #{tpu_custom_call.1} parent=1 // pred_check_branch
      %4568 = sbr.rel (0) target = $region57
    $region56: #{tpu_custom_call.1} parent=1 // pred_region
      %s4570 = ssub.s32 4096, 4096
      %4571 = vsyncadd [#allocation4], %s4570
      %s4572 = sshll.u32 [#allocation11], 4
      %s4573 = int_to_ptr.vmem [resolvable:$true] %s4572
      %4578 = dma.vmem_to_hbm [thread:$0]  %s4573, 4096, %s7, [#allocation4], 128, 128, 8
    $region57: #{tpu_custom_call.1} parent=1 // pred_fallthru
      _
    // Predicated region
    $region58: #{tpu_custom_call.1} parent=1 // pred_check
      _
    $region59: #{tpu_custom_call.1} parent=1 // pred_check_branch
      %4580 = sbr.rel (0) target = $region61
    $region60: #{tpu_custom_call.1} parent=1 // pred_region
      %s4582 = ssub.s32 256, 256
      %4583 = vsyncadd [#allocation13], %s4582
      %s4584 = sshll.u32 [#allocation12], 4
      %s4585 = int_to_ptr.vmem [resolvable:$true] %s4584
      %4590 = dma.vmem_to_hbm [thread:$0]  %s4585, 256, %s8, [#allocation13], 128, 128, 8
    $region61: #{tpu_custom_call.1} parent=1 // pred_fallthru
      _
    // Predicated region
    $region62: #{tpu_custom_call.1} parent=1 // pred_check
      _
    $region63: #{tpu_custom_call.1} parent=1 // pred_check_branch
      %4592 = sbr.rel (0) target = $region65
    $region64: #{tpu_custom_call.1} parent=1 // pred_region
      %4593 = dma.done [#allocation4], 4096
    $region65: #{tpu_custom_call.1} parent=1 // pred_fallthru
      _
    // Predicated region
    $region66: #{tpu_custom_call.1} parent=1 // pred_check
      _
    $region67: #{tpu_custom_call.1} parent=1 // pred_check_branch
      %4595 = sbr.rel (0) target = $region69
    $region68: #{tpu_custom_call.1} parent=1 // pred_region
      %4596 = dma.done [#allocation13], 256
    $region69: #{tpu_custom_call.1} parent=1 // pred_fallthru
      _
    %4597 = vsyncpa [#allocation3], 1
    %4598 = vsyncpa [#allocation6], 1
    %4599 = vsyncpa [#allocation9], 1
    %4600 = vsyncpa [#allocation4], 1
    %4601 = vsyncpa [#allocation13], 1

</llo_original>
